<compile_context>
chip_gen: v7x
topology: tpu7x:2x2x1
jax: 0.10.0
libtpu: 0.0.40
codegen_flags: <defaults>
</compile_context>

<pallas_src>
import numpy as np
import jax
import jax.numpy as jnp
from jax import lax
from jax.experimental import pallas as pl
from jax.experimental.pallas import tpu as pltpu


# ----------------------------------------------------------------------------
# Constant 1-D operator factors (baked into kron'd right-operands)
# ----------------------------------------------------------------------------
def _avgpool_matrix(n_in):
    """1-D factor of AvgPool2d(kernel=2, stride=2, padding=1, count_include_pad)."""
    n_out = n_in // 2 + 1
    m = np.zeros((n_out, n_in), np.float32)
    for i in range(n_out):
        for r in (2 * i - 1, 2 * i):
            if 0 <= r < n_in:
                m[i, r] = 0.5
    return m


def _nearest_upsample_matrix(n_out, n_in):
    """PyTorch F.interpolate(mode='nearest'): src = floor(dst * n_in / n_out)."""
    m = np.zeros((n_out, n_in), np.float32)
    for i in range(n_out):
        src = min(int(np.floor(i * (n_in / n_out))), n_in - 1)
        m[i, src] = 1.0
    return m


def _shift_matrices(n):
    """(S[k] @ X)[i, :] = X[i + (k-1), :], zero-filled out of range."""
    s = np.zeros((3, n, n), np.float32)
    for k in range(3):
        d = k - 1
        for i in range(n):
            j = i + d
            if 0 <= j < n:
                s[k, i, j] = 1.0
    return s


# ----------------------------------------------------------------------------
# Pallas kernel + wrapper
# ----------------------------------------------------------------------------
def _make_kernel(C, HW, HPWP):
    f32 = jnp.float32

    def mm(a, b):
        return jnp.dot(a, b, preferred_element_type=f32)

    def sigmoid(v):
        # exp rides the EUP slot; exact divide kept (approx reciprocal would risk
        # the 2e-3 correctness tolerance for a negligible VALU saving here).
        return 1.0 / (1.0 + jnp.exp(-v))

    def kernel(x_ref, mpool_ref, mup_ref, mshift_ref,
               w1_ref, w2_ref, wcc_ref, b_ref, wk3_ref, wk4_ref, out_ref):
        x = x_ref[0]                                       # (C, HW)

        # --- k2: AvgPool2d -> Conv1x1 -> ReLU -> Conv1x1 (all MXU matmuls) ---
        pooled = mm(x, mpool_ref[...])                     # (C, HP*WP)
        mid = jnp.maximum(mm(w1_ref[...], pooled), 0.0)    # (C, HP*WP)
        k2o = mm(w2_ref[...], mid)                         # (C, HP*WP)

        # --- nearest upsample -> sigmoid1 -> gate the identity (x_up_2) ---
        gate1 = sigmoid(mm(k2o, mup_ref[...]))             # (C, HW)
        xup2 = x * gate1

        # --- conv1x1_k2 (with bias) -> sigmoid2 (x_up_3) ---
        xup3 = sigmoid(mm(wcc_ref[...], xup2) + b_ref[...])   # (C,1) lane-broadcast

        # --- 3x3 conv, pad=1: 9 shift-operator matmuls + channel-mix matmuls ---
        def conv3x3(xin, w_ref):
            acc = mm(w_ref[0], mm(xin, mshift_ref[0]))
            for k in range(1, 9):                          # small live set, no spill
                acc = acc + mm(w_ref[k], mm(xin, mshift_ref[k]))
            return acc

        xup4 = conv3x3(x, wk3_ref)                         # k3(x)
        xup5 = xup4 * xup3                                 # x_up_4 * x_up_3
        out_ref[0] = conv3x3(xup5, wk4_ref).astype(out_ref.dtype)   # k4(...)

    return kernel


def scconv_up_block(x, w_k2_1, w_k2_2, w_cc, b_cc, w_k3, w_k4):
    N, C, H, W = x.shape
    HP, WP = H // 2 + 1, W // 2 + 1
    HW, HPWP = H * W, HP * WP

    # Spatial operators as flattened (right-multiply) matrices.
    Ah, Aw = _avgpool_matrix(H), _avgpool_matrix(W)
    Uh, Uw = _nearest_upsample_matrix(H, HP), _nearest_upsample_matrix(W, WP)
    Sh, Sw = _shift_matrices(H), _shift_matrices(W)
    m_pool = jnp.asarray(np.kron(Ah, Aw).T)                # (HW, HP*WP)
    m_up = jnp.asarray(np.kron(Uh, Uw).T)                  # (HP*WP, HW)
    m_shift = jnp.asarray(np.stack([np.kron(Sh[ky], Sw[kx]).T
                                    for ky in range(3) for kx in range(3)]))  # (9,HW,HW)

    # 3x3 conv weights stacked per (ky,kx) tap, all weights live in VMEM.
    wk3s = jnp.transpose(w_k3.reshape(C, C, 9), (2, 0, 1))   # (9, C, C), k = ky*3+kx
    wk4s = jnp.transpose(w_k4.reshape(C, C, 9), (2, 0, 1))
    b2d = b_cc.reshape(C, 1)

    x_flat = x.reshape(N, C, HW)                           # lane-dense input slab

    def const_spec(shape):
        nd = len(shape)
        return pl.BlockSpec(shape, lambda n, _nd=nd: (0,) * _nd)

    out_flat = pl.pallas_call(
        _make_kernel(C, HW, HPWP),
        out_shape=jax.ShapeDtypeStruct((N, C, HW), jnp.float32),
        grid_spec=pltpu.PrefetchScalarGridSpec(
            num_scalar_prefetch=0,
            grid=(N,),
            in_specs=[
                pl.BlockSpec((1, C, HW), lambda n: (n, 0, 0)),   # x
                const_spec((HW, HPWP)),                          # avgpool operator
                const_spec((HPWP, HW)),                          # upsample operator
                const_spec((9, HW, HW)),                         # 3x3 shift operators
                const_spec((C, C)),                              # k2 conv1x1 #1
                const_spec((C, C)),                              # k2 conv1x1 #2
                const_spec((C, C)),                              # conv1x1_k2 weight
                const_spec((C, 1)),                              # conv1x1_k2 bias
                const_spec((9, C, C)),                           # k3 weights
                const_spec((9, C, C)),                           # k4 weights
            ],
            out_specs=pl.BlockSpec((1, C, HW), lambda n: (n, 0, 0)),
        ),
        compiler_params=pltpu.CompilerParams(
            dimension_semantics=("parallel",)),                  # keeps v7x's 2nd TC busy
    )(x_flat, m_pool, m_up, m_shift, w_k2_1, w_k2_2, w_cc, b2d, wk3s, wk4s)

    return out_flat.reshape(N, C, H, W)


# ----------------------------------------------------------------------------
# Pure-JAX reference (mirrors the PyTorch forward) for a correctness check
# ----------------------------------------------------------------------------
def scconv_up_block_ref(x, w_k2_1, w_k2_2, w_cc, b_cc, w_k3, w_k4):
    N, C, H, W = x.shape
    HP, WP = H // 2 + 1, W // 2 + 1

    def conv(t, w, padding):
        return lax.conv_general_dilated(
            t, w, window_strides=(1, 1), padding=padding,
            dimension_numbers=("NCHW", "OIHW", "NCHW"))

    # AvgPool2d(kernel=2, stride=2, padding=1, count_include_pad=True)
    pooled = lax.reduce_window(
        x, 0.0, lax.add, (1, 1, 2, 2), (1, 1, 2, 2),
        ((0, 0), (0, 0), (1, 1), (1, 1))) / 4.0
    h = conv(pooled, w_k2_1.reshape(C, C, 1, 1), "VALID")
    h = jnp.maximum(h, 0.0)
    h = conv(h, w_k2_2.reshape(C, C, 1, 1), "VALID")
    # F.interpolate(mode='nearest'): src = floor(dst * in/out)
    src_h = np.floor(np.arange(H) * (HP / H)).astype(np.int32)
    src_w = np.floor(np.arange(W) * (WP / W)).astype(np.int32)
    up = h[:, :, src_h][:, :, :, src_w]
    x_up_1 = jax.nn.sigmoid(up)
    x_up_2 = x * x_up_1
    x_up_3 = jax.nn.sigmoid(
        conv(x_up_2, w_cc.reshape(C, C, 1, 1), "VALID") + b_cc.reshape(1, C, 1, 1))
    x_up_4 = conv(x, w_k3, ((1, 1), (1, 1)))
    x_up_5 = x_up_4 * x_up_3
    return conv(x_up_5, w_k4, ((1, 1), (1, 1)))


if __name__ == "__main__":
    N, C, H, W = 2, 4, 16, 16
    key = jax.random.PRNGKey(0)
    kx, k1, k2, k3, k4, k5, k6 = jax.random.split(key, 7)
    x = jax.random.normal(kx, (N, C, H, W), jnp.float32)
    # Deterministic synthetic parameters (shapes from the PyTorch __init__)
    w_k2_1 = jax.random.normal(k1, (C, C), jnp.float32) * 0.3      # k2 Conv1x1 #1
    w_k2_2 = jax.random.normal(k2, (C, C), jnp.float32) * 0.3      # k2 Conv1x1 #2
    w_cc = jax.random.normal(k3, (C, C), jnp.float32) * 0.3        # conv1x1_k2 weight
    b_cc = jax.random.normal(k4, (C,), jnp.float32) * 0.1          # conv1x1_k2 bias
    w_k3 = jax.random.normal(k5, (C, C, 3, 3), jnp.float32) * 0.2  # k3 Conv3x3
    w_k4 = jax.random.normal(k6, (C, C, 3, 3), jnp.float32) * 0.2  # k4 Conv3x3

    out = jax.block_until_ready(
        scconv_up_block(x, w_k2_1, w_k2_2, w_cc, b_cc, w_k3, w_k4))
    ref = jax.block_until_ready(
        scconv_up_block_ref(x, w_k2_1, w_k2_2, w_cc, b_cc, w_k3, w_k4))
    np.testing.assert_allclose(np.asarray(out), np.asarray(ref),
                               atol=2e-3, rtol=2e-3)
    print("KERNEL_OK")
</pallas_src>

<mosaic_0001>
module attributes {stable_mosaic.version = 11 : i64} {
  func.func @kernel(%arg0: i32, %arg1: memref<1x4x256xf32, #tpu.memory_space<vmem>>, %arg2: memref<256x81xf32, #tpu.memory_space<vmem>>, %arg3: memref<81x256xf32, #tpu.memory_space<vmem>>, %arg4: memref<9x256x256xf32, #tpu.memory_space<vmem>>, %arg5: memref<4x4xf32, #tpu.memory_space<vmem>>, %arg6: memref<4x4xf32, #tpu.memory_space<vmem>>, %arg7: memref<4x4xf32, #tpu.memory_space<vmem>>, %arg8: memref<4x1xf32, #tpu.memory_space<vmem>>, %arg9: memref<9x4x4xf32, #tpu.memory_space<vmem>>, %arg10: memref<9x4x4xf32, #tpu.memory_space<vmem>>, %arg11: memref<1x4x256xf32, #tpu.memory_space<vmem>>) attributes {dimension_semantics = [#tpu.dimension_semantics<parallel>], iteration_bounds = array<i64: 2>, scalar_prefetch = 0 : i64, scratch_operands = 0 : i64, tpu.core_type = #tpu.core_type<tc>, window_params = [{transform_indices = @transform_0, window_bounds = array<i64: 1, 4, 256>}, {pipeline_mode = #tpu.pipeline_mode<synchronous>, transform_indices = @transform_1, window_bounds = array<i64: 256, 81>}, {pipeline_mode = #tpu.pipeline_mode<synchronous>, transform_indices = @transform_2, window_bounds = array<i64: 81, 256>}, {pipeline_mode = #tpu.pipeline_mode<synchronous>, transform_indices = @transform_3, window_bounds = array<i64: 9, 256, 256>}, {pipeline_mode = #tpu.pipeline_mode<synchronous>, transform_indices = @transform_4, window_bounds = array<i64: 4, 4>}, {pipeline_mode = #tpu.pipeline_mode<synchronous>, transform_indices = @transform_5, window_bounds = array<i64: 4, 4>}, {pipeline_mode = #tpu.pipeline_mode<synchronous>, transform_indices = @transform_6, window_bounds = array<i64: 4, 4>}, {pipeline_mode = #tpu.pipeline_mode<synchronous>, transform_indices = @transform_7, window_bounds = array<i64: 4, 1>}, {pipeline_mode = #tpu.pipeline_mode<synchronous>, transform_indices = @transform_8, window_bounds = array<i64: 9, 4, 4>}, {pipeline_mode = #tpu.pipeline_mode<synchronous>, transform_indices = @transform_9, window_bounds = array<i64: 9, 4, 4>}, {transform_indices = @transform_10, window_bounds = array<i64: 1, 4, 256>}]} {
    %c0 = arith.constant 0 : index
    %c0_0 = arith.constant 0 : index
    %c0_1 = arith.constant 0 : index
    %0 = vector.load %arg1[%c0, %c0_0, %c0_1] : memref<1x4x256xf32, #tpu.memory_space<vmem>>, vector<1x4x256xf32>
    %1 = vector.shape_cast %0 : vector<1x4x256xf32> to vector<4x256xf32>
    %c0_2 = arith.constant 0 : index
    %c0_3 = arith.constant 0 : index
    %2 = vector.load %arg2[%c0_2, %c0_3] : memref<256x81xf32, #tpu.memory_space<vmem>>, vector<256x81xf32>
    %cst = arith.constant dense<0.000000e+00> : vector<4x81xf32>
    %3 = tpu.matmul %1, %2, %cst {dimension_numbers = #tpu.dot_dimension_numbers<[1], [0], [0], [1], [0, 0, 1, 1], [], []>} : vector<4x256xf32>, vector<256x81xf32>, vector<4x81xf32> -> vector<4x81xf32>
    %c0_4 = arith.constant 0 : index
    %c0_5 = arith.constant 0 : index
    %4 = vector.load %arg5[%c0_4, %c0_5] : memref<4x4xf32, #tpu.memory_space<vmem>>, vector<4x4xf32>
    %cst_6 = arith.constant dense<0.000000e+00> : vector<4x81xf32>
    %5 = tpu.matmul %4, %3, %cst_6 {dimension_numbers = #tpu.dot_dimension_numbers<[1], [0], [0], [1], [0, 0, 1, 1], [], []>} : vector<4x4xf32>, vector<4x81xf32>, vector<4x81xf32> -> vector<4x81xf32>
    %cst_7 = arith.constant 0.000000e+00 : f32
    %6 = vector.broadcast %cst_7 : f32 to vector<4x81xf32>
    %7 = arith.maximumf %5, %6 : vector<4x81xf32>
    %c0_8 = arith.constant 0 : index
    %c0_9 = arith.constant 0 : index
    %8 = vector.load %arg6[%c0_8, %c0_9] : memref<4x4xf32, #tpu.memory_space<vmem>>, vector<4x4xf32>
    %cst_10 = arith.constant dense<0.000000e+00> : vector<4x81xf32>
    %9 = tpu.matmul %8, %7, %cst_10 {dimension_numbers = #tpu.dot_dimension_numbers<[1], [0], [0], [1], [0, 0, 1, 1], [], []>} : vector<4x4xf32>, vector<4x81xf32>, vector<4x81xf32> -> vector<4x81xf32>
    %c0_11 = arith.constant 0 : index
    %c0_12 = arith.constant 0 : index
    %10 = vector.load %arg3[%c0_11, %c0_12] : memref<81x256xf32, #tpu.memory_space<vmem>>, vector<81x256xf32>
    %cst_13 = arith.constant dense<0.000000e+00> : vector<4x256xf32>
    %11 = tpu.matmul %9, %10, %cst_13 {dimension_numbers = #tpu.dot_dimension_numbers<[1], [0], [0], [1], [0, 0, 1, 1], [], []>} : vector<4x81xf32>, vector<81x256xf32>, vector<4x256xf32> -> vector<4x256xf32>
    %cst_14 = arith.constant 0.000000e+00 : f32
    %12 = vector.broadcast %cst_14 : f32 to vector<4x256xf32>
    %13 = arith.subf %12, %11 : vector<4x256xf32>
    %14 = math.exp %13 : vector<4x256xf32>
    %cst_15 = arith.constant 1.000000e+00 : f32
    %15 = vector.broadcast %cst_15 : f32 to vector<4x256xf32>
    %16 = arith.addf %15, %14 : vector<4x256xf32>
    %cst_16 = arith.constant 1.000000e+00 : f32
    %17 = vector.broadcast %cst_16 : f32 to vector<4x256xf32>
    %18 = arith.divf %17, %16 : vector<4x256xf32>
    %19 = arith.mulf %1, %18 : vector<4x256xf32>
    %c0_17 = arith.constant 0 : index
    %c0_18 = arith.constant 0 : index
    %20 = vector.load %arg7[%c0_17, %c0_18] : memref<4x4xf32, #tpu.memory_space<vmem>>, vector<4x4xf32>
    %cst_19 = arith.constant dense<0.000000e+00> : vector<4x256xf32>
    %21 = tpu.matmul %20, %19, %cst_19 {dimension_numbers = #tpu.dot_dimension_numbers<[1], [0], [0], [1], [0, 0, 1, 1], [], []>} : vector<4x4xf32>, vector<4x256xf32>, vector<4x256xf32> -> vector<4x256xf32>
    %c0_20 = arith.constant 0 : index
    %c0_21 = arith.constant 0 : index
    %22 = vector.load %arg8[%c0_20, %c0_21] : memref<4x1xf32, #tpu.memory_space<vmem>>, vector<4x1xf32>
    %23 = vector.broadcast %22 : vector<4x1xf32> to vector<4x256xf32>
    %24 = arith.addf %21, %23 : vector<4x256xf32>
    %cst_22 = arith.constant 0.000000e+00 : f32
    %25 = vector.broadcast %cst_22 : f32 to vector<4x256xf32>
    %26 = arith.subf %25, %24 : vector<4x256xf32>
    %27 = math.exp %26 : vector<4x256xf32>
    %cst_23 = arith.constant 1.000000e+00 : f32
    %28 = vector.broadcast %cst_23 : f32 to vector<4x256xf32>
    %29 = arith.addf %28, %27 : vector<4x256xf32>
    %cst_24 = arith.constant 1.000000e+00 : f32
    %30 = vector.broadcast %cst_24 : f32 to vector<4x256xf32>
    %31 = arith.divf %30, %29 : vector<4x256xf32>
    %c0_25 = arith.constant 0 : index
    %c0_26 = arith.constant 0 : index
    %c0_27 = arith.constant 0 : index
    %32 = vector.load %arg9[%c0_25, %c0_26, %c0_27] : memref<9x4x4xf32, #tpu.memory_space<vmem>>, vector<1x4x4xf32>
    %33 = vector.shape_cast %32 : vector<1x4x4xf32> to vector<4x4xf32>
    %c0_28 = arith.constant 0 : index
    %c0_29 = arith.constant 0 : index
    %c0_30 = arith.constant 0 : index
    %34 = vector.load %arg4[%c0_28, %c0_29, %c0_30] : memref<9x256x256xf32, #tpu.memory_space<vmem>>, vector<1x256x256xf32>
    %35 = vector.shape_cast %34 : vector<1x256x256xf32> to vector<256x256xf32>
    %cst_31 = arith.constant dense<0.000000e+00> : vector<4x256xf32>
    %36 = tpu.matmul %1, %35, %cst_31 {dimension_numbers = #tpu.dot_dimension_numbers<[1], [0], [0], [1], [0, 0, 1, 1], [], []>} : vector<4x256xf32>, vector<256x256xf32>, vector<4x256xf32> -> vector<4x256xf32>
    %cst_32 = arith.constant dense<0.000000e+00> : vector<4x256xf32>
    %37 = tpu.matmul %33, %36, %cst_32 {dimension_numbers = #tpu.dot_dimension_numbers<[1], [0], [0], [1], [0, 0, 1, 1], [], []>} : vector<4x4xf32>, vector<4x256xf32>, vector<4x256xf32> -> vector<4x256xf32>
    %c1 = arith.constant 1 : index
    %c0_33 = arith.constant 0 : index
    %c0_34 = arith.constant 0 : index
    %38 = vector.load %arg9[%c1, %c0_33, %c0_34] : memref<9x4x4xf32, #tpu.memory_space<vmem>>, vector<1x4x4xf32>
    %39 = vector.shape_cast %38 : vector<1x4x4xf32> to vector<4x4xf32>
    %c1_35 = arith.constant 1 : index
    %c0_36 = arith.constant 0 : index
    %c0_37 = arith.constant 0 : index
    %40 = vector.load %arg4[%c1_35, %c0_36, %c0_37] : memref<9x256x256xf32, #tpu.memory_space<vmem>>, vector<1x256x256xf32>
    %41 = vector.shape_cast %40 : vector<1x256x256xf32> to vector<256x256xf32>
    %cst_38 = arith.constant dense<0.000000e+00> : vector<4x256xf32>
    %42 = tpu.matmul %1, %41, %cst_38 {dimension_numbers = #tpu.dot_dimension_numbers<[1], [0], [0], [1], [0, 0, 1, 1], [], []>} : vector<4x256xf32>, vector<256x256xf32>, vector<4x256xf32> -> vector<4x256xf32>
    %cst_39 = arith.constant dense<0.000000e+00> : vector<4x256xf32>
    %43 = tpu.matmul %39, %42, %cst_39 {dimension_numbers = #tpu.dot_dimension_numbers<[1], [0], [0], [1], [0, 0, 1, 1], [], []>} : vector<4x4xf32>, vector<4x256xf32>, vector<4x256xf32> -> vector<4x256xf32>
    %44 = arith.addf %37, %43 : vector<4x256xf32>
    %c2 = arith.constant 2 : index
    %c0_40 = arith.constant 0 : index
    %c0_41 = arith.constant 0 : index
    %45 = vector.load %arg9[%c2, %c0_40, %c0_41] : memref<9x4x4xf32, #tpu.memory_space<vmem>>, vector<1x4x4xf32>
    %46 = vector.shape_cast %45 : vector<1x4x4xf32> to vector<4x4xf32>
    %c2_42 = arith.constant 2 : index
    %c0_43 = arith.constant 0 : index
    %c0_44 = arith.constant 0 : index
    %47 = vector.load %arg4[%c2_42, %c0_43, %c0_44] : memref<9x256x256xf32, #tpu.memory_space<vmem>>, vector<1x256x256xf32>
    %48 = vector.shape_cast %47 : vector<1x256x256xf32> to vector<256x256xf32>
    %cst_45 = arith.constant dense<0.000000e+00> : vector<4x256xf32>
    %49 = tpu.matmul %1, %48, %cst_45 {dimension_numbers = #tpu.dot_dimension_numbers<[1], [0], [0], [1], [0, 0, 1, 1], [], []>} : vector<4x256xf32>, vector<256x256xf32>, vector<4x256xf32> -> vector<4x256xf32>
    %cst_46 = arith.constant dense<0.000000e+00> : vector<4x256xf32>
    %50 = tpu.matmul %46, %49, %cst_46 {dimension_numbers = #tpu.dot_dimension_numbers<[1], [0], [0], [1], [0, 0, 1, 1], [], []>} : vector<4x4xf32>, vector<4x256xf32>, vector<4x256xf32> -> vector<4x256xf32>
    %51 = arith.addf %44, %50 : vector<4x256xf32>
    %c3 = arith.constant 3 : index
    %c0_47 = arith.constant 0 : index
    %c0_48 = arith.constant 0 : index
    %52 = vector.load %arg9[%c3, %c0_47, %c0_48] : memref<9x4x4xf32, #tpu.memory_space<vmem>>, vector<1x4x4xf32>
    %53 = vector.shape_cast %52 : vector<1x4x4xf32> to vector<4x4xf32>
    %c3_49 = arith.constant 3 : index
    %c0_50 = arith.constant 0 : index
    %c0_51 = arith.constant 0 : index
    %54 = vector.load %arg4[%c3_49, %c0_50, %c0_51] : memref<9x256x256xf32, #tpu.memory_space<vmem>>, vector<1x256x256xf32>
    %55 = vector.shape_cast %54 : vector<1x256x256xf32> to vector<256x256xf32>
    %cst_52 = arith.constant dense<0.000000e+00> : vector<4x256xf32>
    %56 = tpu.matmul %1, %55, %cst_52 {dimension_numbers = #tpu.dot_dimension_numbers<[1], [0], [0], [1], [0, 0, 1, 1], [], []>} : vector<4x256xf32>, vector<256x256xf32>, vector<4x256xf32> -> vector<4x256xf32>
    %cst_53 = arith.constant dense<0.000000e+00> : vector<4x256xf32>
    %57 = tpu.matmul %53, %56, %cst_53 {dimension_numbers = #tpu.dot_dimension_numbers<[1], [0], [0], [1], [0, 0, 1, 1], [], []>} : vector<4x4xf32>, vector<4x256xf32>, vector<4x256xf32> -> vector<4x256xf32>
    %58 = arith.addf %51, %57 : vector<4x256xf32>
    %c4 = arith.constant 4 : index
    %c0_54 = arith.constant 0 : index
    %c0_55 = arith.constant 0 : index
    %59 = vector.load %arg9[%c4, %c0_54, %c0_55] : memref<9x4x4xf32, #tpu.memory_space<vmem>>, vector<1x4x4xf32>
    %60 = vector.shape_cast %59 : vector<1x4x4xf32> to vector<4x4xf32>
    %c4_56 = arith.constant 4 : index
    %c0_57 = arith.constant 0 : index
    %c0_58 = arith.constant 0 : index
    %61 = vector.load %arg4[%c4_56, %c0_57, %c0_58] : memref<9x256x256xf32, #tpu.memory_space<vmem>>, vector<1x256x256xf32>
    %62 = vector.shape_cast %61 : vector<1x256x256xf32> to vector<256x256xf32>
    %cst_59 = arith.constant dense<0.000000e+00> : vector<4x256xf32>
    %63 = tpu.matmul %1, %62, %cst_59 {dimension_numbers = #tpu.dot_dimension_numbers<[1], [0], [0], [1], [0, 0, 1, 1], [], []>} : vector<4x256xf32>, vector<256x256xf32>, vector<4x256xf32> -> vector<4x256xf32>
    %cst_60 = arith.constant dense<0.000000e+00> : vector<4x256xf32>
    %64 = tpu.matmul %60, %63, %cst_60 {dimension_numbers = #tpu.dot_dimension_numbers<[1], [0], [0], [1], [0, 0, 1, 1], [], []>} : vector<4x4xf32>, vector<4x256xf32>, vector<4x256xf32> -> vector<4x256xf32>
    %65 = arith.addf %58, %64 : vector<4x256xf32>
    %c5 = arith.constant 5 : index
    %c0_61 = arith.constant 0 : index
    %c0_62 = arith.constant 0 : index
    %66 = vector.load %arg9[%c5, %c0_61, %c0_62] : memref<9x4x4xf32, #tpu.memory_space<vmem>>, vector<1x4x4xf32>
    %67 = vector.shape_cast %66 : vector<1x4x4xf32> to vector<4x4xf32>
    %c5_63 = arith.constant 5 : index
    %c0_64 = arith.constant 0 : index
    %c0_65 = arith.constant 0 : index
    %68 = vector.load %arg4[%c5_63, %c0_64, %c0_65] : memref<9x256x256xf32, #tpu.memory_space<vmem>>, vector<1x256x256xf32>
    %69 = vector.shape_cast %68 : vector<1x256x256xf32> to vector<256x256xf32>
    %cst_66 = arith.constant dense<0.000000e+00> : vector<4x256xf32>
    %70 = tpu.matmul %1, %69, %cst_66 {dimension_numbers = #tpu.dot_dimension_numbers<[1], [0], [0], [1], [0, 0, 1, 1], [], []>} : vector<4x256xf32>, vector<256x256xf32>, vector<4x256xf32> -> vector<4x256xf32>
    %cst_67 = arith.constant dense<0.000000e+00> : vector<4x256xf32>
    %71 = tpu.matmul %67, %70, %cst_67 {dimension_numbers = #tpu.dot_dimension_numbers<[1], [0], [0], [1], [0, 0, 1, 1], [], []>} : vector<4x4xf32>, vector<4x256xf32>, vector<4x256xf32> -> vector<4x256xf32>
    %72 = arith.addf %65, %71 : vector<4x256xf32>
    %c6 = arith.constant 6 : index
    %c0_68 = arith.constant 0 : index
    %c0_69 = arith.constant 0 : index
    %73 = vector.load %arg9[%c6, %c0_68, %c0_69] : memref<9x4x4xf32, #tpu.memory_space<vmem>>, vector<1x4x4xf32>
    %74 = vector.shape_cast %73 : vector<1x4x4xf32> to vector<4x4xf32>
    %c6_70 = arith.constant 6 : index
    %c0_71 = arith.constant 0 : index
    %c0_72 = arith.constant 0 : index
    %75 = vector.load %arg4[%c6_70, %c0_71, %c0_72] : memref<9x256x256xf32, #tpu.memory_space<vmem>>, vector<1x256x256xf32>
    %76 = vector.shape_cast %75 : vector<1x256x256xf32> to vector<256x256xf32>
    %cst_73 = arith.constant dense<0.000000e+00> : vector<4x256xf32>
    %77 = tpu.matmul %1, %76, %cst_73 {dimension_numbers = #tpu.dot_dimension_numbers<[1], [0], [0], [1], [0, 0, 1, 1], [], []>} : vector<4x256xf32>, vector<256x256xf32>, vector<4x256xf32> -> vector<4x256xf32>
    %cst_74 = arith.constant dense<0.000000e+00> : vector<4x256xf32>
    %78 = tpu.matmul %74, %77, %cst_74 {dimension_numbers = #tpu.dot_dimension_numbers<[1], [0], [0], [1], [0, 0, 1, 1], [], []>} : vector<4x4xf32>, vector<4x256xf32>, vector<4x256xf32> -> vector<4x256xf32>
    %79 = arith.addf %72, %78 : vector<4x256xf32>
    %c7 = arith.constant 7 : index
    %c0_75 = arith.constant 0 : index
    %c0_76 = arith.constant 0 : index
    %80 = vector.load %arg9[%c7, %c0_75, %c0_76] : memref<9x4x4xf32, #tpu.memory_space<vmem>>, vector<1x4x4xf32>
    %81 = vector.shape_cast %80 : vector<1x4x4xf32> to vector<4x4xf32>
    %c7_77 = arith.constant 7 : index
    %c0_78 = arith.constant 0 : index
    %c0_79 = arith.constant 0 : index
    %82 = vector.load %arg4[%c7_77, %c0_78, %c0_79] : memref<9x256x256xf32, #tpu.memory_space<vmem>>, vector<1x256x256xf32>
    %83 = vector.shape_cast %82 : vector<1x256x256xf32> to vector<256x256xf32>
    %cst_80 = arith.constant dense<0.000000e+00> : vector<4x256xf32>
    %84 = tpu.matmul %1, %83, %cst_80 {dimension_numbers = #tpu.dot_dimension_numbers<[1], [0], [0], [1], [0, 0, 1, 1], [], []>} : vector<4x256xf32>, vector<256x256xf32>, vector<4x256xf32> -> vector<4x256xf32>
    %cst_81 = arith.constant dense<0.000000e+00> : vector<4x256xf32>
    %85 = tpu.matmul %81, %84, %cst_81 {dimension_numbers = #tpu.dot_dimension_numbers<[1], [0], [0], [1], [0, 0, 1, 1], [], []>} : vector<4x4xf32>, vector<4x256xf32>, vector<4x256xf32> -> vector<4x256xf32>
    %86 = arith.addf %79, %85 : vector<4x256xf32>
    %c8 = arith.constant 8 : index
    %c0_82 = arith.constant 0 : index
    %c0_83 = arith.constant 0 : index
    %87 = vector.load %arg9[%c8, %c0_82, %c0_83] : memref<9x4x4xf32, #tpu.memory_space<vmem>>, vector<1x4x4xf32>
    %88 = vector.shape_cast %87 : vector<1x4x4xf32> to vector<4x4xf32>
    %c8_84 = arith.constant 8 : index
    %c0_85 = arith.constant 0 : index
    %c0_86 = arith.constant 0 : index
    %89 = vector.load %arg4[%c8_84, %c0_85, %c0_86] : memref<9x256x256xf32, #tpu.memory_space<vmem>>, vector<1x256x256xf32>
    %90 = vector.shape_cast %89 : vector<1x256x256xf32> to vector<256x256xf32>
    %cst_87 = arith.constant dense<0.000000e+00> : vector<4x256xf32>
    %91 = tpu.matmul %1, %90, %cst_87 {dimension_numbers = #tpu.dot_dimension_numbers<[1], [0], [0], [1], [0, 0, 1, 1], [], []>} : vector<4x256xf32>, vector<256x256xf32>, vector<4x256xf32> -> vector<4x256xf32>
    %cst_88 = arith.constant dense<0.000000e+00> : vector<4x256xf32>
    %92 = tpu.matmul %88, %91, %cst_88 {dimension_numbers = #tpu.dot_dimension_numbers<[1], [0], [0], [1], [0, 0, 1, 1], [], []>} : vector<4x4xf32>, vector<4x256xf32>, vector<4x256xf32> -> vector<4x256xf32>
    %93 = arith.addf %86, %92 : vector<4x256xf32>
    %94 = arith.mulf %93, %31 : vector<4x256xf32>
    %c0_89 = arith.constant 0 : index
    %c0_90 = arith.constant 0 : index
    %c0_91 = arith.constant 0 : index
    %95 = vector.load %arg10[%c0_89, %c0_90, %c0_91] : memref<9x4x4xf32, #tpu.memory_space<vmem>>, vector<1x4x4xf32>
    %96 = vector.shape_cast %95 : vector<1x4x4xf32> to vector<4x4xf32>
    %c0_92 = arith.constant 0 : index
    %c0_93 = arith.constant 0 : index
    %c0_94 = arith.constant 0 : index
    %97 = vector.load %arg4[%c0_92, %c0_93, %c0_94] : memref<9x256x256xf32, #tpu.memory_space<vmem>>, vector<1x256x256xf32>
    %98 = vector.shape_cast %97 : vector<1x256x256xf32> to vector<256x256xf32>
    %cst_95 = arith.constant dense<0.000000e+00> : vector<4x256xf32>
    %99 = tpu.matmul %94, %98, %cst_95 {dimension_numbers = #tpu.dot_dimension_numbers<[1], [0], [0], [1], [0, 0, 1, 1], [], []>} : vector<4x256xf32>, vector<256x256xf32>, vector<4x256xf32> -> vector<4x256xf32>
    %cst_96 = arith.constant dense<0.000000e+00> : vector<4x256xf32>
    %100 = tpu.matmul %96, %99, %cst_96 {dimension_numbers = #tpu.dot_dimension_numbers<[1], [0], [0], [1], [0, 0, 1, 1], [], []>} : vector<4x4xf32>, vector<4x256xf32>, vector<4x256xf32> -> vector<4x256xf32>
    %c1_97 = arith.constant 1 : index
    %c0_98 = arith.constant 0 : index
    %c0_99 = arith.constant 0 : index
    %101 = vector.load %arg10[%c1_97, %c0_98, %c0_99] : memref<9x4x4xf32, #tpu.memory_space<vmem>>, vector<1x4x4xf32>
    %102 = vector.shape_cast %101 : vector<1x4x4xf32> to vector<4x4xf32>
    %c1_100 = arith.constant 1 : index
    %c0_101 = arith.constant 0 : index
    %c0_102 = arith.constant 0 : index
    %103 = vector.load %arg4[%c1_100, %c0_101, %c0_102] : memref<9x256x256xf32, #tpu.memory_space<vmem>>, vector<1x256x256xf32>
    %104 = vector.shape_cast %103 : vector<1x256x256xf32> to vector<256x256xf32>
    %cst_103 = arith.constant dense<0.000000e+00> : vector<4x256xf32>
    %105 = tpu.matmul %94, %104, %cst_103 {dimension_numbers = #tpu.dot_dimension_numbers<[1], [0], [0], [1], [0, 0, 1, 1], [], []>} : vector<4x256xf32>, vector<256x256xf32>, vector<4x256xf32> -> vector<4x256xf32>
    %cst_104 = arith.constant dense<0.000000e+00> : vector<4x256xf32>
    %106 = tpu.matmul %102, %105, %cst_104 {dimension_numbers = #tpu.dot_dimension_numbers<[1], [0], [0], [1], [0, 0, 1, 1], [], []>} : vector<4x4xf32>, vector<4x256xf32>, vector<4x256xf32> -> vector<4x256xf32>
    %107 = arith.addf %100, %106 : vector<4x256xf32>
    %c2_105 = arith.constant 2 : index
    %c0_106 = arith.constant 0 : index
    %c0_107 = arith.constant 0 : index
    %108 = vector.load %arg10[%c2_105, %c0_106, %c0_107] : memref<9x4x4xf32, #tpu.memory_space<vmem>>, vector<1x4x4xf32>
    %109 = vector.shape_cast %108 : vector<1x4x4xf32> to vector<4x4xf32>
    %c2_108 = arith.constant 2 : index
    %c0_109 = arith.constant 0 : index
    %c0_110 = arith.constant 0 : index
    %110 = vector.load %arg4[%c2_108, %c0_109, %c0_110] : memref<9x256x256xf32, #tpu.memory_space<vmem>>, vector<1x256x256xf32>
    %111 = vector.shape_cast %110 : vector<1x256x256xf32> to vector<256x256xf32>
    %cst_111 = arith.constant dense<0.000000e+00> : vector<4x256xf32>
    %112 = tpu.matmul %94, %111, %cst_111 {dimension_numbers = #tpu.dot_dimension_numbers<[1], [0], [0], [1], [0, 0, 1, 1], [], []>} : vector<4x256xf32>, vector<256x256xf32>, vector<4x256xf32> -> vector<4x256xf32>
    %cst_112 = arith.constant dense<0.000000e+00> : vector<4x256xf32>
    %113 = tpu.matmul %109, %112, %cst_112 {dimension_numbers = #tpu.dot_dimension_numbers<[1], [0], [0], [1], [0, 0, 1, 1], [], []>} : vector<4x4xf32>, vector<4x256xf32>, vector<4x256xf32> -> vector<4x256xf32>
    %114 = arith.addf %107, %113 : vector<4x256xf32>
    %c3_113 = arith.constant 3 : index
    %c0_114 = arith.constant 0 : index
    %c0_115 = arith.constant 0 : index
    %115 = vector.load %arg10[%c3_113, %c0_114, %c0_115] : memref<9x4x4xf32, #tpu.memory_space<vmem>>, vector<1x4x4xf32>
    %116 = vector.shape_cast %115 : vector<1x4x4xf32> to vector<4x4xf32>
    %c3_116 = arith.constant 3 : index
    %c0_117 = arith.constant 0 : index
    %c0_118 = arith.constant 0 : index
    %117 = vector.load %arg4[%c3_116, %c0_117, %c0_118] : memref<9x256x256xf32, #tpu.memory_space<vmem>>, vector<1x256x256xf32>
    %118 = vector.shape_cast %117 : vector<1x256x256xf32> to vector<256x256xf32>
    %cst_119 = arith.constant dense<0.000000e+00> : vector<4x256xf32>
    %119 = tpu.matmul %94, %118, %cst_119 {dimension_numbers = #tpu.dot_dimension_numbers<[1], [0], [0], [1], [0, 0, 1, 1], [], []>} : vector<4x256xf32>, vector<256x256xf32>, vector<4x256xf32> -> vector<4x256xf32>
    %cst_120 = arith.constant dense<0.000000e+00> : vector<4x256xf32>
    %120 = tpu.matmul %116, %119, %cst_120 {dimension_numbers = #tpu.dot_dimension_numbers<[1], [0], [0], [1], [0, 0, 1, 1], [], []>} : vector<4x4xf32>, vector<4x256xf32>, vector<4x256xf32> -> vector<4x256xf32>
    %121 = arith.addf %114, %120 : vector<4x256xf32>
    %c4_121 = arith.constant 4 : index
    %c0_122 = arith.constant 0 : index
    %c0_123 = arith.constant 0 : index
    %122 = vector.load %arg10[%c4_121, %c0_122, %c0_123] : memref<9x4x4xf32, #tpu.memory_space<vmem>>, vector<1x4x4xf32>
    %123 = vector.shape_cast %122 : vector<1x4x4xf32> to vector<4x4xf32>
    %c4_124 = arith.constant 4 : index
    %c0_125 = arith.constant 0 : index
    %c0_126 = arith.constant 0 : index
    %124 = vector.load %arg4[%c4_124, %c0_125, %c0_126] : memref<9x256x256xf32, #tpu.memory_space<vmem>>, vector<1x256x256xf32>
    %125 = vector.shape_cast %124 : vector<1x256x256xf32> to vector<256x256xf32>
    %cst_127 = arith.constant dense<0.000000e+00> : vector<4x256xf32>
    %126 = tpu.matmul %94, %125, %cst_127 {dimension_numbers = #tpu.dot_dimension_numbers<[1], [0], [0], [1], [0, 0, 1, 1], [], []>} : vector<4x256xf32>, vector<256x256xf32>, vector<4x256xf32> -> vector<4x256xf32>
    %cst_128 = arith.constant dense<0.000000e+00> : vector<4x256xf32>
    %127 = tpu.matmul %123, %126, %cst_128 {dimension_numbers = #tpu.dot_dimension_numbers<[1], [0], [0], [1], [0, 0, 1, 1], [], []>} : vector<4x4xf32>, vector<4x256xf32>, vector<4x256xf32> -> vector<4x256xf32>
    %128 = arith.addf %121, %127 : vector<4x256xf32>
    %c5_129 = arith.constant 5 : index
    %c0_130 = arith.constant 0 : index
    %c0_131 = arith.constant 0 : index
    %129 = vector.load %arg10[%c5_129, %c0_130, %c0_131] : memref<9x4x4xf32, #tpu.memory_space<vmem>>, vector<1x4x4xf32>
    %130 = vector.shape_cast %129 : vector<1x4x4xf32> to vector<4x4xf32>
    %c5_132 = arith.constant 5 : index
    %c0_133 = arith.constant 0 : index
    %c0_134 = arith.constant 0 : index
    %131 = vector.load %arg4[%c5_132, %c0_133, %c0_134] : memref<9x256x256xf32, #tpu.memory_space<vmem>>, vector<1x256x256xf32>
    %132 = vector.shape_cast %131 : vector<1x256x256xf32> to vector<256x256xf32>
    %cst_135 = arith.constant dense<0.000000e+00> : vector<4x256xf32>
    %133 = tpu.matmul %94, %132, %cst_135 {dimension_numbers = #tpu.dot_dimension_numbers<[1], [0], [0], [1], [0, 0, 1, 1], [], []>} : vector<4x256xf32>, vector<256x256xf32>, vector<4x256xf32> -> vector<4x256xf32>
    %cst_136 = arith.constant dense<0.000000e+00> : vector<4x256xf32>
    %134 = tpu.matmul %130, %133, %cst_136 {dimension_numbers = #tpu.dot_dimension_numbers<[1], [0], [0], [1], [0, 0, 1, 1], [], []>} : vector<4x4xf32>, vector<4x256xf32>, vector<4x256xf32> -> vector<4x256xf32>
    %135 = arith.addf %128, %134 : vector<4x256xf32>
    %c6_137 = arith.constant 6 : index
    %c0_138 = arith.constant 0 : index
    %c0_139 = arith.constant 0 : index
    %136 = vector.load %arg10[%c6_137, %c0_138, %c0_139] : memref<9x4x4xf32, #tpu.memory_space<vmem>>, vector<1x4x4xf32>
    %137 = vector.shape_cast %136 : vector<1x4x4xf32> to vector<4x4xf32>
    %c6_140 = arith.constant 6 : index
    %c0_141 = arith.constant 0 : index
    %c0_142 = arith.constant 0 : index
    %138 = vector.load %arg4[%c6_140, %c0_141, %c0_142] : memref<9x256x256xf32, #tpu.memory_space<vmem>>, vector<1x256x256xf32>
    %139 = vector.shape_cast %138 : vector<1x256x256xf32> to vector<256x256xf32>
    %cst_143 = arith.constant dense<0.000000e+00> : vector<4x256xf32>
    %140 = tpu.matmul %94, %139, %cst_143 {dimension_numbers = #tpu.dot_dimension_numbers<[1], [0], [0], [1], [0, 0, 1, 1], [], []>} : vector<4x256xf32>, vector<256x256xf32>, vector<4x256xf32> -> vector<4x256xf32>
    %cst_144 = arith.constant dense<0.000000e+00> : vector<4x256xf32>
    %141 = tpu.matmul %137, %140, %cst_144 {dimension_numbers = #tpu.dot_dimension_numbers<[1], [0], [0], [1], [0, 0, 1, 1], [], []>} : vector<4x4xf32>, vector<4x256xf32>, vector<4x256xf32> -> vector<4x256xf32>
    %142 = arith.addf %135, %141 : vector<4x256xf32>
    %c7_145 = arith.constant 7 : index
    %c0_146 = arith.constant 0 : index
    %c0_147 = arith.constant 0 : index
    %143 = vector.load %arg10[%c7_145, %c0_146, %c0_147] : memref<9x4x4xf32, #tpu.memory_space<vmem>>, vector<1x4x4xf32>
    %144 = vector.shape_cast %143 : vector<1x4x4xf32> to vector<4x4xf32>
    %c7_148 = arith.constant 7 : index
    %c0_149 = arith.constant 0 : index
    %c0_150 = arith.constant 0 : index
    %145 = vector.load %arg4[%c7_148, %c0_149, %c0_150] : memref<9x256x256xf32, #tpu.memory_space<vmem>>, vector<1x256x256xf32>
    %146 = vector.shape_cast %145 : vector<1x256x256xf32> to vector<256x256xf32>
    %cst_151 = arith.constant dense<0.000000e+00> : vector<4x256xf32>
    %147 = tpu.matmul %94, %146, %cst_151 {dimension_numbers = #tpu.dot_dimension_numbers<[1], [0], [0], [1], [0, 0, 1, 1], [], []>} : vector<4x256xf32>, vector<256x256xf32>, vector<4x256xf32> -> vector<4x256xf32>
    %cst_152 = arith.constant dense<0.000000e+00> : vector<4x256xf32>
    %148 = tpu.matmul %144, %147, %cst_152 {dimension_numbers = #tpu.dot_dimension_numbers<[1], [0], [0], [1], [0, 0, 1, 1], [], []>} : vector<4x4xf32>, vector<4x256xf32>, vector<4x256xf32> -> vector<4x256xf32>
    %149 = arith.addf %142, %148 : vector<4x256xf32>
    %c8_153 = arith.constant 8 : index
    %c0_154 = arith.constant 0 : index
    %c0_155 = arith.constant 0 : index
    %150 = vector.load %arg10[%c8_153, %c0_154, %c0_155] : memref<9x4x4xf32, #tpu.memory_space<vmem>>, vector<1x4x4xf32>
    %151 = vector.shape_cast %150 : vector<1x4x4xf32> to vector<4x4xf32>
    %c8_156 = arith.constant 8 : index
    %c0_157 = arith.constant 0 : index
    %c0_158 = arith.constant 0 : index
    %152 = vector.load %arg4[%c8_156, %c0_157, %c0_158] : memref<9x256x256xf32, #tpu.memory_space<vmem>>, vector<1x256x256xf32>
    %153 = vector.shape_cast %152 : vector<1x256x256xf32> to vector<256x256xf32>
    %cst_159 = arith.constant dense<0.000000e+00> : vector<4x256xf32>
    %154 = tpu.matmul %94, %153, %cst_159 {dimension_numbers = #tpu.dot_dimension_numbers<[1], [0], [0], [1], [0, 0, 1, 1], [], []>} : vector<4x256xf32>, vector<256x256xf32>, vector<4x256xf32> -> vector<4x256xf32>
    %cst_160 = arith.constant dense<0.000000e+00> : vector<4x256xf32>
    %155 = tpu.matmul %151, %154, %cst_160 {dimension_numbers = #tpu.dot_dimension_numbers<[1], [0], [0], [1], [0, 0, 1, 1], [], []>} : vector<4x4xf32>, vector<4x256xf32>, vector<4x256xf32> -> vector<4x256xf32>
    %156 = arith.addf %149, %155 : vector<4x256xf32>
    %c0_161 = arith.constant 0 : index
    %c0_162 = arith.constant 0 : index
    %c0_163 = arith.constant 0 : index
    %157 = vector.load %arg11[%c0_161, %c0_162, %c0_163] : memref<1x4x256xf32, #tpu.memory_space<vmem>>, vector<1x4x256xf32>
    %158 = vector.shape_cast %157 : vector<1x4x256xf32> to vector<4x256xf32>
    %159 = vector.shape_cast %156 : vector<4x256xf32> to vector<1x4x256xf32>
    tpu.vector_store %arg11[%c0_161, %c0_162, %c0_163], %159 {strides = array<i32>} : memref<1x4x256xf32, #tpu.memory_space<vmem>>, vector<1x4x256xf32>,
    return
  }
  func.func @transform_0(%arg0: i32) -> (i32, i32, i32) {
    %c0_i32 = arith.constant 0 : i32
    %c0_i32_0 = arith.constant 0 : i32
    %c0_i32_1 = arith.constant 0 : i32
    return %arg0, %c0_i32, %c0_i32_0 : i32, i32, i32
  }
  func.func @transform_1(%arg0: i32) -> (i32, i32) {
    %c0_i32 = arith.constant 0 : i32
    %c0_i32_0 = arith.constant 0 : i32
    %c0_i32_1 = arith.constant 0 : i32
    return %c0_i32, %c0_i32_0 : i32, i32
  }
  func.func @transform_2(%arg0: i32) -> (i32, i32) {
    %c0_i32 = arith.constant 0 : i32
    %c0_i32_0 = arith.constant 0 : i32
    %c0_i32_1 = arith.constant 0 : i32
    return %c0_i32, %c0_i32_0 : i32, i32
  }
  func.func @transform_3(%arg0: i32) -> (i32, i32, i32) {
    %c0_i32 = arith.constant 0 : i32
    %c0_i32_0 = arith.constant 0 : i32
    %c0_i32_1 = arith.constant 0 : i32
    %c0_i32_2 = arith.constant 0 : i32
    return %c0_i32, %c0_i32_0, %c0_i32_1 : i32, i32, i32
  }
  func.func @transform_4(%arg0: i32) -> (i32, i32) {
    %c0_i32 = arith.constant 0 : i32
    %c0_i32_0 = arith.constant 0 : i32
    %c0_i32_1 = arith.constant 0 : i32
    return %c0_i32, %c0_i32_0 : i32, i32
  }
  func.func @transform_5(%arg0: i32) -> (i32, i32) {
    %c0_i32 = arith.constant 0 : i32
    %c0_i32_0 = arith.constant 0 : i32
    %c0_i32_1 = arith.constant 0 : i32
    return %c0_i32, %c0_i32_0 : i32, i32
  }
  func.func @transform_6(%arg0: i32) -> (i32, i32) {
    %c0_i32 = arith.constant 0 : i32
    %c0_i32_0 = arith.constant 0 : i32
    %c0_i32_1 = arith.constant 0 : i32
    return %c0_i32, %c0_i32_0 : i32, i32
  }
  func.func @transform_7(%arg0: i32) -> (i32, i32) {
    %c0_i32 = arith.constant 0 : i32
    %c0_i32_0 = arith.constant 0 : i32
    %c0_i32_1 = arith.constant 0 : i32
    return %c0_i32, %c0_i32_0 : i32, i32
  }
  func.func @transform_8(%arg0: i32) -> (i32, i32, i32) {
    %c0_i32 = arith.constant 0 : i32
    %c0_i32_0 = arith.constant 0 : i32
    %c0_i32_1 = arith.constant 0 : i32
    %c0_i32_2 = arith.constant 0 : i32
    return %c0_i32, %c0_i32_0, %c0_i32_1 : i32, i32, i32
  }
  func.func @transform_9(%arg0: i32) -> (i32, i32, i32) {
    %c0_i32 = arith.constant 0 : i32
    %c0_i32_0 = arith.constant 0 : i32
    %c0_i32_1 = arith.constant 0 : i32
    %c0_i32_2 = arith.constant 0 : i32
    return %c0_i32, %c0_i32_0, %c0_i32_1 : i32, i32, i32
  }
  func.func @transform_10(%arg0: i32) -> (i32, i32, i32) {
    %c0_i32 = arith.constant 0 : i32
    %c0_i32_0 = arith.constant 0 : i32
    %c0_i32_1 = arith.constant 0 : i32
    return %arg0, %c0_i32, %c0_i32_0 : i32, i32, i32
  }
}

</mosaic_0001>

<llo_original>
// kernel: tpu_custom_call.1
$region0: #{tpu_custom_call.1}
  #allocation0 [shape = 'u32[]', space=smem, size = 0x4, offset = 0x4, fixed_abs, tag = 'smem constant byte address 0x4 - core index']
  #allocation1 [shape = 'u32[144,128]{1,0:T(1,128)}', space=vmem, size = 0x12000, scoped, tag = 'internal scratch']
  %s0 = inlined_call_operand.hbm [shape: f32[2,4,256], index: 0, kind: input, shape index: {}]
  %s1 = inlined_call_operand.vmem [shape: f32[256,81], index: 1, kind: input, shape index: {}]
  %s2 = inlined_call_operand.hbm [shape: f32[81,256], index: 2, kind: input, shape index: {}]
  %s3 = inlined_call_operand.hbm [shape: f32[9,256,256], index: 3, kind: input, shape index: {}]
  %s4 = inlined_call_operand.hbm [shape: f32[4,4], index: 4, kind: input, shape index: {}]
  %s5 = inlined_call_operand.hbm [shape: f32[4,4], index: 5, kind: input, shape index: {}]
  %s6 = inlined_call_operand.hbm [shape: f32[4,4], index: 6, kind: input, shape index: {}]
  %s7 = inlined_call_operand.vmem [shape: f32[4,1], index: 7, kind: input, shape index: {}]
  %s8 = inlined_call_operand.vmem [shape: f32[9,4,4], index: 8, kind: input, shape index: {}]
  %s9 = inlined_call_operand.vmem [shape: f32[9,4,4], index: 9, kind: input, shape index: {}]
  %s10 = inlined_call_operand.hbm [shape: f32[2,4,256], index: 10, kind: output, shape index: {}]
  %s11 = sld [smem:[#allocation0]]
  $region97: #{tpu_custom_call.1} parent=0
    _
  %s13 = ssub.s32 1, %s11
  %s14 = scalar_select 0, %s13, %s11
  $region1: #{tpu_custom_call.1} parent=0
    #allocation2 [shape = 'u8[8192]{0}', space=vmem, size = 0x2000, scoped, tag = 'input window, operand 0']
    #allocation3 [shape = 's32[2]{0}', space=sflag, size = 0x8, scoped, tag = 'scoped memory for tpu_custom_call.1']
    #allocation4 [shape = 's32[2]{0}', space=sflag, size = 0x8, scoped, tag = 'scoped memory for tpu_custom_call.1']
    #allocation5 [shape = 'u8[90112]{0}', space=vmem, size = 0x16000, scoped, tag = 'input window, operand 2, single buffered']
    #allocation6 [shape = 's32[1]{0}', space=sflag, size = 0x4, scoped, tag = 'scoped memory for tpu_custom_call.1']
    #allocation7 [shape = 'u8[2359296]{0}', space=vmem, size = 0x240000, scoped, tag = 'input window, operand 3, single buffered']
    #allocation8 [shape = 'u8[2048]{0}', space=vmem, size = 0x800, scoped, tag = 'input window, operand 4, single buffered']
    #allocation9 [shape = 's32[1]{0}', space=sflag, size = 0x4, scoped, tag = 'scoped memory for tpu_custom_call.1']
    #allocation10 [shape = 'u8[2048]{0}', space=vmem, size = 0x800, scoped, tag = 'input window, operand 5, single buffered']
    #allocation11 [shape = 'u8[2048]{0}', space=vmem, size = 0x800, scoped, tag = 'input window, operand 6, single buffered']
    #allocation12 [shape = 's32[1]{0}', space=sflag, size = 0x4, scoped, tag = 'scoped memory for tpu_custom_call.1']
    #allocation13 [shape = 'u8[8192]{0}', space=vmem, size = 0x2000, scoped, tag = 'output window, operand 0']
    %15 = vsyncpa [#allocation3], 0
    %s16 = scalar_lea.sflag [#allocation3], 1
    %17 = vsyncpa %s16, 0
    %18 = vsyncpa [#allocation6], 0
    %19 = vsyncpa [#allocation9], 0
    %20 = vsyncpa [#allocation12], 0
    %21 = vsyncpa [#allocation4], 0
    %s22 = scalar_lea.sflag [#allocation4], 1
    %23 = vsyncpa %s22, 0
    loop: start=0, step=1, limit=4
    $region2: #{tpu_custom_call.1} parent=1 // loop_pre_header
      _
    $region3: #{tpu_custom_call.1} parent=1 // loop_header
      %s25 = sphi 0, %s29
      %p26 = scmp.ge.s32.totalorder %s25, 4
      %s35 = sphi 0, %s37
      %s38 = sphi 0, %s35
      %s39 = sphi 0, %s38
      %s55 = sphi 0, %s39
      %s59 = sphi 0, %s59
      %s61 = sphi 0, %s59
      %s62 = sphi 0, %s61
      %s76 = sphi 0, %s62
      %s80 = sphi 0, %s80
      %s82 = sphi 0, %s80
      %s83 = sphi 0, %s82
      %s97 = sphi 0, %s83
      %s101 = sphi 0, %s101
      %s103 = sphi 0, %s101
      %s104 = sphi 0, %s103
      %s118 = sphi 0, %s104
      %s122 = sphi 0, %s122
      %s124 = sphi 0, %s122
      %s125 = sphi 0, %s124
      %s139 = sphi 0, %s125
      %s143 = sphi 0, %s143
      %s145 = sphi 0, %s143
      %s146 = sphi 0, %s145
      %s160 = sphi 0, %s146
      %s164 = sphi 0, %s164
      %s166 = sphi 0, %s164
      %s167 = sphi 0, %s166
      %s181 = sphi 0, %s167
      %s185 = sphi 0, %s185
      %s187 = sphi 0, %s185
      %s188 = sphi 0, %s187
      %s202 = sphi 0, %s188
      %s206 = sphi 0, %s206
      %s208 = sphi 0, %s206
      %s209 = sphi 0, %s208
      %s223 = sphi 0, %s209
      %s227 = sphi 0, %s227
      %s229 = sphi 0, %s227
      %s230 = sphi 0, %s229
      %s244 = sphi 0, %s230
      %s250 = sphi 0, %s252
      %s253 = sphi 0, %s250
      %s254 = sphi 0, %s253
      %s270 = sphi 0, %s254
    $region4: #{tpu_custom_call.1} parent=1 // loop_header_branch
      %28 = sbr.rel (%p26) target = $region8
    $region5: #{tpu_custom_call.1} parent=1 // loop_body
      %s30 = ssub.s32 %s25, 1
      %s31 = ssub.s32 %s25, 2
      %s32 = sadd.s32 %s25, 1
      %s33 = ssub.s32 %s25, %s32
      %p34 = scmp.eq.s32.totalorder %s33, 0
      %s36 = sadd.s32 %s35, 1
      %s37 = scalar_select %p34, %s35, %s36
      %p40 = pneg %p34
      %p41 = scmp.eq.s32.totalorder %s25, 1
      %p42 = por %p40, %p41
      %p43 = scmp.ne.s32.totalorder %s35, %s38
      %p44 = scmp.eq.s32.totalorder %s25, 0
      %p45 = por %p43, %p44
      %p46 = scmp.ne.s32.totalorder %s35, %s38
      %p47 = scmp.eq.s32.totalorder %s30, 1
      %p48 = por %p46, %p47
      %p49 = scmp.ne.s32.totalorder %s38, %s39
      %p50 = scmp.eq.s32.totalorder %s30, 0
      %p51 = por %p49, %p50
      %p52 = scmp.ne.s32.totalorder %s38, %s39
      %p53 = scmp.eq.s32.totalorder %s31, 1
      %p54 = por %p52, %p53
      %p56 = scmp.ne.s32.totalorder %s39, %s55
      %p57 = scmp.eq.s32.totalorder %s31, 0
      %p58 = por %p56, %p57
      %s60 = sadd.s32 %s59, 1
      %p63 = scmp.eq.s32.totalorder %s25, 1
      %p64 = scmp.ne.s32.totalorder %s59, %s61
      %p65 = scmp.eq.s32.totalorder %s25, 0
      %p66 = por %p64, %p65
      %p67 = scmp.ne.s32.totalorder %s59, %s61
      %p68 = scmp.eq.s32.totalorder %s30, 1
      %p69 = por %p67, %p68
      %p70 = scmp.ne.s32.totalorder %s61, %s62
      %p71 = scmp.eq.s32.totalorder %s30, 0
      %p72 = por %p70, %p71
      %p73 = scmp.ne.s32.totalorder %s61, %s62
      %p74 = scmp.eq.s32.totalorder %s31, 1
      %p75 = por %p73, %p74
      %p77 = scmp.ne.s32.totalorder %s62, %s76
      %p78 = scmp.eq.s32.totalorder %s31, 0
      %p79 = por %p77, %p78
      %s81 = sadd.s32 %s80, 1
      %p84 = scmp.eq.s32.totalorder %s25, 1
      %p85 = scmp.ne.s32.totalorder %s80, %s82
      %p86 = scmp.eq.s32.totalorder %s25, 0
      %p87 = por %p85, %p86
      %p88 = scmp.ne.s32.totalorder %s80, %s82
      %p89 = scmp.eq.s32.totalorder %s30, 1
      %p90 = por %p88, %p89
      %p91 = scmp.ne.s32.totalorder %s82, %s83
      %p92 = scmp.eq.s32.totalorder %s30, 0
      %p93 = por %p91, %p92
      %p94 = scmp.ne.s32.totalorder %s82, %s83
      %p95 = scmp.eq.s32.totalorder %s31, 1
      %p96 = por %p94, %p95
      %p98 = scmp.ne.s32.totalorder %s83, %s97
      %p99 = scmp.eq.s32.totalorder %s31, 0
      %p100 = por %p98, %p99
      %s102 = sadd.s32 %s101, 1
      %p105 = scmp.eq.s32.totalorder %s25, 1
      %p106 = scmp.ne.s32.totalorder %s101, %s103
      %p107 = scmp.eq.s32.totalorder %s25, 0
      %p108 = por %p106, %p107
      %p109 = scmp.ne.s32.totalorder %s101, %s103
      %p110 = scmp.eq.s32.totalorder %s30, 1
      %p111 = por %p109, %p110
      %p112 = scmp.ne.s32.totalorder %s103, %s104
      %p113 = scmp.eq.s32.totalorder %s30, 0
      %p114 = por %p112, %p113
      %p115 = scmp.ne.s32.totalorder %s103, %s104
      %p116 = scmp.eq.s32.totalorder %s31, 1
      %p117 = por %p115, %p116
      %p119 = scmp.ne.s32.totalorder %s104, %s118
      %p120 = scmp.eq.s32.totalorder %s31, 0
      %p121 = por %p119, %p120
      %s123 = sadd.s32 %s122, 1
      %p126 = scmp.eq.s32.totalorder %s25, 1
      %p127 = scmp.ne.s32.totalorder %s122, %s124
      %p128 = scmp.eq.s32.totalorder %s25, 0
      %p129 = por %p127, %p128
      %p130 = scmp.ne.s32.totalorder %s122, %s124
      %p131 = scmp.eq.s32.totalorder %s30, 1
      %p132 = por %p130, %p131
      %p133 = scmp.ne.s32.totalorder %s124, %s125
      %p134 = scmp.eq.s32.totalorder %s30, 0
      %p135 = por %p133, %p134
      %p136 = scmp.ne.s32.totalorder %s124, %s125
      %p137 = scmp.eq.s32.totalorder %s31, 1
      %p138 = por %p136, %p137
      %p140 = scmp.ne.s32.totalorder %s125, %s139
      %p141 = scmp.eq.s32.totalorder %s31, 0
      %p142 = por %p140, %p141
      %s144 = sadd.s32 %s143, 1
      %p147 = scmp.eq.s32.totalorder %s25, 1
      %p148 = scmp.ne.s32.totalorder %s143, %s145
      %p149 = scmp.eq.s32.totalorder %s25, 0
      %p150 = por %p148, %p149
      %p151 = scmp.ne.s32.totalorder %s143, %s145
      %p152 = scmp.eq.s32.totalorder %s30, 1
      %p153 = por %p151, %p152
      %p154 = scmp.ne.s32.totalorder %s145, %s146
      %p155 = scmp.eq.s32.totalorder %s30, 0
      %p156 = por %p154, %p155
      %p157 = scmp.ne.s32.totalorder %s145, %s146
      %p158 = scmp.eq.s32.totalorder %s31, 1
      %p159 = por %p157, %p158
      %p161 = scmp.ne.s32.totalorder %s146, %s160
      %p162 = scmp.eq.s32.totalorder %s31, 0
      %p163 = por %p161, %p162
      %s165 = sadd.s32 %s164, 1
      %p168 = scmp.eq.s32.totalorder %s25, 1
      %p169 = scmp.ne.s32.totalorder %s164, %s166
      %p170 = scmp.eq.s32.totalorder %s25, 0
      %p171 = por %p169, %p170
      %p172 = scmp.ne.s32.totalorder %s164, %s166
      %p173 = scmp.eq.s32.totalorder %s30, 1
      %p174 = por %p172, %p173
      %p175 = scmp.ne.s32.totalorder %s166, %s167
      %p176 = scmp.eq.s32.totalorder %s30, 0
      %p177 = por %p175, %p176
      %p178 = scmp.ne.s32.totalorder %s166, %s167
      %p179 = scmp.eq.s32.totalorder %s31, 1
      %p180 = por %p178, %p179
      %p182 = scmp.ne.s32.totalorder %s167, %s181
      %p183 = scmp.eq.s32.totalorder %s31, 0
      %p184 = por %p182, %p183
      %s186 = sadd.s32 %s185, 1
      %p189 = scmp.eq.s32.totalorder %s25, 1
      %p190 = scmp.ne.s32.totalorder %s185, %s187
      %p191 = scmp.eq.s32.totalorder %s25, 0
      %p192 = por %p190, %p191
      %p193 = scmp.ne.s32.totalorder %s185, %s187
      %p194 = scmp.eq.s32.totalorder %s30, 1
      %p195 = por %p193, %p194
      %p196 = scmp.ne.s32.totalorder %s187, %s188
      %p197 = scmp.eq.s32.totalorder %s30, 0
      %p198 = por %p196, %p197
      %p199 = scmp.ne.s32.totalorder %s187, %s188
      %p200 = scmp.eq.s32.totalorder %s31, 1
      %p201 = por %p199, %p200
      %p203 = scmp.ne.s32.totalorder %s188, %s202
      %p204 = scmp.eq.s32.totalorder %s31, 0
      %p205 = por %p203, %p204
      %s207 = sadd.s32 %s206, 1
      %p210 = scmp.eq.s32.totalorder %s25, 1
      %p211 = scmp.ne.s32.totalorder %s206, %s208
      %p212 = scmp.eq.s32.totalorder %s25, 0
      %p213 = por %p211, %p212
      %p214 = scmp.ne.s32.totalorder %s206, %s208
      %p215 = scmp.eq.s32.totalorder %s30, 1
      %p216 = por %p214, %p215
      %p217 = scmp.ne.s32.totalorder %s208, %s209
      %p218 = scmp.eq.s32.totalorder %s30, 0
      %p219 = por %p217, %p218
      %p220 = scmp.ne.s32.totalorder %s208, %s209
      %p221 = scmp.eq.s32.totalorder %s31, 1
      %p222 = por %p220, %p221
      %p224 = scmp.ne.s32.totalorder %s209, %s223
      %p225 = scmp.eq.s32.totalorder %s31, 0
      %p226 = por %p224, %p225
      %s228 = sadd.s32 %s227, 1
      %p231 = scmp.eq.s32.totalorder %s25, 1
      %p232 = scmp.ne.s32.totalorder %s227, %s229
      %p233 = scmp.eq.s32.totalorder %s25, 0
      %p234 = por %p232, %p233
      %p235 = scmp.ne.s32.totalorder %s227, %s229
      %p236 = scmp.eq.s32.totalorder %s30, 1
      %p237 = por %p235, %p236
      %p238 = scmp.ne.s32.totalorder %s229, %s230
      %p239 = scmp.eq.s32.totalorder %s30, 0
      %p240 = por %p238, %p239
      %p241 = scmp.ne.s32.totalorder %s229, %s230
      %p242 = scmp.eq.s32.totalorder %s31, 1
      %p243 = por %p241, %p242
      %p245 = scmp.ne.s32.totalorder %s230, %s244
      %p246 = scmp.eq.s32.totalorder %s31, 0
      %p247 = por %p245, %p246
      %s248 = ssub.s32 %s25, %s32
      %p249 = scmp.eq.s32.totalorder %s248, 0
      %s251 = sadd.s32 %s250, 1
      %s252 = scalar_select %p249, %s250, %s251
      %p255 = pneg %p249
      %p256 = scmp.eq.s32.totalorder %s25, 1
      %p257 = por %p255, %p256
      %p258 = scmp.ne.s32.totalorder %s250, %s253
      %p259 = scmp.eq.s32.totalorder %s25, 0
      %p260 = por %p258, %p259
      %p261 = scmp.ne.s32.totalorder %s250, %s253
      %p262 = scmp.eq.s32.totalorder %s30, 1
      %p263 = por %p261, %p262
      %p264 = scmp.ne.s32.totalorder %s253, %s254
      %p265 = scmp.eq.s32.totalorder %s30, 0
      %p266 = por %p264, %p265
      %p267 = scmp.ne.s32.totalorder %s253, %s254
      %p268 = scmp.eq.s32.totalorder %s31, 1
      %p269 = por %p267, %p268
      %p271 = scmp.ne.s32.totalorder %s254, %s270
      %p272 = scmp.eq.s32.totalorder %s31, 0
      %p273 = por %p271, %p272
      %p274 = scmp.le.s32.totalorder 1, %s25
      %p275 = scmp.lt.s32.totalorder %s25, 3
      %p276 = pnand %p274, %p275
      %p277 = pneg %p276
      // Predicated region
      $region9: #{tpu_custom_call.1} parent=5 // pred_check
        _
      $region10: #{tpu_custom_call.1} parent=5 // pred_check_branch
        %279 = sbr.rel (%p276) target = $region12
      $region11: #{tpu_custom_call.1} parent=5 // pred_region
        %s280 = ssub.s32 %s25, 1
        // Predicated region
        $region13: #{tpu_custom_call.1} parent=11 // pred_check
          %p281 = pneg %p72
        $region14: #{tpu_custom_call.1} parent=11 // pred_check_branch
          %283 = sbr.rel (%p281) target = $region16
        $region15: #{tpu_custom_call.1} parent=11 // pred_region
          _
        $region16: #{tpu_custom_call.1} parent=11 // pred_fallthru
          _
        // Predicated region
        $region17: #{tpu_custom_call.1} parent=11 // pred_check
          %p284 = pneg %p93
        $region18: #{tpu_custom_call.1} parent=11 // pred_check_branch
          %286 = sbr.rel (%p284) target = $region20
        $region19: #{tpu_custom_call.1} parent=11 // pred_region
          %s288 = ssub.s32 2816, 2816
          %289 = vsyncadd [#allocation6], %s288
          %s290 = sshll.u32 [#allocation5], 4
          %s291 = int_to_ptr.vmem [resolvable:$true] %s290
          %296 = dma.hbm_to_vmem [thread:$0]  %s2, 2816, %s291, [#allocation6], 256, 256, 16
        $region20: #{tpu_custom_call.1} parent=11 // pred_fallthru
          _
        // Predicated region
        $region21: #{tpu_custom_call.1} parent=11 // pred_check
          %p297 = pneg %p114
        $region22: #{tpu_custom_call.1} parent=11 // pred_check_branch
          %299 = sbr.rel (%p297) target = $region24
        $region23: #{tpu_custom_call.1} parent=11 // pred_region
          %s301 = ssub.s32 73728, 73728
          %302 = vsyncadd [#allocation6], %s301
          %s303 = sshll.u32 [#allocation7], 4
          %s304 = int_to_ptr.vmem [resolvable:$true] %s303
          %309 = dma.hbm_to_vmem [thread:$0]  %s3, 73728, %s304, [#allocation6], 256, 256, 16
        $region24: #{tpu_custom_call.1} parent=11 // pred_fallthru
          _
        // Predicated region
        $region25: #{tpu_custom_call.1} parent=11 // pred_check
          %p310 = pneg %p135
        $region26: #{tpu_custom_call.1} parent=11 // pred_check_branch
          %312 = sbr.rel (%p310) target = $region28
        $region27: #{tpu_custom_call.1} parent=11 // pred_region
          %s314 = ssub.s32 64, 64
          %315 = vsyncadd [#allocation9], %s314
          %s317 = sshll.u32 [#allocation8], 4
          %s318 = int_to_ptr.vmem [resolvable:$true] %s317
          %320 = dma.hbm_to_vmem [thread:$0]  %s4, 64, %s318, [#allocation9]
        $region28: #{tpu_custom_call.1} parent=11 // pred_fallthru
          _
        // Predicated region
        $region29: #{tpu_custom_call.1} parent=11 // pred_check
          %p321 = pneg %p156
        $region30: #{tpu_custom_call.1} parent=11 // pred_check_branch
          %323 = sbr.rel (%p321) target = $region32
        $region31: #{tpu_custom_call.1} parent=11 // pred_region
          %s325 = ssub.s32 64, 64
          %326 = vsyncadd [#allocation9], %s325
          %s328 = sshll.u32 [#allocation10], 4
          %s329 = int_to_ptr.vmem [resolvable:$true] %s328
          %331 = dma.hbm_to_vmem [thread:$0]  %s5, 64, %s329, [#allocation9]
        $region32: #{tpu_custom_call.1} parent=11 // pred_fallthru
          _
        // Predicated region
        $region33: #{tpu_custom_call.1} parent=11 // pred_check
          %p332 = pneg %p177
        $region34: #{tpu_custom_call.1} parent=11 // pred_check_branch
          %334 = sbr.rel (%p332) target = $region36
        $region35: #{tpu_custom_call.1} parent=11 // pred_region
          %s336 = ssub.s32 64, 64
          %337 = vsyncadd [#allocation12], %s336
          %s339 = sshll.u32 [#allocation11], 4
          %s340 = int_to_ptr.vmem [resolvable:$true] %s339
          %342 = dma.hbm_to_vmem [thread:$0]  %s6, 64, %s340, [#allocation12]
        $region36: #{tpu_custom_call.1} parent=11 // pred_fallthru
          _
        // Predicated region
        $region37: #{tpu_custom_call.1} parent=11 // pred_check
          %p343 = pneg %p198
        $region38: #{tpu_custom_call.1} parent=11 // pred_check_branch
          %345 = sbr.rel (%p343) target = $region40
        $region39: #{tpu_custom_call.1} parent=11 // pred_region
          _
        $region40: #{tpu_custom_call.1} parent=11 // pred_fallthru
          _
        // Predicated region
        $region41: #{tpu_custom_call.1} parent=11 // pred_check
          %p346 = pneg %p219
        $region42: #{tpu_custom_call.1} parent=11 // pred_check_branch
          %348 = sbr.rel (%p346) target = $region44
        $region43: #{tpu_custom_call.1} parent=11 // pred_region
          _
        $region44: #{tpu_custom_call.1} parent=11 // pred_fallthru
          _
        // Predicated region
        $region45: #{tpu_custom_call.1} parent=11 // pred_check
          %p349 = pneg %p240
        $region46: #{tpu_custom_call.1} parent=11 // pred_check_branch
          %351 = sbr.rel (%p349) target = $region48
        $region47: #{tpu_custom_call.1} parent=11 // pred_region
          _
        $region48: #{tpu_custom_call.1} parent=11 // pred_fallthru
          _
      $region12: #{tpu_custom_call.1} parent=5 // pred_fallthru
        _
      %p352 = scmp.lt.s32.totalorder %s25, 2
      // Predicated region
      $region49: #{tpu_custom_call.1} parent=5 // pred_check
        %p353 = pneg %p352
      $region50: #{tpu_custom_call.1} parent=5 // pred_check_branch
        %355 = sbr.rel (%p353) target = $region52
      $region51: #{tpu_custom_call.1} parent=5 // pred_region
        // Predicated region
        $region53: #{tpu_custom_call.1} parent=51 // pred_check
          %p356 = pneg %p45
        $region54: #{tpu_custom_call.1} parent=51 // pred_check_branch
          %358 = sbr.rel (%p356) target = $region56
        $region55: #{tpu_custom_call.1} parent=51 // pred_region
          %s359 = sand.u32 %s35, 1
          %s360 = scalar_lea.sflag [#allocation3], %s359
          %s361 = sand.u32 %s35, 1
          %s362 = smul.addr %s361, 8
          %s363 = scalar_lea.vmem [#allocation2], %s362
          %s365 = ssub.s32 128, 128
          %366 = vsyncadd %s360, %s365
          %s367 = smul.addr %s25, 2
          %s368 = smul.addr %s367, 64
          %s369 = scalar_lea.hbm %s0, %s368
          %s371 = sshll.u32 %s363, 4
          %s372 = int_to_ptr.vmem [resolvable:$true] %s371
          %374 = dma.hbm_to_vmem [thread:$0]  %s369, 128, %s372, %s360
        $region56: #{tpu_custom_call.1} parent=51 // pred_fallthru
          _
      $region52: #{tpu_custom_call.1} parent=5 // pred_fallthru
        _
      %p375 = scmp.le.s32.totalorder 1, %s25
      %p376 = scmp.lt.s32.totalorder %s25, 3
      %p377 = pnand %p375, %p376
      %p378 = pneg %p377
      // Predicated region
      $region57: #{tpu_custom_call.1} parent=5 // pred_check
        _
      $region58: #{tpu_custom_call.1} parent=5 // pred_check_branch
        %380 = sbr.rel (%p377) target = $region60
      $region59: #{tpu_custom_call.1} parent=5 // pred_region
        %s381 = ssub.s32 %s25, 1
        %s382 = sand.u32 %s38, 1
        %s383 = scalar_lea.sflag [#allocation3], %s382
        %s384 = sand.u32 %s38, 1
        %s385 = smul.addr %s384, 8
        %s386 = scalar_lea.vmem [#allocation2], %s385
        // Predicated region
        $region61: #{tpu_custom_call.1} parent=59 // pred_check
          %p387 = pneg %p51
        $region62: #{tpu_custom_call.1} parent=59 // pred_check_branch
          %389 = sbr.rel (%p387) target = $region64
        $region63: #{tpu_custom_call.1} parent=59 // pred_region
          %390 = dma.done %s383, 128
        $region64: #{tpu_custom_call.1} parent=59 // pred_fallthru
          _
        // Predicated region
        $region65: #{tpu_custom_call.1} parent=59 // pred_check
          %p391 = pneg %p93
        $region66: #{tpu_custom_call.1} parent=59 // pred_check_branch
          %393 = sbr.rel (%p391) target = $region68
        $region67: #{tpu_custom_call.1} parent=59 // pred_region
          %394 = dma.done [#allocation6], 2816
        $region68: #{tpu_custom_call.1} parent=59 // pred_fallthru
          _
        // Predicated region
        $region69: #{tpu_custom_call.1} parent=59 // pred_check
          %p395 = pneg %p114
        $region70: #{tpu_custom_call.1} parent=59 // pred_check_branch
          %397 = sbr.rel (%p395) target = $region72
        $region71: #{tpu_custom_call.1} parent=59 // pred_region
          %398 = dma.done [#allocation6], 73728
        $region72: #{tpu_custom_call.1} parent=59 // pred_fallthru
          _
        // Predicated region
        $region73: #{tpu_custom_call.1} parent=59 // pred_check
          %p399 = pneg %p135
        $region74: #{tpu_custom_call.1} parent=59 // pred_check_branch
          %401 = sbr.rel (%p399) target = $region76
        $region75: #{tpu_custom_call.1} parent=59 // pred_region
          %402 = dma.done [#allocation9], 64
        $region76: #{tpu_custom_call.1} parent=59 // pred_fallthru
          _
        // Predicated region
        $region77: #{tpu_custom_call.1} parent=59 // pred_check
          %p403 = pneg %p156
        $region78: #{tpu_custom_call.1} parent=59 // pred_check_branch
          %405 = sbr.rel (%p403) target = $region80
        $region79: #{tpu_custom_call.1} parent=59 // pred_region
          %406 = dma.done [#allocation9], 64
        $region80: #{tpu_custom_call.1} parent=59 // pred_fallthru
          _
        // Predicated region
        $region81: #{tpu_custom_call.1} parent=59 // pred_check
          %p407 = pneg %p177
        $region82: #{tpu_custom_call.1} parent=59 // pred_check_branch
          %409 = sbr.rel (%p407) target = $region84
        $region83: #{tpu_custom_call.1} parent=59 // pred_region
          %410 = dma.done [#allocation12], 64
        $region84: #{tpu_custom_call.1} parent=59 // pred_fallthru
          _
        %s411 = sand.u32 %s38, 1
        %s412 = scalar_lea.sflag [#allocation3], %s411
        %s413 = sand.u32 %s38, 1
        %s414 = smul.addr %s413, 8
        %s415 = scalar_lea.vmem [#allocation2], %s414
        %p416 = pneg %p51
        %p417 = pneg %p48
        %p418 = pneg %p72
        %p419 = pneg %p69
        %p420 = pneg %p93
        %p421 = pneg %p90
        %p422 = pneg %p114
        %p423 = pneg %p111
        %p424 = pneg %p135
        %p425 = pneg %p132
        %p426 = pneg %p156
        %p427 = pneg %p153
        %p428 = pneg %p177
        %p429 = pneg %p174
        %p430 = pneg %p198
        %p431 = pneg %p195
        %p432 = pneg %p219
        %p433 = pneg %p216
        %p434 = pneg %p240
        %p435 = pneg %p237
        %p436 = pneg %p266
        %p437 = pneg %p263
        %s438 = sand.u32 %s253, 1
        %s439 = scalar_lea.sflag [#allocation4], %s438
        %s440 = sand.u32 %s253, 1
        %s441 = smul.addr %s440, 8
        %s442 = scalar_lea.vmem [#allocation13], %s441
        %v443 = vld [vmem:[%s386] sm:$0xff]
        %v444 = vld [vmem:[%s1] sm:$0xff]
        %v445 = vld [vmem:[%s1 + $0x8] sm:$0xff]
        %v446 = vld [vmem:[%s1 + $0x10] sm:$0xff]
        %v447 = vld [vmem:[%s1 + $0x18] sm:$0xff]
        %v448 = vld [vmem:[%s1 + $0x20] sm:$0xff]
        %v449 = vld [vmem:[%s1 + $0x28] sm:$0xff]
        %v450 = vld [vmem:[%s1 + $0x30] sm:$0xff]
        %v451 = vld [vmem:[%s1 + $0x38] sm:$0xff]
        %v452 = vld [vmem:[%s1 + $0x40] sm:$0xff]
        %v453 = vld [vmem:[%s1 + $0x48] sm:$0xff]
        %v454 = vld [vmem:[%s1 + $0x50] sm:$0xff]
        %v455 = vld [vmem:[%s1 + $0x58] sm:$0xff]
        %v456 = vld [vmem:[%s1 + $0x60] sm:$0xff]
        %v457 = vld [vmem:[%s1 + $0x68] sm:$0xff]
        %v458 = vld [vmem:[%s1 + $0x70] sm:$0xff]
        %v459 = vld [vmem:[%s1 + $0x78] sm:$0xff]
        %v460 = vld [vmem:[%s1 + $0x80] sm:$0xff]
        %v461 = vld [vmem:[%s1 + $0x88] sm:$0xff]
        %v462 = vld [vmem:[%s1 + $0x90] sm:$0xff]
        %v463 = vld [vmem:[%s1 + $0x98] sm:$0xff]
        %v464 = vld [vmem:[%s1 + $0xa0] sm:$0xff]
        %v465 = vld [vmem:[%s1 + $0xa8] sm:$0xff]
        %v466 = vld [vmem:[%s1 + $0xb0] sm:$0xff]
        %v467 = vld [vmem:[%s1 + $0xb8] sm:$0xff]
        %v468 = vld [vmem:[%s1 + $0xc0] sm:$0xff]
        %v469 = vld [vmem:[%s1 + $0xc8] sm:$0xff]
        %v470 = vld [vmem:[%s1 + $0xd0] sm:$0xff]
        %v471 = vld [vmem:[%s1 + $0xd8] sm:$0xff]
        %v472 = vld [vmem:[%s1 + $0xe0] sm:$0xff]
        %v473 = vld [vmem:[%s1 + $0xe8] sm:$0xff]
        %v474 = vld [vmem:[%s1 + $0xf0] sm:$0xff]
        %v475 = vld [vmem:[%s1 + $0xf8] sm:$0xff]
        %v477 = vcombine.high %v443, %v443
        %479 = vmatprep.subr.mxu0 0.0
        %480 = vmatpush1.msra.mxu0 %v444
        %481 = vmatprep.subr.mxu0 0.0
        %482 = vmatpush1.msra.mxu0 %v445
        %483 = vmatprep.subr.mxu0 0.0
        %484 = vmatpush1.msra.mxu0 %v446
        %485 = vmatprep.subr.mxu0 0.0
        %486 = vmatpush1.msra.mxu0 %v447
        %487 = vmatprep.subr.mxu0 0.0
        %488 = vmatpush1.msra.mxu0 %v448
        %489 = vmatprep.subr.mxu0 0.0
        %490 = vmatpush1.msra.mxu0 %v449
        %491 = vmatprep.subr.mxu0 0.0
        %492 = vmatpush1.msra.mxu0 %v450
        %493 = vmatprep.subr.mxu0 0.0
        %494 = vmatpush1.msra.mxu0 %v451
        %495 = vmatprep.subr.mxu0 0.0
        %496 = vmatpush1.msra.mxu0 %v452
        %497 = vmatprep.subr.mxu0 0.0
        %498 = vmatpush1.msra.mxu0 %v453
        %499 = vmatprep.subr.mxu0 0.0
        %500 = vmatpush1.msra.mxu0 %v454
        %501 = vmatprep.subr.mxu0 0.0
        %502 = vmatpush1.msra.mxu0 %v455
        %503 = vmatprep.subr.mxu0 0.0
        %504 = vmatpush1.msra.mxu0 %v456
        %505 = vmatprep.subr.mxu0 0.0
        %506 = vmatpush1.msra.mxu0 %v457
        %507 = vmatprep.subr.mxu0 0.0
        %508 = vmatpush1.msra.mxu0 %v458
        %509 = vmatprep.subr.mxu0 0.0
        %510 = vmatpush1.msra.mxu0 %v459
        %511 = vmatprep.subr.mxu0 0.0
        %512 = vmatpush1.msra.mxu0 %v460
        %513 = vmatprep.subr.mxu0 0.0
        %514 = vmatpush1.msra.mxu0 %v461
        %515 = vmatprep.subr.mxu0 0.0
        %516 = vmatpush1.msra.mxu0 %v462
        %517 = vmatprep.subr.mxu0 0.0
        %518 = vmatpush1.msra.mxu0 %v463
        %519 = vmatprep.subr.mxu0 0.0
        %520 = vmatpush1.msra.mxu0 %v464
        %521 = vmatprep.subr.mxu0 0.0
        %522 = vmatpush1.msra.mxu0 %v465
        %523 = vmatprep.subr.mxu0 0.0
        %524 = vmatpush1.msra.mxu0 %v466
        %525 = vmatprep.subr.mxu0 0.0
        %526 = vmatpush1.msra.mxu0 %v467
        %527 = vmatprep.subr.mxu0 0.0
        %528 = vmatpush1.msra.mxu0 %v468
        %529 = vmatprep.subr.mxu0 0.0
        %530 = vmatpush1.msra.mxu0 %v469
        %531 = vmatprep.subr.mxu0 0.0
        %532 = vmatpush1.msra.mxu0 %v470
        %533 = vmatprep.subr.mxu0 0.0
        %534 = vmatpush1.msra.mxu0 %v471
        %535 = vmatprep.subr.mxu0 0.0
        %536 = vmatpush1.msra.mxu0 %v472
        %537 = vmatprep.subr.mxu0 0.0
        %538 = vmatpush1.msra.mxu0 %v473
        %539 = vmatprep.subr.mxu0 0.0
        %540 = vmatpush1.msra.mxu0 %v474
        %541 = vmatprep.subr.mxu0 0.0
        %542 = vmatpush1.msra.mxu0 %v475
        %543 = vmatprep.mubr.f32.mxu0 %v477
        %544 = vmatmul.mubr.f32.gmra.mrb[0].mxu0 %v443
        %v545 = vpop.f32.mrb[0].mxu0
        %v546 = vadd.f32 0.0, %v545
        %v547 = vpop.f32.mrb[0].mxu0
        %548 = vdwg.mxu0
        %v549 = vld [vmem:[#allocation8] sm:$0xf]
        %vm550 = vcmask 31744
        %v552 = vsel %vm550, %v549, 0
        %vm554 = vcmask 1043456
        %v556 = vsel %vm554, %v546, 0
        %558 = vmatprep.subr.mxu0 0.0
        %559 = vmatpush1.msra.mxu0 %v556
        %560 = vmatprep.subr.mxu0 0.0
        %561 = vmatpush1.msra.mxu0 0.0
        %562 = vmatprep.subr.mxu0 0.0
        %563 = vmatpush1.msra.mxu0 0.0
        %564 = vmatprep.subr.mxu0 0.0
        %565 = vmatpush1.msra.mxu0 0.0
        %566 = vmatprep.subr.mxu0 0.0
        %567 = vmatpush1.msra.mxu0 0.0
        %568 = vmatprep.subr.mxu0 0.0
        %569 = vmatpush1.msra.mxu0 0.0
        %570 = vmatprep.subr.mxu0 0.0
        %571 = vmatpush1.msra.mxu0 0.0
        %572 = vmatprep.subr.mxu0 0.0
        %573 = vmatpush1.msra.mxu0 0.0
        %574 = vmatprep.subr.mxu0 0.0
        %575 = vmatpush1.msra.mxu0 0.0
        %576 = vmatprep.subr.mxu0 0.0
        %577 = vmatpush1.msra.mxu0 0.0
        %578 = vmatprep.subr.mxu0 0.0
        %579 = vmatpush1.msra.mxu0 0.0
        %580 = vmatprep.subr.mxu0 0.0
        %581 = vmatpush1.msra.mxu0 0.0
        %582 = vmatprep.subr.mxu0 0.0
        %583 = vmatpush1.msra.mxu0 0.0
        %584 = vmatprep.subr.mxu0 0.0
        %585 = vmatpush1.msra.mxu0 0.0
        %586 = vmatprep.subr.mxu0 0.0
        %587 = vmatpush1.msra.mxu0 0.0
        %588 = vmatprep.subr.mxu0 0.0
        %589 = vmatpush1.msra.mxu0 0.0
        %590 = vmatprep.subr.mxu0 0.0
        %591 = vmatpush1.msra.mxu0 0.0
        %592 = vmatprep.subr.mxu0 0.0
        %593 = vmatpush1.msra.mxu0 0.0
        %594 = vmatprep.subr.mxu0 0.0
        %595 = vmatpush1.msra.mxu0 0.0
        %596 = vmatprep.subr.mxu0 0.0
        %597 = vmatpush1.msra.mxu0 0.0
        %598 = vmatprep.subr.mxu0 0.0
        %599 = vmatpush1.msra.mxu0 0.0
        %600 = vmatprep.subr.mxu0 0.0
        %601 = vmatpush1.msra.mxu0 0.0
        %602 = vmatprep.subr.mxu0 0.0
        %603 = vmatpush1.msra.mxu0 0.0
        %604 = vmatprep.subr.mxu0 0.0
        %605 = vmatpush1.msra.mxu0 0.0
        %606 = vmatprep.subr.mxu0 0.0
        %607 = vmatpush1.msra.mxu0 0.0
        %608 = vmatprep.subr.mxu0 0.0
        %609 = vmatpush1.msra.mxu0 0.0
        %610 = vmatprep.subr.mxu0 0.0
        %611 = vmatpush1.msra.mxu0 0.0
        %612 = vmatprep.subr.mxu0 0.0
        %613 = vmatpush1.msra.mxu0 0.0
        %614 = vmatprep.subr.mxu0 0.0
        %615 = vmatpush1.msra.mxu0 0.0
        %616 = vmatprep.subr.mxu0 0.0
        %617 = vmatpush1.msra.mxu0 0.0
        %618 = vmatprep.subr.mxu0 0.0
        %619 = vmatpush1.msra.mxu0 0.0
        %620 = vmatprep.subr.mxu0 0.0
        %621 = vmatpush1.msra.mxu0 0.0
        %622 = vmatprep.mubr.f32.mxu0 0.0
        %623 = vmatmul.mubr.f32.gmra.mrb[0].mxu0 %v552
        %v624 = vpop.f32.mrb[0].mxu0
        %v625 = vadd.f32 0.0, %v624
        %v626 = vpop.f32.mrb[0].mxu0
        %627 = vdwg.mxu0
        %v628 = vmax.f32 %v625, 0.0
        %v629 = vld [vmem:[#allocation10] sm:$0xf]
        %v631 = vsel %vm550, %v629, 0
        %v634 = vsel %vm554, %v628, 0
        %636 = vmatprep.subr.mxu0 0.0
        %637 = vmatpush1.msra.mxu0 %v634
        %638 = vmatprep.subr.mxu0 0.0
        %639 = vmatpush1.msra.mxu0 0.0
        %640 = vmatprep.subr.mxu0 0.0
        %641 = vmatpush1.msra.mxu0 0.0
        %642 = vmatprep.subr.mxu0 0.0
        %643 = vmatpush1.msra.mxu0 0.0
        %644 = vmatprep.subr.mxu0 0.0
        %645 = vmatpush1.msra.mxu0 0.0
        %646 = vmatprep.subr.mxu0 0.0
        %647 = vmatpush1.msra.mxu0 0.0
        %648 = vmatprep.subr.mxu0 0.0
        %649 = vmatpush1.msra.mxu0 0.0
        %650 = vmatprep.subr.mxu0 0.0
        %651 = vmatpush1.msra.mxu0 0.0
        %652 = vmatprep.subr.mxu0 0.0
        %653 = vmatpush1.msra.mxu0 0.0
        %654 = vmatprep.subr.mxu0 0.0
        %655 = vmatpush1.msra.mxu0 0.0
        %656 = vmatprep.subr.mxu0 0.0
        %657 = vmatpush1.msra.mxu0 0.0
        %658 = vmatprep.subr.mxu0 0.0
        %659 = vmatpush1.msra.mxu0 0.0
        %660 = vmatprep.subr.mxu0 0.0
        %661 = vmatpush1.msra.mxu0 0.0
        %662 = vmatprep.subr.mxu0 0.0
        %663 = vmatpush1.msra.mxu0 0.0
        %664 = vmatprep.subr.mxu0 0.0
        %665 = vmatpush1.msra.mxu0 0.0
        %666 = vmatprep.subr.mxu0 0.0
        %667 = vmatpush1.msra.mxu0 0.0
        %668 = vmatprep.subr.mxu0 0.0
        %669 = vmatpush1.msra.mxu0 0.0
        %670 = vmatprep.subr.mxu0 0.0
        %671 = vmatpush1.msra.mxu0 0.0
        %672 = vmatprep.subr.mxu0 0.0
        %673 = vmatpush1.msra.mxu0 0.0
        %674 = vmatprep.subr.mxu0 0.0
        %675 = vmatpush1.msra.mxu0 0.0
        %676 = vmatprep.subr.mxu0 0.0
        %677 = vmatpush1.msra.mxu0 0.0
        %678 = vmatprep.subr.mxu0 0.0
        %679 = vmatpush1.msra.mxu0 0.0
        %680 = vmatprep.subr.mxu0 0.0
        %681 = vmatpush1.msra.mxu0 0.0
        %682 = vmatprep.subr.mxu0 0.0
        %683 = vmatpush1.msra.mxu0 0.0
        %684 = vmatprep.subr.mxu0 0.0
        %685 = vmatpush1.msra.mxu0 0.0
        %686 = vmatprep.subr.mxu0 0.0
        %687 = vmatpush1.msra.mxu0 0.0
        %688 = vmatprep.subr.mxu0 0.0
        %689 = vmatpush1.msra.mxu0 0.0
        %690 = vmatprep.subr.mxu0 0.0
        %691 = vmatpush1.msra.mxu0 0.0
        %692 = vmatprep.subr.mxu0 0.0
        %693 = vmatpush1.msra.mxu0 0.0
        %694 = vmatprep.subr.mxu0 0.0
        %695 = vmatpush1.msra.mxu0 0.0
        %696 = vmatprep.subr.mxu0 0.0
        %697 = vmatpush1.msra.mxu0 0.0
        %698 = vmatprep.subr.mxu0 0.0
        %699 = vmatpush1.msra.mxu0 0.0
        %700 = vmatprep.mubr.f32.mxu0 0.0
        %701 = vmatmul.mubr.f32.gmra.mrb[0].mxu0 %v631
        %v702 = vpop.f32.mrb[0].mxu0
        %v703 = vadd.f32 0.0, %v702
        %v704 = vpop.f32.mrb[0].mxu0
        %705 = vdwg.mxu0
        %v706 = vld [vmem:[#allocation5] sm:$0xff]
        %v707 = vld [vmem:[#allocation5 + $0x8] sm:$0xff]
        %v708 = vld [vmem:[#allocation5 + $0x10] sm:$0xff]
        %v709 = vld [vmem:[#allocation5 + $0x18] sm:$0xff]
        %v710 = vld [vmem:[#allocation5 + $0x20] sm:$0xff]
        %v711 = vld [vmem:[#allocation5 + $0x28] sm:$0xff]
        %v712 = vld [vmem:[#allocation5 + $0x30] sm:$0xff]
        %v713 = vld [vmem:[#allocation5 + $0x38] sm:$0xff]
        %v714 = vld [vmem:[#allocation5 + $0x40] sm:$0xff]
        %v715 = vld [vmem:[#allocation5 + $0x48] sm:$0xff]
        %v716 = vld [vmem:[#allocation5 + $0x50] sm:$0xff]
        %v717 = vld [vmem:[#allocation5 + $0x58] sm:$0xff]
        %v718 = vld [vmem:[#allocation5 + $0x60] sm:$0xff]
        %v719 = vld [vmem:[#allocation5 + $0x68] sm:$0xff]
        %v720 = vld [vmem:[#allocation5 + $0x70] sm:$0xff]
        %v721 = vld [vmem:[#allocation5 + $0x78] sm:$0xff]
        %v722 = vld [vmem:[#allocation5 + $0x80] sm:$0xff]
        %v723 = vld [vmem:[#allocation5 + $0x88] sm:$0xff]
        %v724 = vld [vmem:[#allocation5 + $0x90] sm:$0xff]
        %v725 = vld [vmem:[#allocation5 + $0x98] sm:$0xff]
        %v726 = vld [vmem:[#allocation5 + $0xa0] sm:$0x1]
        %v727 = vld [vmem:[#allocation5 + $0xa8] sm:$0x1]
        %vm728 = vcmask 662528
        %v730 = vsel %vm728, %v703, 0
        %vm732 = vcmask 1040384
        %v734 = vsel %vm732, %v726, 0
        %v737 = vsel %vm732, %v727, 0
        %739 = vmatprep.subr.mxu0 %v707
        %740 = vmatpush1.msra.mxu0 %v706
        %741 = vmatprep.subr.mxu0 %v709
        %742 = vmatpush1.msra.mxu0 %v708
        %743 = vmatprep.subr.mxu0 %v711
        %744 = vmatpush1.msra.mxu0 %v710
        %745 = vmatprep.subr.mxu0 %v713
        %746 = vmatpush1.msra.mxu0 %v712
        %747 = vmatprep.subr.mxu0 %v715
        %748 = vmatpush1.msra.mxu0 %v714
        %749 = vmatprep.subr.mxu0 %v717
        %750 = vmatpush1.msra.mxu0 %v716
        %751 = vmatprep.subr.mxu0 %v719
        %752 = vmatpush1.msra.mxu0 %v718
        %753 = vmatprep.subr.mxu0 %v721
        %754 = vmatpush1.msra.mxu0 %v720
        %755 = vmatprep.subr.mxu0 %v723
        %756 = vmatpush1.msra.mxu0 %v722
        %757 = vmatprep.subr.mxu0 %v725
        %758 = vmatpush1.msra.mxu0 %v724
        %759 = vmatprep.subr.mxu0 %v737
        %760 = vmatpush1.msra.mxu0 %v734
        %761 = vmatprep.subr.mxu0 0.0
        %762 = vmatpush1.msra.mxu0 0.0
        %763 = vmatprep.subr.mxu0 0.0
        %764 = vmatpush1.msra.mxu0 0.0
        %765 = vmatprep.subr.mxu0 0.0
        %766 = vmatpush1.msra.mxu0 0.0
        %767 = vmatprep.subr.mxu0 0.0
        %768 = vmatpush1.msra.mxu0 0.0
        %769 = vmatprep.subr.mxu0 0.0
        %770 = vmatpush1.msra.mxu0 0.0
        %771 = vmatprep.subr.mxu0 0.0
        %772 = vmatpush1.msra.mxu0 0.0
        %773 = vmatprep.subr.mxu0 0.0
        %774 = vmatpush1.msra.mxu0 0.0
        %775 = vmatprep.subr.mxu0 0.0
        %776 = vmatpush1.msra.mxu0 0.0
        %777 = vmatprep.subr.mxu0 0.0
        %778 = vmatpush1.msra.mxu0 0.0
        %779 = vmatprep.subr.mxu0 0.0
        %780 = vmatpush1.msra.mxu0 0.0
        %781 = vmatprep.subr.mxu0 0.0
        %782 = vmatpush1.msra.mxu0 0.0
        %783 = vmatprep.subr.mxu0 0.0
        %784 = vmatpush1.msra.mxu0 0.0
        %785 = vmatprep.subr.mxu0 0.0
        %786 = vmatpush1.msra.mxu0 0.0
        %787 = vmatprep.subr.mxu0 0.0
        %788 = vmatpush1.msra.mxu0 0.0
        %789 = vmatprep.subr.mxu0 0.0
        %790 = vmatpush1.msra.mxu0 0.0
        %791 = vmatprep.subr.mxu0 0.0
        %792 = vmatpush1.msra.mxu0 0.0
        %793 = vmatprep.subr.mxu0 0.0
        %794 = vmatpush1.msra.mxu0 0.0
        %795 = vmatprep.subr.mxu0 0.0
        %796 = vmatpush1.msra.mxu0 0.0
        %797 = vmatprep.subr.mxu0 0.0
        %798 = vmatpush1.msra.mxu0 0.0
        %799 = vmatprep.subr.mxu0 0.0
        %800 = vmatpush1.msra.mxu0 0.0
        %801 = vmatprep.subr.mxu0 0.0
        %802 = vmatpush1.msra.mxu0 0.0
        %803 = vmatprep.mubr.f32.mxu0 0.0
        %804 = vmatmul.mubr.f32.gmra.mrb[0].mxu0 %v730
        %v805 = vpop.f32.mrb[0].mxu0
        %v806 = vadd.f32 0.0, %v805
        %v807 = vpop.f32.mrb[0].mxu0
        %v808 = vadd.f32 0.0, %v807
        %809 = vdwg.mxu0
        %v810 = vsub.f32 0.0, %v806
        %v811 = vsub.f32 0.0, %v808
        %v812 = vmul.f32 %v810, 1.442695
        %v813 = vpow.pop %v812
        %v814 = vmul.f32 %v811, 1.442695
        %v815 = vpow.pop %v814
        %v816 = vadd.f32 %v813, 1.0
        %v817 = vadd.f32 %v815, 1.0
        %v818 = vrcp.pop %v816
        %v819 = vmul.f32 1.0, %v818
        %v820 = vrcp.pop %v817
        %v821 = vmul.f32 1.0, %v820
        %v824 = vcombine.low %v819, %v821
        %v826 = vmul.f32 %v443, %v824
        %v827 = vld [vmem:[#allocation11] sm:$0xf]
        %v828 = vld [vmem:[%s7] sm:$0xf]
        %830 = vset.pattern.permute.xlu0 0
        %831 = vperm.xlu0 %830, %v828
        %v832 = vpop.permute.xlu0 %831
        %v835 = vcombine.high %v826, %v826
        %v837 = vsel %vm550, %v827, 0
        %v839 = vsel %vm554, %v826, 0
        %v841 = vsel %vm554, %v835, 0
        %843 = vmatprep.subr.mxu0 %v841
        %844 = vmatpush1.msra.mxu0 %v839
        %845 = vmatprep.subr.mxu0 0.0
        %846 = vmatpush1.msra.mxu0 0.0
        %847 = vmatprep.subr.mxu0 0.0
        %848 = vmatpush1.msra.mxu0 0.0
        %849 = vmatprep.subr.mxu0 0.0
        %850 = vmatpush1.msra.mxu0 0.0
        %851 = vmatprep.subr.mxu0 0.0
        %852 = vmatpush1.msra.mxu0 0.0
        %853 = vmatprep.subr.mxu0 0.0
        %854 = vmatpush1.msra.mxu0 0.0
        %855 = vmatprep.subr.mxu0 0.0
        %856 = vmatpush1.msra.mxu0 0.0
        %857 = vmatprep.subr.mxu0 0.0
        %858 = vmatpush1.msra.mxu0 0.0
        %859 = vmatprep.subr.mxu0 0.0
        %860 = vmatpush1.msra.mxu0 0.0
        %861 = vmatprep.subr.mxu0 0.0
        %862 = vmatpush1.msra.mxu0 0.0
        %863 = vmatprep.subr.mxu0 0.0
        %864 = vmatpush1.msra.mxu0 0.0
        %865 = vmatprep.subr.mxu0 0.0
        %866 = vmatpush1.msra.mxu0 0.0
        %867 = vmatprep.subr.mxu0 0.0
        %868 = vmatpush1.msra.mxu0 0.0
        %869 = vmatprep.subr.mxu0 0.0
        %870 = vmatpush1.msra.mxu0 0.0
        %871 = vmatprep.subr.mxu0 0.0
        %872 = vmatpush1.msra.mxu0 0.0
        %873 = vmatprep.subr.mxu0 0.0
        %874 = vmatpush1.msra.mxu0 0.0
        %875 = vmatprep.subr.mxu0 0.0
        %876 = vmatpush1.msra.mxu0 0.0
        %877 = vmatprep.subr.mxu0 0.0
        %878 = vmatpush1.msra.mxu0 0.0
        %879 = vmatprep.subr.mxu0 0.0
        %880 = vmatpush1.msra.mxu0 0.0
        %881 = vmatprep.subr.mxu0 0.0
        %882 = vmatpush1.msra.mxu0 0.0
        %883 = vmatprep.subr.mxu0 0.0
        %884 = vmatpush1.msra.mxu0 0.0
        %885 = vmatprep.subr.mxu0 0.0
        %886 = vmatpush1.msra.mxu0 0.0
        %887 = vmatprep.subr.mxu0 0.0
        %888 = vmatpush1.msra.mxu0 0.0
        %889 = vmatprep.subr.mxu0 0.0
        %890 = vmatpush1.msra.mxu0 0.0
        %891 = vmatprep.subr.mxu0 0.0
        %892 = vmatpush1.msra.mxu0 0.0
        %893 = vmatprep.subr.mxu0 0.0
        %894 = vmatpush1.msra.mxu0 0.0
        %895 = vmatprep.subr.mxu0 0.0
        %896 = vmatpush1.msra.mxu0 0.0
        %897 = vmatprep.subr.mxu0 0.0
        %898 = vmatpush1.msra.mxu0 0.0
        %899 = vmatprep.subr.mxu0 0.0
        %900 = vmatpush1.msra.mxu0 0.0
        %901 = vmatprep.subr.mxu0 0.0
        %902 = vmatpush1.msra.mxu0 0.0
        %903 = vmatprep.subr.mxu0 0.0
        %904 = vmatpush1.msra.mxu0 0.0
        %905 = vmatprep.subr.mxu0 0.0
        %906 = vmatpush1.msra.mxu0 0.0
        %907 = vmatprep.mubr.f32.mxu0 0.0
        %908 = vmatmul.mubr.f32.gmra.mrb[0].mxu0 %v837
        %v909 = vpop.f32.mrb[0].mxu0
        %v910 = vadd.f32 %v832, %v909
        %v911 = vpop.f32.mrb[0].mxu0
        %v912 = vadd.f32 %v832, %v911
        %913 = vdwg.mxu0
        %v914 = vsub.f32 0.0, %v910
        %v915 = vsub.f32 0.0, %v912
        %v916 = vmul.f32 %v914, 1.442695
        %v917 = vpow.pop %v916
        %v918 = vmul.f32 %v915, 1.442695
        %v919 = vpow.pop %v918
        %v920 = vadd.f32 %v917, 1.0
        %v921 = vadd.f32 %v919, 1.0
        %v922 = vrcp.pop %v920
        %v923 = vmul.f32 1.0, %v922
        %v924 = vrcp.pop %v921
        %v925 = vmul.f32 1.0, %v924
        %v926 = vld [vmem:[%s8] sm:$0xf]
        %v927 = vld [vmem:[#allocation7] sm:$0xff]
        %v928 = vld [vmem:[#allocation7 + $0x8] sm:$0xff]
        %v929 = vld [vmem:[#allocation7 + $0x10] sm:$0xff]
        %v930 = vld [vmem:[#allocation7 + $0x18] sm:$0xff]
        %v931 = vld [vmem:[#allocation7 + $0x20] sm:$0xff]
        %v932 = vld [vmem:[#allocation7 + $0x28] sm:$0xff]
        %v933 = vld [vmem:[#allocation7 + $0x30] sm:$0xff]
        %v934 = vld [vmem:[#allocation7 + $0x38] sm:$0xff]
        %v935 = vld [vmem:[#allocation7 + $0x40] sm:$0xff]
        %v936 = vld [vmem:[#allocation7 + $0x48] sm:$0xff]
        %v937 = vld [vmem:[#allocation7 + $0x50] sm:$0xff]
        %v938 = vld [vmem:[#allocation7 + $0x58] sm:$0xff]
        %v939 = vld [vmem:[#allocation7 + $0x60] sm:$0xff]
        %v940 = vld [vmem:[#allocation7 + $0x68] sm:$0xff]
        %v941 = vld [vmem:[#allocation7 + $0x70] sm:$0xff]
        %v942 = vld [vmem:[#allocation7 + $0x78] sm:$0xff]
        %v943 = vld [vmem:[#allocation7 + $0x80] sm:$0xff]
        %v944 = vld [vmem:[#allocation7 + $0x88] sm:$0xff]
        %v945 = vld [vmem:[#allocation7 + $0x90] sm:$0xff]
        %v946 = vld [vmem:[#allocation7 + $0x98] sm:$0xff]
        %v947 = vld [vmem:[#allocation7 + $0xa0] sm:$0xff]
        %v948 = vld [vmem:[#allocation7 + $0xa8] sm:$0xff]
        %v949 = vld [vmem:[#allocation7 + $0xb0] sm:$0xff]
        %v950 = vld [vmem:[#allocation7 + $0xb8] sm:$0xff]
        %v951 = vld [vmem:[#allocation7 + $0xc0] sm:$0xff]
        %v952 = vld [vmem:[#allocation7 + $0xc8] sm:$0xff]
        %v953 = vld [vmem:[#allocation7 + $0xd0] sm:$0xff]
        %v954 = vld [vmem:[#allocation7 + $0xd8] sm:$0xff]
        %v955 = vld [vmem:[#allocation7 + $0xe0] sm:$0xff]
        %v956 = vld [vmem:[#allocation7 + $0xe8] sm:$0xff]
        %v957 = vld [vmem:[#allocation7 + $0xf0] sm:$0xff]
        %v958 = vld [vmem:[#allocation7 + $0xf8] sm:$0xff]
        %v959 = vld [vmem:[#allocation7 + $0x100] sm:$0xff]
        %v960 = vld [vmem:[#allocation7 + $0x108] sm:$0xff]
        %v961 = vld [vmem:[#allocation7 + $0x110] sm:$0xff]
        %v962 = vld [vmem:[#allocation7 + $0x118] sm:$0xff]
        %v963 = vld [vmem:[#allocation7 + $0x120] sm:$0xff]
        %v964 = vld [vmem:[#allocation7 + $0x128] sm:$0xff]
        %v965 = vld [vmem:[#allocation7 + $0x130] sm:$0xff]
        %v966 = vld [vmem:[#allocation7 + $0x138] sm:$0xff]
        %v967 = vld [vmem:[#allocation7 + $0x140] sm:$0xff]
        %v968 = vld [vmem:[#allocation7 + $0x148] sm:$0xff]
        %v969 = vld [vmem:[#allocation7 + $0x150] sm:$0xff]
        %v970 = vld [vmem:[#allocation7 + $0x158] sm:$0xff]
        %v971 = vld [vmem:[#allocation7 + $0x160] sm:$0xff]
        %v972 = vld [vmem:[#allocation7 + $0x168] sm:$0xff]
        %v973 = vld [vmem:[#allocation7 + $0x170] sm:$0xff]
        %v974 = vld [vmem:[#allocation7 + $0x178] sm:$0xff]
        %v975 = vld [vmem:[#allocation7 + $0x180] sm:$0xff]
        %v976 = vld [vmem:[#allocation7 + $0x188] sm:$0xff]
        %v977 = vld [vmem:[#allocation7 + $0x190] sm:$0xff]
        %v978 = vld [vmem:[#allocation7 + $0x198] sm:$0xff]
        %v979 = vld [vmem:[#allocation7 + $0x1a0] sm:$0xff]
        %v980 = vld [vmem:[#allocation7 + $0x1a8] sm:$0xff]
        %v981 = vld [vmem:[#allocation7 + $0x1b0] sm:$0xff]
        %v982 = vld [vmem:[#allocation7 + $0x1b8] sm:$0xff]
        %v983 = vld [vmem:[#allocation7 + $0x1c0] sm:$0xff]
        %v984 = vld [vmem:[#allocation7 + $0x1c8] sm:$0xff]
        %v985 = vld [vmem:[#allocation7 + $0x1d0] sm:$0xff]
        %v986 = vld [vmem:[#allocation7 + $0x1d8] sm:$0xff]
        %v987 = vld [vmem:[#allocation7 + $0x1e0] sm:$0xff]
        %v988 = vld [vmem:[#allocation7 + $0x1e8] sm:$0xff]
        %v989 = vld [vmem:[#allocation7 + $0x1f0] sm:$0xff]
        %v990 = vld [vmem:[#allocation7 + $0x1f8] sm:$0xff]
        %991 = vmatprep.subr.mxu0 %v928
        %992 = vmatpush1.msra.mxu0 %v927
        %993 = vmatprep.subr.mxu0 %v930
        %994 = vmatpush1.msra.mxu0 %v929
        %995 = vmatprep.subr.mxu0 %v932
        %996 = vmatpush1.msra.mxu0 %v931
        %997 = vmatprep.subr.mxu0 %v934
        %998 = vmatpush1.msra.mxu0 %v933
        %999 = vmatprep.subr.mxu0 %v936
        %1000 = vmatpush1.msra.mxu0 %v935
        %1001 = vmatprep.subr.mxu0 %v938
        %1002 = vmatpush1.msra.mxu0 %v937
        %1003 = vmatprep.subr.mxu0 %v940
        %1004 = vmatpush1.msra.mxu0 %v939
        %1005 = vmatprep.subr.mxu0 %v942
        %1006 = vmatpush1.msra.mxu0 %v941
        %1007 = vmatprep.subr.mxu0 %v944
        %1008 = vmatpush1.msra.mxu0 %v943
        %1009 = vmatprep.subr.mxu0 %v946
        %1010 = vmatpush1.msra.mxu0 %v945
        %1011 = vmatprep.subr.mxu0 %v948
        %1012 = vmatpush1.msra.mxu0 %v947
        %1013 = vmatprep.subr.mxu0 %v950
        %1014 = vmatpush1.msra.mxu0 %v949
        %1015 = vmatprep.subr.mxu0 %v952
        %1016 = vmatpush1.msra.mxu0 %v951
        %1017 = vmatprep.subr.mxu0 %v954
        %1018 = vmatpush1.msra.mxu0 %v953
        %1019 = vmatprep.subr.mxu0 %v956
        %1020 = vmatpush1.msra.mxu0 %v955
        %1021 = vmatprep.subr.mxu0 %v958
        %1022 = vmatpush1.msra.mxu0 %v957
        %1023 = vmatprep.subr.mxu0 %v960
        %1024 = vmatpush1.msra.mxu0 %v959
        %1025 = vmatprep.subr.mxu0 %v962
        %1026 = vmatpush1.msra.mxu0 %v961
        %1027 = vmatprep.subr.mxu0 %v964
        %1028 = vmatpush1.msra.mxu0 %v963
        %1029 = vmatprep.subr.mxu0 %v966
        %1030 = vmatpush1.msra.mxu0 %v965
        %1031 = vmatprep.subr.mxu0 %v968
        %1032 = vmatpush1.msra.mxu0 %v967
        %1033 = vmatprep.subr.mxu0 %v970
        %1034 = vmatpush1.msra.mxu0 %v969
        %1035 = vmatprep.subr.mxu0 %v972
        %1036 = vmatpush1.msra.mxu0 %v971
        %1037 = vmatprep.subr.mxu0 %v974
        %1038 = vmatpush1.msra.mxu0 %v973
        %1039 = vmatprep.subr.mxu0 %v976
        %1040 = vmatpush1.msra.mxu0 %v975
        %1041 = vmatprep.subr.mxu0 %v978
        %1042 = vmatpush1.msra.mxu0 %v977
        %1043 = vmatprep.subr.mxu0 %v980
        %1044 = vmatpush1.msra.mxu0 %v979
        %1045 = vmatprep.subr.mxu0 %v982
        %1046 = vmatpush1.msra.mxu0 %v981
        %1047 = vmatprep.subr.mxu0 %v984
        %1048 = vmatpush1.msra.mxu0 %v983
        %1049 = vmatprep.subr.mxu0 %v986
        %1050 = vmatpush1.msra.mxu0 %v985
        %1051 = vmatprep.subr.mxu0 %v988
        %1052 = vmatpush1.msra.mxu0 %v987
        %1053 = vmatprep.subr.mxu0 %v990
        %1054 = vmatpush1.msra.mxu0 %v989
        %1055 = vmatprep.mubr.f32.mxu0 %v477
        %1056 = vmatmul.mubr.f32.gmra.mrb[0].mxu0 %v443
        %v1057 = vpop.f32.mrb[0].mxu0
        %v1058 = vadd.f32 0.0, %v1057
        %v1059 = vpop.f32.mrb[0].mxu0
        %v1060 = vadd.f32 0.0, %v1059
        %1061 = vdwg.mxu0
        %s1062 = scalar_lea.vmem %s8, 4
        %v1063 = vld [vmem:[%s1062] sm:$0xf]
        %s1064 = scalar_lea.vmem [#allocation7], 512
        %v1065 = vld [vmem:[%s1064] sm:$0xff]
        %v1066 = vld [vmem:[%s1064 + $0x8] sm:$0xff]
        %v1067 = vld [vmem:[%s1064 + $0x10] sm:$0xff]
        %v1068 = vld [vmem:[%s1064 + $0x18] sm:$0xff]
        %v1069 = vld [vmem:[%s1064 + $0x20] sm:$0xff]
        %v1070 = vld [vmem:[%s1064 + $0x28] sm:$0xff]
        %v1071 = vld [vmem:[%s1064 + $0x30] sm:$0xff]
        %v1072 = vld [vmem:[%s1064 + $0x38] sm:$0xff]
        %v1073 = vld [vmem:[%s1064 + $0x40] sm:$0xff]
        %v1074 = vld [vmem:[%s1064 + $0x48] sm:$0xff]
        %v1075 = vld [vmem:[%s1064 + $0x50] sm:$0xff]
        %v1076 = vld [vmem:[%s1064 + $0x58] sm:$0xff]
        %v1077 = vld [vmem:[%s1064 + $0x60] sm:$0xff]
        %v1078 = vld [vmem:[%s1064 + $0x68] sm:$0xff]
        %v1079 = vld [vmem:[%s1064 + $0x70] sm:$0xff]
        %v1080 = vld [vmem:[%s1064 + $0x78] sm:$0xff]
        %v1081 = vld [vmem:[%s1064 + $0x80] sm:$0xff]
        %v1082 = vld [vmem:[%s1064 + $0x88] sm:$0xff]
        %v1083 = vld [vmem:[%s1064 + $0x90] sm:$0xff]
        %v1084 = vld [vmem:[%s1064 + $0x98] sm:$0xff]
        %v1085 = vld [vmem:[%s1064 + $0xa0] sm:$0xff]
        %v1086 = vld [vmem:[%s1064 + $0xa8] sm:$0xff]
        %v1087 = vld [vmem:[%s1064 + $0xb0] sm:$0xff]
        %v1088 = vld [vmem:[%s1064 + $0xb8] sm:$0xff]
        %v1089 = vld [vmem:[%s1064 + $0xc0] sm:$0xff]
        %v1090 = vld [vmem:[%s1064 + $0xc8] sm:$0xff]
        %v1091 = vld [vmem:[%s1064 + $0xd0] sm:$0xff]
        %v1092 = vld [vmem:[%s1064 + $0xd8] sm:$0xff]
        %v1093 = vld [vmem:[%s1064 + $0xe0] sm:$0xff]
        %v1094 = vld [vmem:[%s1064 + $0xe8] sm:$0xff]
        %v1095 = vld [vmem:[%s1064 + $0xf0] sm:$0xff]
        %v1096 = vld [vmem:[%s1064 + $0xf8] sm:$0xff]
        %v1097 = vld [vmem:[%s1064 + $0x100] sm:$0xff]
        %v1098 = vld [vmem:[%s1064 + $0x108] sm:$0xff]
        %v1099 = vld [vmem:[%s1064 + $0x110] sm:$0xff]
        %v1100 = vld [vmem:[%s1064 + $0x118] sm:$0xff]
        %v1101 = vld [vmem:[%s1064 + $0x120] sm:$0xff]
        %v1102 = vld [vmem:[%s1064 + $0x128] sm:$0xff]
        %v1103 = vld [vmem:[%s1064 + $0x130] sm:$0xff]
        %v1104 = vld [vmem:[%s1064 + $0x138] sm:$0xff]
        %v1105 = vld [vmem:[%s1064 + $0x140] sm:$0xff]
        %v1106 = vld [vmem:[%s1064 + $0x148] sm:$0xff]
        %v1107 = vld [vmem:[%s1064 + $0x150] sm:$0xff]
        %v1108 = vld [vmem:[%s1064 + $0x158] sm:$0xff]
        %v1109 = vld [vmem:[%s1064 + $0x160] sm:$0xff]
        %v1110 = vld [vmem:[%s1064 + $0x168] sm:$0xff]
        %v1111 = vld [vmem:[%s1064 + $0x170] sm:$0xff]
        %v1112 = vld [vmem:[%s1064 + $0x178] sm:$0xff]
        %v1113 = vld [vmem:[%s1064 + $0x180] sm:$0xff]
        %v1114 = vld [vmem:[%s1064 + $0x188] sm:$0xff]
        %v1115 = vld [vmem:[%s1064 + $0x190] sm:$0xff]
        %v1116 = vld [vmem:[%s1064 + $0x198] sm:$0xff]
        %v1117 = vld [vmem:[%s1064 + $0x1a0] sm:$0xff]
        %v1118 = vld [vmem:[%s1064 + $0x1a8] sm:$0xff]
        %v1119 = vld [vmem:[%s1064 + $0x1b0] sm:$0xff]
        %v1120 = vld [vmem:[%s1064 + $0x1b8] sm:$0xff]
        %v1121 = vld [vmem:[%s1064 + $0x1c0] sm:$0xff]
        %v1122 = vld [vmem:[%s1064 + $0x1c8] sm:$0xff]
        %v1123 = vld [vmem:[%s1064 + $0x1d0] sm:$0xff]
        %v1124 = vld [vmem:[%s1064 + $0x1d8] sm:$0xff]
        %v1125 = vld [vmem:[%s1064 + $0x1e0] sm:$0xff]
        %v1126 = vld [vmem:[%s1064 + $0x1e8] sm:$0xff]
        %v1127 = vld [vmem:[%s1064 + $0x1f0] sm:$0xff]
        %v1128 = vld [vmem:[%s1064 + $0x1f8] sm:$0xff]
        %1129 = vmatprep.subr.mxu0 %v1066
        %1130 = vmatpush1.msra.mxu0 %v1065
        %1131 = vmatprep.subr.mxu0 %v1068
        %1132 = vmatpush1.msra.mxu0 %v1067
        %1133 = vmatprep.subr.mxu0 %v1070
        %1134 = vmatpush1.msra.mxu0 %v1069
        %1135 = vmatprep.subr.mxu0 %v1072
        %1136 = vmatpush1.msra.mxu0 %v1071
        %1137 = vmatprep.subr.mxu0 %v1074
        %1138 = vmatpush1.msra.mxu0 %v1073
        %1139 = vmatprep.subr.mxu0 %v1076
        %1140 = vmatpush1.msra.mxu0 %v1075
        %1141 = vmatprep.subr.mxu0 %v1078
        %1142 = vmatpush1.msra.mxu0 %v1077
        %1143 = vmatprep.subr.mxu0 %v1080
        %1144 = vmatpush1.msra.mxu0 %v1079
        %1145 = vmatprep.subr.mxu0 %v1082
        %1146 = vmatpush1.msra.mxu0 %v1081
        %1147 = vmatprep.subr.mxu0 %v1084
        %1148 = vmatpush1.msra.mxu0 %v1083
        %1149 = vmatprep.subr.mxu0 %v1086
        %1150 = vmatpush1.msra.mxu0 %v1085
        %1151 = vmatprep.subr.mxu0 %v1088
        %1152 = vmatpush1.msra.mxu0 %v1087
        %1153 = vmatprep.subr.mxu0 %v1090
        %1154 = vmatpush1.msra.mxu0 %v1089
        %1155 = vmatprep.subr.mxu0 %v1092
        %1156 = vmatpush1.msra.mxu0 %v1091
        %1157 = vmatprep.subr.mxu0 %v1094
        %1158 = vmatpush1.msra.mxu0 %v1093
        %1159 = vmatprep.subr.mxu0 %v1096
        %1160 = vmatpush1.msra.mxu0 %v1095
        %1161 = vmatprep.subr.mxu0 %v1098
        %1162 = vmatpush1.msra.mxu0 %v1097
        %1163 = vmatprep.subr.mxu0 %v1100
        %1164 = vmatpush1.msra.mxu0 %v1099
        %1165 = vmatprep.subr.mxu0 %v1102
        %1166 = vmatpush1.msra.mxu0 %v1101
        %1167 = vmatprep.subr.mxu0 %v1104
        %1168 = vmatpush1.msra.mxu0 %v1103
        %1169 = vmatprep.subr.mxu0 %v1106
        %1170 = vmatpush1.msra.mxu0 %v1105
        %1171 = vmatprep.subr.mxu0 %v1108
        %1172 = vmatpush1.msra.mxu0 %v1107
        %1173 = vmatprep.subr.mxu0 %v1110
        %1174 = vmatpush1.msra.mxu0 %v1109
        %1175 = vmatprep.subr.mxu0 %v1112
        %1176 = vmatpush1.msra.mxu0 %v1111
        %1177 = vmatprep.subr.mxu0 %v1114
        %1178 = vmatpush1.msra.mxu0 %v1113
        %1179 = vmatprep.subr.mxu0 %v1116
        %1180 = vmatpush1.msra.mxu0 %v1115
        %1181 = vmatprep.subr.mxu0 %v1118
        %1182 = vmatpush1.msra.mxu0 %v1117
        %1183 = vmatprep.subr.mxu0 %v1120
        %1184 = vmatpush1.msra.mxu0 %v1119
        %1185 = vmatprep.subr.mxu0 %v1122
        %1186 = vmatpush1.msra.mxu0 %v1121
        %1187 = vmatprep.subr.mxu0 %v1124
        %1188 = vmatpush1.msra.mxu0 %v1123
        %1189 = vmatprep.subr.mxu0 %v1126
        %1190 = vmatpush1.msra.mxu0 %v1125
        %1191 = vmatprep.subr.mxu0 %v1128
        %1192 = vmatpush1.msra.mxu0 %v1127
        %1193 = vmatprep.mubr.f32.mxu0 %v477
        %1194 = vmatmul.mubr.f32.gmra.mrb[0].mxu0 %v443
        %v1195 = vpop.f32.mrb[0].mxu0
        %v1196 = vadd.f32 0.0, %v1195
        %v1197 = vpop.f32.mrb[0].mxu0
        %v1198 = vadd.f32 0.0, %v1197
        %1199 = vdwg.mxu0
        %v1201 = vsel %vm550, %v1063, 0
        %v1204 = vsel %vm554, %v1196, 0
        %v1207 = vsel %vm554, %v1198, 0
        %1209 = vmatprep.subr.mxu0 %v1207
        %1210 = vmatpush1.msra.mxu0 %v1204
        %1211 = vmatprep.subr.mxu0 0.0
        %1212 = vmatpush1.msra.mxu0 0.0
        %1213 = vmatprep.subr.mxu0 0.0
        %1214 = vmatpush1.msra.mxu0 0.0
        %1215 = vmatprep.subr.mxu0 0.0
        %1216 = vmatpush1.msra.mxu0 0.0
        %1217 = vmatprep.subr.mxu0 0.0
        %1218 = vmatpush1.msra.mxu0 0.0
        %1219 = vmatprep.subr.mxu0 0.0
        %1220 = vmatpush1.msra.mxu0 0.0
        %1221 = vmatprep.subr.mxu0 0.0
        %1222 = vmatpush1.msra.mxu0 0.0
        %1223 = vmatprep.subr.mxu0 0.0
        %1224 = vmatpush1.msra.mxu0 0.0
        %1225 = vmatprep.subr.mxu0 0.0
        %1226 = vmatpush1.msra.mxu0 0.0
        %1227 = vmatprep.subr.mxu0 0.0
        %1228 = vmatpush1.msra.mxu0 0.0
        %1229 = vmatprep.subr.mxu0 0.0
        %1230 = vmatpush1.msra.mxu0 0.0
        %1231 = vmatprep.subr.mxu0 0.0
        %1232 = vmatpush1.msra.mxu0 0.0
        %1233 = vmatprep.subr.mxu0 0.0
        %1234 = vmatpush1.msra.mxu0 0.0
        %1235 = vmatprep.subr.mxu0 0.0
        %1236 = vmatpush1.msra.mxu0 0.0
        %1237 = vmatprep.subr.mxu0 0.0
        %1238 = vmatpush1.msra.mxu0 0.0
        %1239 = vmatprep.subr.mxu0 0.0
        %1240 = vmatpush1.msra.mxu0 0.0
        %1241 = vmatprep.subr.mxu0 0.0
        %1242 = vmatpush1.msra.mxu0 0.0
        %1243 = vmatprep.subr.mxu0 0.0
        %1244 = vmatpush1.msra.mxu0 0.0
        %1245 = vmatprep.subr.mxu0 0.0
        %1246 = vmatpush1.msra.mxu0 0.0
        %1247 = vmatprep.subr.mxu0 0.0
        %1248 = vmatpush1.msra.mxu0 0.0
        %1249 = vmatprep.subr.mxu0 0.0
        %1250 = vmatpush1.msra.mxu0 0.0
        %1251 = vmatprep.subr.mxu0 0.0
        %1252 = vmatpush1.msra.mxu0 0.0
        %1253 = vmatprep.subr.mxu0 0.0
        %1254 = vmatpush1.msra.mxu0 0.0
        %1255 = vmatprep.subr.mxu0 0.0
        %1256 = vmatpush1.msra.mxu0 0.0
        %1257 = vmatprep.subr.mxu0 0.0
        %1258 = vmatpush1.msra.mxu0 0.0
        %1259 = vmatprep.subr.mxu0 0.0
        %1260 = vmatpush1.msra.mxu0 0.0
        %1261 = vmatprep.subr.mxu0 0.0
        %1262 = vmatpush1.msra.mxu0 0.0
        %1263 = vmatprep.subr.mxu0 0.0
        %1264 = vmatpush1.msra.mxu0 0.0
        %1265 = vmatprep.subr.mxu0 0.0
        %1266 = vmatpush1.msra.mxu0 0.0
        %1267 = vmatprep.subr.mxu0 0.0
        %1268 = vmatpush1.msra.mxu0 0.0
        %1269 = vmatprep.subr.mxu0 0.0
        %1270 = vmatpush1.msra.mxu0 0.0
        %1271 = vmatprep.subr.mxu0 0.0
        %1272 = vmatpush1.msra.mxu0 0.0
        %1273 = vmatprep.mubr.f32.mxu0 0.0
        %1274 = vmatmul.mubr.f32.gmra.mrb[0].mxu0 %v1201
        %v1275 = vpop.f32.mrb[0].mxu0
        %v1276 = vadd.f32 0.0, %v1275
        %v1277 = vpop.f32.mrb[0].mxu0
        %v1278 = vadd.f32 0.0, %v1277
        %1279 = vdwg.mxu0
        %v1281 = vsel %vm550, %v926, 0
        %v1284 = vsel %vm554, %v1058, 0
        %v1287 = vsel %vm554, %v1060, 0
        %1289 = vmatprep.subr.mxu0 %v1287
        %1290 = vmatpush1.msra.mxu0 %v1284
        %1291 = vmatprep.subr.mxu0 0.0
        %1292 = vmatpush1.msra.mxu0 0.0
        %1293 = vmatprep.subr.mxu0 0.0
        %1294 = vmatpush1.msra.mxu0 0.0
        %1295 = vmatprep.subr.mxu0 0.0
        %1296 = vmatpush1.msra.mxu0 0.0
        %1297 = vmatprep.subr.mxu0 0.0
        %1298 = vmatpush1.msra.mxu0 0.0
        %1299 = vmatprep.subr.mxu0 0.0
        %1300 = vmatpush1.msra.mxu0 0.0
        %1301 = vmatprep.subr.mxu0 0.0
        %1302 = vmatpush1.msra.mxu0 0.0
        %1303 = vmatprep.subr.mxu0 0.0
        %1304 = vmatpush1.msra.mxu0 0.0
        %1305 = vmatprep.subr.mxu0 0.0
        %1306 = vmatpush1.msra.mxu0 0.0
        %1307 = vmatprep.subr.mxu0 0.0
        %1308 = vmatpush1.msra.mxu0 0.0
        %1309 = vmatprep.subr.mxu0 0.0
        %1310 = vmatpush1.msra.mxu0 0.0
        %1311 = vmatprep.subr.mxu0 0.0
        %1312 = vmatpush1.msra.mxu0 0.0
        %1313 = vmatprep.subr.mxu0 0.0
        %1314 = vmatpush1.msra.mxu0 0.0
        %1315 = vmatprep.subr.mxu0 0.0
        %1316 = vmatpush1.msra.mxu0 0.0
        %1317 = vmatprep.subr.mxu0 0.0
        %1318 = vmatpush1.msra.mxu0 0.0
        %1319 = vmatprep.subr.mxu0 0.0
        %1320 = vmatpush1.msra.mxu0 0.0
        %1321 = vmatprep.subr.mxu0 0.0
        %1322 = vmatpush1.msra.mxu0 0.0
        %1323 = vmatprep.subr.mxu0 0.0
        %1324 = vmatpush1.msra.mxu0 0.0
        %1325 = vmatprep.subr.mxu0 0.0
        %1326 = vmatpush1.msra.mxu0 0.0
        %1327 = vmatprep.subr.mxu0 0.0
        %1328 = vmatpush1.msra.mxu0 0.0
        %1329 = vmatprep.subr.mxu0 0.0
        %1330 = vmatpush1.msra.mxu0 0.0
        %1331 = vmatprep.subr.mxu0 0.0
        %1332 = vmatpush1.msra.mxu0 0.0
        %1333 = vmatprep.subr.mxu0 0.0
        %1334 = vmatpush1.msra.mxu0 0.0
        %1335 = vmatprep.subr.mxu0 0.0
        %1336 = vmatpush1.msra.mxu0 0.0
        %1337 = vmatprep.subr.mxu0 0.0
        %1338 = vmatpush1.msra.mxu0 0.0
        %1339 = vmatprep.subr.mxu0 0.0
        %1340 = vmatpush1.msra.mxu0 0.0
        %1341 = vmatprep.subr.mxu0 0.0
        %1342 = vmatpush1.msra.mxu0 0.0
        %1343 = vmatprep.subr.mxu0 0.0
        %1344 = vmatpush1.msra.mxu0 0.0
        %1345 = vmatprep.subr.mxu0 0.0
        %1346 = vmatpush1.msra.mxu0 0.0
        %1347 = vmatprep.subr.mxu0 0.0
        %1348 = vmatpush1.msra.mxu0 0.0
        %1349 = vmatprep.subr.mxu0 0.0
        %1350 = vmatpush1.msra.mxu0 0.0
        %1351 = vmatprep.subr.mxu0 0.0
        %1352 = vmatpush1.msra.mxu0 0.0
        %1353 = vmatprep.mubr.f32.mxu0 0.0
        %1354 = vmatmul.mubr.f32.gmra.mrb[0].mxu0 %v1281
        %v1355 = vpop.f32.mrb[0].mxu0
        %v1356 = vadd.f32 %v1276, %v1355
        %v1357 = vpop.f32.mrb[0].mxu0
        %v1358 = vadd.f32 %v1278, %v1357
        %1359 = vdwg.mxu0
        %s1360 = scalar_lea.vmem %s8, 8
        %v1361 = vld [vmem:[%s1360] sm:$0xf]
        %s1362 = scalar_lea.vmem [#allocation7], 1024
        %v1363 = vld [vmem:[%s1362] sm:$0xff]
        %v1364 = vld [vmem:[%s1362 + $0x8] sm:$0xff]
        %v1365 = vld [vmem:[%s1362 + $0x10] sm:$0xff]
        %v1366 = vld [vmem:[%s1362 + $0x18] sm:$0xff]
        %v1367 = vld [vmem:[%s1362 + $0x20] sm:$0xff]
        %v1368 = vld [vmem:[%s1362 + $0x28] sm:$0xff]
        %v1369 = vld [vmem:[%s1362 + $0x30] sm:$0xff]
        %v1370 = vld [vmem:[%s1362 + $0x38] sm:$0xff]
        %v1371 = vld [vmem:[%s1362 + $0x40] sm:$0xff]
        %v1372 = vld [vmem:[%s1362 + $0x48] sm:$0xff]
        %v1373 = vld [vmem:[%s1362 + $0x50] sm:$0xff]
        %v1374 = vld [vmem:[%s1362 + $0x58] sm:$0xff]
        %v1375 = vld [vmem:[%s1362 + $0x60] sm:$0xff]
        %v1376 = vld [vmem:[%s1362 + $0x68] sm:$0xff]
        %v1377 = vld [vmem:[%s1362 + $0x70] sm:$0xff]
        %v1378 = vld [vmem:[%s1362 + $0x78] sm:$0xff]
        %v1379 = vld [vmem:[%s1362 + $0x80] sm:$0xff]
        %v1380 = vld [vmem:[%s1362 + $0x88] sm:$0xff]
        %v1381 = vld [vmem:[%s1362 + $0x90] sm:$0xff]
        %v1382 = vld [vmem:[%s1362 + $0x98] sm:$0xff]
        %v1383 = vld [vmem:[%s1362 + $0xa0] sm:$0xff]
        %v1384 = vld [vmem:[%s1362 + $0xa8] sm:$0xff]
        %v1385 = vld [vmem:[%s1362 + $0xb0] sm:$0xff]
        %v1386 = vld [vmem:[%s1362 + $0xb8] sm:$0xff]
        %v1387 = vld [vmem:[%s1362 + $0xc0] sm:$0xff]
        %v1388 = vld [vmem:[%s1362 + $0xc8] sm:$0xff]
        %v1389 = vld [vmem:[%s1362 + $0xd0] sm:$0xff]
        %v1390 = vld [vmem:[%s1362 + $0xd8] sm:$0xff]
        %v1391 = vld [vmem:[%s1362 + $0xe0] sm:$0xff]
        %v1392 = vld [vmem:[%s1362 + $0xe8] sm:$0xff]
        %v1393 = vld [vmem:[%s1362 + $0xf0] sm:$0xff]
        %v1394 = vld [vmem:[%s1362 + $0xf8] sm:$0xff]
        %v1395 = vld [vmem:[%s1362 + $0x100] sm:$0xff]
        %v1396 = vld [vmem:[%s1362 + $0x108] sm:$0xff]
        %v1397 = vld [vmem:[%s1362 + $0x110] sm:$0xff]
        %v1398 = vld [vmem:[%s1362 + $0x118] sm:$0xff]
        %v1399 = vld [vmem:[%s1362 + $0x120] sm:$0xff]
        %v1400 = vld [vmem:[%s1362 + $0x128] sm:$0xff]
        %v1401 = vld [vmem:[%s1362 + $0x130] sm:$0xff]
        %v1402 = vld [vmem:[%s1362 + $0x138] sm:$0xff]
        %v1403 = vld [vmem:[%s1362 + $0x140] sm:$0xff]
        %v1404 = vld [vmem:[%s1362 + $0x148] sm:$0xff]
        %v1405 = vld [vmem:[%s1362 + $0x150] sm:$0xff]
        %v1406 = vld [vmem:[%s1362 + $0x158] sm:$0xff]
        %v1407 = vld [vmem:[%s1362 + $0x160] sm:$0xff]
        %v1408 = vld [vmem:[%s1362 + $0x168] sm:$0xff]
        %v1409 = vld [vmem:[%s1362 + $0x170] sm:$0xff]
        %v1410 = vld [vmem:[%s1362 + $0x178] sm:$0xff]
        %v1411 = vld [vmem:[%s1362 + $0x180] sm:$0xff]
        %v1412 = vld [vmem:[%s1362 + $0x188] sm:$0xff]
        %v1413 = vld [vmem:[%s1362 + $0x190] sm:$0xff]
        %v1414 = vld [vmem:[%s1362 + $0x198] sm:$0xff]
        %v1415 = vld [vmem:[%s1362 + $0x1a0] sm:$0xff]
        %v1416 = vld [vmem:[%s1362 + $0x1a8] sm:$0xff]
        %v1417 = vld [vmem:[%s1362 + $0x1b0] sm:$0xff]
        %v1418 = vld [vmem:[%s1362 + $0x1b8] sm:$0xff]
        %v1419 = vld [vmem:[%s1362 + $0x1c0] sm:$0xff]
        %v1420 = vld [vmem:[%s1362 + $0x1c8] sm:$0xff]
        %v1421 = vld [vmem:[%s1362 + $0x1d0] sm:$0xff]
        %v1422 = vld [vmem:[%s1362 + $0x1d8] sm:$0xff]
        %v1423 = vld [vmem:[%s1362 + $0x1e0] sm:$0xff]
        %v1424 = vld [vmem:[%s1362 + $0x1e8] sm:$0xff]
        %v1425 = vld [vmem:[%s1362 + $0x1f0] sm:$0xff]
        %v1426 = vld [vmem:[%s1362 + $0x1f8] sm:$0xff]
        %1427 = vmatprep.subr.mxu0 %v1364
        %1428 = vmatpush1.msra.mxu0 %v1363
        %1429 = vmatprep.subr.mxu0 %v1366
        %1430 = vmatpush1.msra.mxu0 %v1365
        %1431 = vmatprep.subr.mxu0 %v1368
        %1432 = vmatpush1.msra.mxu0 %v1367
        %1433 = vmatprep.subr.mxu0 %v1370
        %1434 = vmatpush1.msra.mxu0 %v1369
        %1435 = vmatprep.subr.mxu0 %v1372
        %1436 = vmatpush1.msra.mxu0 %v1371
        %1437 = vmatprep.subr.mxu0 %v1374
        %1438 = vmatpush1.msra.mxu0 %v1373
        %1439 = vmatprep.subr.mxu0 %v1376
        %1440 = vmatpush1.msra.mxu0 %v1375
        %1441 = vmatprep.subr.mxu0 %v1378
        %1442 = vmatpush1.msra.mxu0 %v1377
        %1443 = vmatprep.subr.mxu0 %v1380
        %1444 = vmatpush1.msra.mxu0 %v1379
        %1445 = vmatprep.subr.mxu0 %v1382
        %1446 = vmatpush1.msra.mxu0 %v1381
        %1447 = vmatprep.subr.mxu0 %v1384
        %1448 = vmatpush1.msra.mxu0 %v1383
        %1449 = vmatprep.subr.mxu0 %v1386
        %1450 = vmatpush1.msra.mxu0 %v1385
        %1451 = vmatprep.subr.mxu0 %v1388
        %1452 = vmatpush1.msra.mxu0 %v1387
        %1453 = vmatprep.subr.mxu0 %v1390
        %1454 = vmatpush1.msra.mxu0 %v1389
        %1455 = vmatprep.subr.mxu0 %v1392
        %1456 = vmatpush1.msra.mxu0 %v1391
        %1457 = vmatprep.subr.mxu0 %v1394
        %1458 = vmatpush1.msra.mxu0 %v1393
        %1459 = vmatprep.subr.mxu0 %v1396
        %1460 = vmatpush1.msra.mxu0 %v1395
        %1461 = vmatprep.subr.mxu0 %v1398
        %1462 = vmatpush1.msra.mxu0 %v1397
        %1463 = vmatprep.subr.mxu0 %v1400
        %1464 = vmatpush1.msra.mxu0 %v1399
        %1465 = vmatprep.subr.mxu0 %v1402
        %1466 = vmatpush1.msra.mxu0 %v1401
        %1467 = vmatprep.subr.mxu0 %v1404
        %1468 = vmatpush1.msra.mxu0 %v1403
        %1469 = vmatprep.subr.mxu0 %v1406
        %1470 = vmatpush1.msra.mxu0 %v1405
        %1471 = vmatprep.subr.mxu0 %v1408
        %1472 = vmatpush1.msra.mxu0 %v1407
        %1473 = vmatprep.subr.mxu0 %v1410
        %1474 = vmatpush1.msra.mxu0 %v1409
        %1475 = vmatprep.subr.mxu0 %v1412
        %1476 = vmatpush1.msra.mxu0 %v1411
        %1477 = vmatprep.subr.mxu0 %v1414
        %1478 = vmatpush1.msra.mxu0 %v1413
        %1479 = vmatprep.subr.mxu0 %v1416
        %1480 = vmatpush1.msra.mxu0 %v1415
        %1481 = vmatprep.subr.mxu0 %v1418
        %1482 = vmatpush1.msra.mxu0 %v1417
        %1483 = vmatprep.subr.mxu0 %v1420
        %1484 = vmatpush1.msra.mxu0 %v1419
        %1485 = vmatprep.subr.mxu0 %v1422
        %1486 = vmatpush1.msra.mxu0 %v1421
        %1487 = vmatprep.subr.mxu0 %v1424
        %1488 = vmatpush1.msra.mxu0 %v1423
        %1489 = vmatprep.subr.mxu0 %v1426
        %1490 = vmatpush1.msra.mxu0 %v1425
        %1491 = vmatprep.mubr.f32.mxu0 %v477
        %1492 = vmatmul.mubr.f32.gmra.mrb[0].mxu0 %v443
        %v1493 = vpop.f32.mrb[0].mxu0
        %v1494 = vadd.f32 0.0, %v1493
        %v1495 = vpop.f32.mrb[0].mxu0
        %v1496 = vadd.f32 0.0, %v1495
        %1497 = vdwg.mxu0
        %v1499 = vsel %vm550, %v1361, 0
        %v1502 = vsel %vm554, %v1494, 0
        %v1505 = vsel %vm554, %v1496, 0
        %1507 = vmatprep.subr.mxu0 %v1505
        %1508 = vmatpush1.msra.mxu0 %v1502
        %1509 = vmatprep.subr.mxu0 0.0
        %1510 = vmatpush1.msra.mxu0 0.0
        %1511 = vmatprep.subr.mxu0 0.0
        %1512 = vmatpush1.msra.mxu0 0.0
        %1513 = vmatprep.subr.mxu0 0.0
        %1514 = vmatpush1.msra.mxu0 0.0
        %1515 = vmatprep.subr.mxu0 0.0
        %1516 = vmatpush1.msra.mxu0 0.0
        %1517 = vmatprep.subr.mxu0 0.0
        %1518 = vmatpush1.msra.mxu0 0.0
        %1519 = vmatprep.subr.mxu0 0.0
        %1520 = vmatpush1.msra.mxu0 0.0
        %1521 = vmatprep.subr.mxu0 0.0
        %1522 = vmatpush1.msra.mxu0 0.0
        %1523 = vmatprep.subr.mxu0 0.0
        %1524 = vmatpush1.msra.mxu0 0.0
        %1525 = vmatprep.subr.mxu0 0.0
        %1526 = vmatpush1.msra.mxu0 0.0
        %1527 = vmatprep.subr.mxu0 0.0
        %1528 = vmatpush1.msra.mxu0 0.0
        %1529 = vmatprep.subr.mxu0 0.0
        %1530 = vmatpush1.msra.mxu0 0.0
        %1531 = vmatprep.subr.mxu0 0.0
        %1532 = vmatpush1.msra.mxu0 0.0
        %1533 = vmatprep.subr.mxu0 0.0
        %1534 = vmatpush1.msra.mxu0 0.0
        %1535 = vmatprep.subr.mxu0 0.0
        %1536 = vmatpush1.msra.mxu0 0.0
        %1537 = vmatprep.subr.mxu0 0.0
        %1538 = vmatpush1.msra.mxu0 0.0
        %1539 = vmatprep.subr.mxu0 0.0
        %1540 = vmatpush1.msra.mxu0 0.0
        %1541 = vmatprep.subr.mxu0 0.0
        %1542 = vmatpush1.msra.mxu0 0.0
        %1543 = vmatprep.subr.mxu0 0.0
        %1544 = vmatpush1.msra.mxu0 0.0
        %1545 = vmatprep.subr.mxu0 0.0
        %1546 = vmatpush1.msra.mxu0 0.0
        %1547 = vmatprep.subr.mxu0 0.0
        %1548 = vmatpush1.msra.mxu0 0.0
        %1549 = vmatprep.subr.mxu0 0.0
        %1550 = vmatpush1.msra.mxu0 0.0
        %1551 = vmatprep.subr.mxu0 0.0
        %1552 = vmatpush1.msra.mxu0 0.0
        %1553 = vmatprep.subr.mxu0 0.0
        %1554 = vmatpush1.msra.mxu0 0.0
        %1555 = vmatprep.subr.mxu0 0.0
        %1556 = vmatpush1.msra.mxu0 0.0
        %1557 = vmatprep.subr.mxu0 0.0
        %1558 = vmatpush1.msra.mxu0 0.0
        %1559 = vmatprep.subr.mxu0 0.0
        %1560 = vmatpush1.msra.mxu0 0.0
        %1561 = vmatprep.subr.mxu0 0.0
        %1562 = vmatpush1.msra.mxu0 0.0
        %1563 = vmatprep.subr.mxu0 0.0
        %1564 = vmatpush1.msra.mxu0 0.0
        %1565 = vmatprep.subr.mxu0 0.0
        %1566 = vmatpush1.msra.mxu0 0.0
        %1567 = vmatprep.subr.mxu0 0.0
        %1568 = vmatpush1.msra.mxu0 0.0
        %1569 = vmatprep.subr.mxu0 0.0
        %1570 = vmatpush1.msra.mxu0 0.0
        %1571 = vmatprep.mubr.f32.mxu0 0.0
        %1572 = vmatmul.mubr.f32.gmra.mrb[0].mxu0 %v1499
        %v1573 = vpop.f32.mrb[0].mxu0
        %v1574 = vadd.f32 0.0, %v1573
        %v1575 = vpop.f32.mrb[0].mxu0
        %v1576 = vadd.f32 0.0, %v1575
        %1577 = vdwg.mxu0
        %v1578 = vadd.f32 %v1356, %v1574
        %v1579 = vadd.f32 %v1358, %v1576
        %s1580 = scalar_lea.vmem %s8, 12
        %v1581 = vld [vmem:[%s1580] sm:$0xf]
        %s1582 = scalar_lea.vmem [#allocation7], 1536
        %v1583 = vld [vmem:[%s1582] sm:$0xff]
        %v1584 = vld [vmem:[%s1582 + $0x8] sm:$0xff]
        %v1585 = vld [vmem:[%s1582 + $0x10] sm:$0xff]
        %v1586 = vld [vmem:[%s1582 + $0x18] sm:$0xff]
        %v1587 = vld [vmem:[%s1582 + $0x20] sm:$0xff]
        %v1588 = vld [vmem:[%s1582 + $0x28] sm:$0xff]
        %v1589 = vld [vmem:[%s1582 + $0x30] sm:$0xff]
        %v1590 = vld [vmem:[%s1582 + $0x38] sm:$0xff]
        %v1591 = vld [vmem:[%s1582 + $0x40] sm:$0xff]
        %v1592 = vld [vmem:[%s1582 + $0x48] sm:$0xff]
        %v1593 = vld [vmem:[%s1582 + $0x50] sm:$0xff]
        %v1594 = vld [vmem:[%s1582 + $0x58] sm:$0xff]
        %v1595 = vld [vmem:[%s1582 + $0x60] sm:$0xff]
        %v1596 = vld [vmem:[%s1582 + $0x68] sm:$0xff]
        %v1597 = vld [vmem:[%s1582 + $0x70] sm:$0xff]
        %v1598 = vld [vmem:[%s1582 + $0x78] sm:$0xff]
        %v1599 = vld [vmem:[%s1582 + $0x80] sm:$0xff]
        %v1600 = vld [vmem:[%s1582 + $0x88] sm:$0xff]
        %v1601 = vld [vmem:[%s1582 + $0x90] sm:$0xff]
        %v1602 = vld [vmem:[%s1582 + $0x98] sm:$0xff]
        %v1603 = vld [vmem:[%s1582 + $0xa0] sm:$0xff]
        %v1604 = vld [vmem:[%s1582 + $0xa8] sm:$0xff]
        %v1605 = vld [vmem:[%s1582 + $0xb0] sm:$0xff]
        %v1606 = vld [vmem:[%s1582 + $0xb8] sm:$0xff]
        %v1607 = vld [vmem:[%s1582 + $0xc0] sm:$0xff]
        %v1608 = vld [vmem:[%s1582 + $0xc8] sm:$0xff]
        %v1609 = vld [vmem:[%s1582 + $0xd0] sm:$0xff]
        %v1610 = vld [vmem:[%s1582 + $0xd8] sm:$0xff]
        %v1611 = vld [vmem:[%s1582 + $0xe0] sm:$0xff]
        %v1612 = vld [vmem:[%s1582 + $0xe8] sm:$0xff]
        %v1613 = vld [vmem:[%s1582 + $0xf0] sm:$0xff]
        %v1614 = vld [vmem:[%s1582 + $0xf8] sm:$0xff]
        %v1615 = vld [vmem:[%s1582 + $0x100] sm:$0xff]
        %v1616 = vld [vmem:[%s1582 + $0x108] sm:$0xff]
        %v1617 = vld [vmem:[%s1582 + $0x110] sm:$0xff]
        %v1618 = vld [vmem:[%s1582 + $0x118] sm:$0xff]
        %v1619 = vld [vmem:[%s1582 + $0x120] sm:$0xff]
        %v1620 = vld [vmem:[%s1582 + $0x128] sm:$0xff]
        %v1621 = vld [vmem:[%s1582 + $0x130] sm:$0xff]
        %v1622 = vld [vmem:[%s1582 + $0x138] sm:$0xff]
        %v1623 = vld [vmem:[%s1582 + $0x140] sm:$0xff]
        %v1624 = vld [vmem:[%s1582 + $0x148] sm:$0xff]
        %v1625 = vld [vmem:[%s1582 + $0x150] sm:$0xff]
        %v1626 = vld [vmem:[%s1582 + $0x158] sm:$0xff]
        %v1627 = vld [vmem:[%s1582 + $0x160] sm:$0xff]
        %v1628 = vld [vmem:[%s1582 + $0x168] sm:$0xff]
        %v1629 = vld [vmem:[%s1582 + $0x170] sm:$0xff]
        %v1630 = vld [vmem:[%s1582 + $0x178] sm:$0xff]
        %v1631 = vld [vmem:[%s1582 + $0x180] sm:$0xff]
        %v1632 = vld [vmem:[%s1582 + $0x188] sm:$0xff]
        %v1633 = vld [vmem:[%s1582 + $0x190] sm:$0xff]
        %v1634 = vld [vmem:[%s1582 + $0x198] sm:$0xff]
        %v1635 = vld [vmem:[%s1582 + $0x1a0] sm:$0xff]
        %v1636 = vld [vmem:[%s1582 + $0x1a8] sm:$0xff]
        %v1637 = vld [vmem:[%s1582 + $0x1b0] sm:$0xff]
        %v1638 = vld [vmem:[%s1582 + $0x1b8] sm:$0xff]
        %v1639 = vld [vmem:[%s1582 + $0x1c0] sm:$0xff]
        %v1640 = vld [vmem:[%s1582 + $0x1c8] sm:$0xff]
        %v1641 = vld [vmem:[%s1582 + $0x1d0] sm:$0xff]
        %v1642 = vld [vmem:[%s1582 + $0x1d8] sm:$0xff]
        %v1643 = vld [vmem:[%s1582 + $0x1e0] sm:$0xff]
        %v1644 = vld [vmem:[%s1582 + $0x1e8] sm:$0xff]
        %v1645 = vld [vmem:[%s1582 + $0x1f0] sm:$0xff]
        %v1646 = vld [vmem:[%s1582 + $0x1f8] sm:$0xff]
        %1647 = vmatprep.subr.mxu0 %v1584
        %1648 = vmatpush1.msra.mxu0 %v1583
        %1649 = vmatprep.subr.mxu0 %v1586
        %1650 = vmatpush1.msra.mxu0 %v1585
        %1651 = vmatprep.subr.mxu0 %v1588
        %1652 = vmatpush1.msra.mxu0 %v1587
        %1653 = vmatprep.subr.mxu0 %v1590
        %1654 = vmatpush1.msra.mxu0 %v1589
        %1655 = vmatprep.subr.mxu0 %v1592
        %1656 = vmatpush1.msra.mxu0 %v1591
        %1657 = vmatprep.subr.mxu0 %v1594
        %1658 = vmatpush1.msra.mxu0 %v1593
        %1659 = vmatprep.subr.mxu0 %v1596
        %1660 = vmatpush1.msra.mxu0 %v1595
        %1661 = vmatprep.subr.mxu0 %v1598
        %1662 = vmatpush1.msra.mxu0 %v1597
        %1663 = vmatprep.subr.mxu0 %v1600
        %1664 = vmatpush1.msra.mxu0 %v1599
        %1665 = vmatprep.subr.mxu0 %v1602
        %1666 = vmatpush1.msra.mxu0 %v1601
        %1667 = vmatprep.subr.mxu0 %v1604
        %1668 = vmatpush1.msra.mxu0 %v1603
        %1669 = vmatprep.subr.mxu0 %v1606
        %1670 = vmatpush1.msra.mxu0 %v1605
        %1671 = vmatprep.subr.mxu0 %v1608
        %1672 = vmatpush1.msra.mxu0 %v1607
        %1673 = vmatprep.subr.mxu0 %v1610
        %1674 = vmatpush1.msra.mxu0 %v1609
        %1675 = vmatprep.subr.mxu0 %v1612
        %1676 = vmatpush1.msra.mxu0 %v1611
        %1677 = vmatprep.subr.mxu0 %v1614
        %1678 = vmatpush1.msra.mxu0 %v1613
        %1679 = vmatprep.subr.mxu0 %v1616
        %1680 = vmatpush1.msra.mxu0 %v1615
        %1681 = vmatprep.subr.mxu0 %v1618
        %1682 = vmatpush1.msra.mxu0 %v1617
        %1683 = vmatprep.subr.mxu0 %v1620
        %1684 = vmatpush1.msra.mxu0 %v1619
        %1685 = vmatprep.subr.mxu0 %v1622
        %1686 = vmatpush1.msra.mxu0 %v1621
        %1687 = vmatprep.subr.mxu0 %v1624
        %1688 = vmatpush1.msra.mxu0 %v1623
        %1689 = vmatprep.subr.mxu0 %v1626
        %1690 = vmatpush1.msra.mxu0 %v1625
        %1691 = vmatprep.subr.mxu0 %v1628
        %1692 = vmatpush1.msra.mxu0 %v1627
        %1693 = vmatprep.subr.mxu0 %v1630
        %1694 = vmatpush1.msra.mxu0 %v1629
        %1695 = vmatprep.subr.mxu0 %v1632
        %1696 = vmatpush1.msra.mxu0 %v1631
        %1697 = vmatprep.subr.mxu0 %v1634
        %1698 = vmatpush1.msra.mxu0 %v1633
        %1699 = vmatprep.subr.mxu0 %v1636
        %1700 = vmatpush1.msra.mxu0 %v1635
        %1701 = vmatprep.subr.mxu0 %v1638
        %1702 = vmatpush1.msra.mxu0 %v1637
        %1703 = vmatprep.subr.mxu0 %v1640
        %1704 = vmatpush1.msra.mxu0 %v1639
        %1705 = vmatprep.subr.mxu0 %v1642
        %1706 = vmatpush1.msra.mxu0 %v1641
        %1707 = vmatprep.subr.mxu0 %v1644
        %1708 = vmatpush1.msra.mxu0 %v1643
        %1709 = vmatprep.subr.mxu0 %v1646
        %1710 = vmatpush1.msra.mxu0 %v1645
        %1711 = vmatprep.mubr.f32.mxu0 %v477
        %1712 = vmatmul.mubr.f32.gmra.mrb[0].mxu0 %v443
        %v1713 = vpop.f32.mrb[0].mxu0
        %v1714 = vadd.f32 0.0, %v1713
        %v1715 = vpop.f32.mrb[0].mxu0
        %v1716 = vadd.f32 0.0, %v1715
        %1717 = vdwg.mxu0
        %v1719 = vsel %vm550, %v1581, 0
        %v1722 = vsel %vm554, %v1714, 0
        %v1725 = vsel %vm554, %v1716, 0
        %1727 = vmatprep.subr.mxu0 %v1725
        %1728 = vmatpush1.msra.mxu0 %v1722
        %1729 = vmatprep.subr.mxu0 0.0
        %1730 = vmatpush1.msra.mxu0 0.0
        %1731 = vmatprep.subr.mxu0 0.0
        %1732 = vmatpush1.msra.mxu0 0.0
        %1733 = vmatprep.subr.mxu0 0.0
        %1734 = vmatpush1.msra.mxu0 0.0
        %1735 = vmatprep.subr.mxu0 0.0
        %1736 = vmatpush1.msra.mxu0 0.0
        %1737 = vmatprep.subr.mxu0 0.0
        %1738 = vmatpush1.msra.mxu0 0.0
        %1739 = vmatprep.subr.mxu0 0.0
        %1740 = vmatpush1.msra.mxu0 0.0
        %1741 = vmatprep.subr.mxu0 0.0
        %1742 = vmatpush1.msra.mxu0 0.0
        %1743 = vmatprep.subr.mxu0 0.0
        %1744 = vmatpush1.msra.mxu0 0.0
        %1745 = vmatprep.subr.mxu0 0.0
        %1746 = vmatpush1.msra.mxu0 0.0
        %1747 = vmatprep.subr.mxu0 0.0
        %1748 = vmatpush1.msra.mxu0 0.0
        %1749 = vmatprep.subr.mxu0 0.0
        %1750 = vmatpush1.msra.mxu0 0.0
        %1751 = vmatprep.subr.mxu0 0.0
        %1752 = vmatpush1.msra.mxu0 0.0
        %1753 = vmatprep.subr.mxu0 0.0
        %1754 = vmatpush1.msra.mxu0 0.0
        %1755 = vmatprep.subr.mxu0 0.0
        %1756 = vmatpush1.msra.mxu0 0.0
        %1757 = vmatprep.subr.mxu0 0.0
        %1758 = vmatpush1.msra.mxu0 0.0
        %1759 = vmatprep.subr.mxu0 0.0
        %1760 = vmatpush1.msra.mxu0 0.0
        %1761 = vmatprep.subr.mxu0 0.0
        %1762 = vmatpush1.msra.mxu0 0.0
        %1763 = vmatprep.subr.mxu0 0.0
        %1764 = vmatpush1.msra.mxu0 0.0
        %1765 = vmatprep.subr.mxu0 0.0
        %1766 = vmatpush1.msra.mxu0 0.0
        %1767 = vmatprep.subr.mxu0 0.0
        %1768 = vmatpush1.msra.mxu0 0.0
        %1769 = vmatprep.subr.mxu0 0.0
        %1770 = vmatpush1.msra.mxu0 0.0
        %1771 = vmatprep.subr.mxu0 0.0
        %1772 = vmatpush1.msra.mxu0 0.0
        %1773 = vmatprep.subr.mxu0 0.0
        %1774 = vmatpush1.msra.mxu0 0.0
        %1775 = vmatprep.subr.mxu0 0.0
        %1776 = vmatpush1.msra.mxu0 0.0
        %1777 = vmatprep.subr.mxu0 0.0
        %1778 = vmatpush1.msra.mxu0 0.0
        %1779 = vmatprep.subr.mxu0 0.0
        %1780 = vmatpush1.msra.mxu0 0.0
        %1781 = vmatprep.subr.mxu0 0.0
        %1782 = vmatpush1.msra.mxu0 0.0
        %1783 = vmatprep.subr.mxu0 0.0
        %1784 = vmatpush1.msra.mxu0 0.0
        %1785 = vmatprep.subr.mxu0 0.0
        %1786 = vmatpush1.msra.mxu0 0.0
        %1787 = vmatprep.subr.mxu0 0.0
        %1788 = vmatpush1.msra.mxu0 0.0
        %1789 = vmatprep.subr.mxu0 0.0
        %1790 = vmatpush1.msra.mxu0 0.0
        %1791 = vmatprep.mubr.f32.mxu0 0.0
        %1792 = vmatmul.mubr.f32.gmra.mrb[0].mxu0 %v1719
        %v1793 = vpop.f32.mrb[0].mxu0
        %v1794 = vadd.f32 0.0, %v1793
        %v1795 = vpop.f32.mrb[0].mxu0
        %v1796 = vadd.f32 0.0, %v1795
        %1797 = vdwg.mxu0
        %v1798 = vadd.f32 %v1578, %v1794
        %v1799 = vadd.f32 %v1579, %v1796
        %s1800 = scalar_lea.vmem %s8, 16
        %v1801 = vld [vmem:[%s1800] sm:$0xf]
        %s1802 = scalar_lea.vmem [#allocation7], 2048
        %v1803 = vld [vmem:[%s1802] sm:$0xff]
        %v1804 = vld [vmem:[%s1802 + $0x8] sm:$0xff]
        %v1805 = vld [vmem:[%s1802 + $0x10] sm:$0xff]
        %v1806 = vld [vmem:[%s1802 + $0x18] sm:$0xff]
        %v1807 = vld [vmem:[%s1802 + $0x20] sm:$0xff]
        %v1808 = vld [vmem:[%s1802 + $0x28] sm:$0xff]
        %v1809 = vld [vmem:[%s1802 + $0x30] sm:$0xff]
        %v1810 = vld [vmem:[%s1802 + $0x38] sm:$0xff]
        %v1811 = vld [vmem:[%s1802 + $0x40] sm:$0xff]
        %v1812 = vld [vmem:[%s1802 + $0x48] sm:$0xff]
        %v1813 = vld [vmem:[%s1802 + $0x50] sm:$0xff]
        %v1814 = vld [vmem:[%s1802 + $0x58] sm:$0xff]
        %v1815 = vld [vmem:[%s1802 + $0x60] sm:$0xff]
        %v1816 = vld [vmem:[%s1802 + $0x68] sm:$0xff]
        %v1817 = vld [vmem:[%s1802 + $0x70] sm:$0xff]
        %v1818 = vld [vmem:[%s1802 + $0x78] sm:$0xff]
        %v1819 = vld [vmem:[%s1802 + $0x80] sm:$0xff]
        %v1820 = vld [vmem:[%s1802 + $0x88] sm:$0xff]
        %v1821 = vld [vmem:[%s1802 + $0x90] sm:$0xff]
        %v1822 = vld [vmem:[%s1802 + $0x98] sm:$0xff]
        %v1823 = vld [vmem:[%s1802 + $0xa0] sm:$0xff]
        %v1824 = vld [vmem:[%s1802 + $0xa8] sm:$0xff]
        %v1825 = vld [vmem:[%s1802 + $0xb0] sm:$0xff]
        %v1826 = vld [vmem:[%s1802 + $0xb8] sm:$0xff]
        %v1827 = vld [vmem:[%s1802 + $0xc0] sm:$0xff]
        %v1828 = vld [vmem:[%s1802 + $0xc8] sm:$0xff]
        %v1829 = vld [vmem:[%s1802 + $0xd0] sm:$0xff]
        %v1830 = vld [vmem:[%s1802 + $0xd8] sm:$0xff]
        %v1831 = vld [vmem:[%s1802 + $0xe0] sm:$0xff]
        %v1832 = vld [vmem:[%s1802 + $0xe8] sm:$0xff]
        %v1833 = vld [vmem:[%s1802 + $0xf0] sm:$0xff]
        %v1834 = vld [vmem:[%s1802 + $0xf8] sm:$0xff]
        %v1835 = vld [vmem:[%s1802 + $0x100] sm:$0xff]
        %v1836 = vld [vmem:[%s1802 + $0x108] sm:$0xff]
        %v1837 = vld [vmem:[%s1802 + $0x110] sm:$0xff]
        %v1838 = vld [vmem:[%s1802 + $0x118] sm:$0xff]
        %v1839 = vld [vmem:[%s1802 + $0x120] sm:$0xff]
        %v1840 = vld [vmem:[%s1802 + $0x128] sm:$0xff]
        %v1841 = vld [vmem:[%s1802 + $0x130] sm:$0xff]
        %v1842 = vld [vmem:[%s1802 + $0x138] sm:$0xff]
        %v1843 = vld [vmem:[%s1802 + $0x140] sm:$0xff]
        %v1844 = vld [vmem:[%s1802 + $0x148] sm:$0xff]
        %v1845 = vld [vmem:[%s1802 + $0x150] sm:$0xff]
        %v1846 = vld [vmem:[%s1802 + $0x158] sm:$0xff]
        %v1847 = vld [vmem:[%s1802 + $0x160] sm:$0xff]
        %v1848 = vld [vmem:[%s1802 + $0x168] sm:$0xff]
        %v1849 = vld [vmem:[%s1802 + $0x170] sm:$0xff]
        %v1850 = vld [vmem:[%s1802 + $0x178] sm:$0xff]
        %v1851 = vld [vmem:[%s1802 + $0x180] sm:$0xff]
        %v1852 = vld [vmem:[%s1802 + $0x188] sm:$0xff]
        %v1853 = vld [vmem:[%s1802 + $0x190] sm:$0xff]
        %v1854 = vld [vmem:[%s1802 + $0x198] sm:$0xff]
        %v1855 = vld [vmem:[%s1802 + $0x1a0] sm:$0xff]
        %v1856 = vld [vmem:[%s1802 + $0x1a8] sm:$0xff]
        %v1857 = vld [vmem:[%s1802 + $0x1b0] sm:$0xff]
        %v1858 = vld [vmem:[%s1802 + $0x1b8] sm:$0xff]
        %v1859 = vld [vmem:[%s1802 + $0x1c0] sm:$0xff]
        %v1860 = vld [vmem:[%s1802 + $0x1c8] sm:$0xff]
        %v1861 = vld [vmem:[%s1802 + $0x1d0] sm:$0xff]
        %v1862 = vld [vmem:[%s1802 + $0x1d8] sm:$0xff]
        %v1863 = vld [vmem:[%s1802 + $0x1e0] sm:$0xff]
        %v1864 = vld [vmem:[%s1802 + $0x1e8] sm:$0xff]
        %v1865 = vld [vmem:[%s1802 + $0x1f0] sm:$0xff]
        %v1866 = vld [vmem:[%s1802 + $0x1f8] sm:$0xff]
        %1867 = vmatprep.subr.mxu0 %v1804
        %1868 = vmatpush1.msra.mxu0 %v1803
        %1869 = vmatprep.subr.mxu0 %v1806
        %1870 = vmatpush1.msra.mxu0 %v1805
        %1871 = vmatprep.subr.mxu0 %v1808
        %1872 = vmatpush1.msra.mxu0 %v1807
        %1873 = vmatprep.subr.mxu0 %v1810
        %1874 = vmatpush1.msra.mxu0 %v1809
        %1875 = vmatprep.subr.mxu0 %v1812
        %1876 = vmatpush1.msra.mxu0 %v1811
        %1877 = vmatprep.subr.mxu0 %v1814
        %1878 = vmatpush1.msra.mxu0 %v1813
        %1879 = vmatprep.subr.mxu0 %v1816
        %1880 = vmatpush1.msra.mxu0 %v1815
        %1881 = vmatprep.subr.mxu0 %v1818
        %1882 = vmatpush1.msra.mxu0 %v1817
        %1883 = vmatprep.subr.mxu0 %v1820
        %1884 = vmatpush1.msra.mxu0 %v1819
        %1885 = vmatprep.subr.mxu0 %v1822
        %1886 = vmatpush1.msra.mxu0 %v1821
        %1887 = vmatprep.subr.mxu0 %v1824
        %1888 = vmatpush1.msra.mxu0 %v1823
        %1889 = vmatprep.subr.mxu0 %v1826
        %1890 = vmatpush1.msra.mxu0 %v1825
        %1891 = vmatprep.subr.mxu0 %v1828
        %1892 = vmatpush1.msra.mxu0 %v1827
        %1893 = vmatprep.subr.mxu0 %v1830
        %1894 = vmatpush1.msra.mxu0 %v1829
        %1895 = vmatprep.subr.mxu0 %v1832
        %1896 = vmatpush1.msra.mxu0 %v1831
        %1897 = vmatprep.subr.mxu0 %v1834
        %1898 = vmatpush1.msra.mxu0 %v1833
        %1899 = vmatprep.subr.mxu0 %v1836
        %1900 = vmatpush1.msra.mxu0 %v1835
        %1901 = vmatprep.subr.mxu0 %v1838
        %1902 = vmatpush1.msra.mxu0 %v1837
        %1903 = vmatprep.subr.mxu0 %v1840
        %1904 = vmatpush1.msra.mxu0 %v1839
        %1905 = vmatprep.subr.mxu0 %v1842
        %1906 = vmatpush1.msra.mxu0 %v1841
        %1907 = vmatprep.subr.mxu0 %v1844
        %1908 = vmatpush1.msra.mxu0 %v1843
        %1909 = vmatprep.subr.mxu0 %v1846
        %1910 = vmatpush1.msra.mxu0 %v1845
        %1911 = vmatprep.subr.mxu0 %v1848
        %1912 = vmatpush1.msra.mxu0 %v1847
        %1913 = vmatprep.subr.mxu0 %v1850
        %1914 = vmatpush1.msra.mxu0 %v1849
        %1915 = vmatprep.subr.mxu0 %v1852
        %1916 = vmatpush1.msra.mxu0 %v1851
        %1917 = vmatprep.subr.mxu0 %v1854
        %1918 = vmatpush1.msra.mxu0 %v1853
        %1919 = vmatprep.subr.mxu0 %v1856
        %1920 = vmatpush1.msra.mxu0 %v1855
        %1921 = vmatprep.subr.mxu0 %v1858
        %1922 = vmatpush1.msra.mxu0 %v1857
        %1923 = vmatprep.subr.mxu0 %v1860
        %1924 = vmatpush1.msra.mxu0 %v1859
        %1925 = vmatprep.subr.mxu0 %v1862
        %1926 = vmatpush1.msra.mxu0 %v1861
        %1927 = vmatprep.subr.mxu0 %v1864
        %1928 = vmatpush1.msra.mxu0 %v1863
        %1929 = vmatprep.subr.mxu0 %v1866
        %1930 = vmatpush1.msra.mxu0 %v1865
        %1931 = vmatprep.mubr.f32.mxu0 %v477
        %1932 = vmatmul.mubr.f32.gmra.mrb[0].mxu0 %v443
        %v1933 = vpop.f32.mrb[0].mxu0
        %v1934 = vadd.f32 0.0, %v1933
        %v1935 = vpop.f32.mrb[0].mxu0
        %v1936 = vadd.f32 0.0, %v1935
        %1937 = vdwg.mxu0
        %v1939 = vsel %vm550, %v1801, 0
        %v1942 = vsel %vm554, %v1934, 0
        %v1945 = vsel %vm554, %v1936, 0
        %1947 = vmatprep.subr.mxu0 %v1945
        %1948 = vmatpush1.msra.mxu0 %v1942
        %1949 = vmatprep.subr.mxu0 0.0
        %1950 = vmatpush1.msra.mxu0 0.0
        %1951 = vmatprep.subr.mxu0 0.0
        %1952 = vmatpush1.msra.mxu0 0.0
        %1953 = vmatprep.subr.mxu0 0.0
        %1954 = vmatpush1.msra.mxu0 0.0
        %1955 = vmatprep.subr.mxu0 0.0
        %1956 = vmatpush1.msra.mxu0 0.0
        %1957 = vmatprep.subr.mxu0 0.0
        %1958 = vmatpush1.msra.mxu0 0.0
        %1959 = vmatprep.subr.mxu0 0.0
        %1960 = vmatpush1.msra.mxu0 0.0
        %1961 = vmatprep.subr.mxu0 0.0
        %1962 = vmatpush1.msra.mxu0 0.0
        %1963 = vmatprep.subr.mxu0 0.0
        %1964 = vmatpush1.msra.mxu0 0.0
        %1965 = vmatprep.subr.mxu0 0.0
        %1966 = vmatpush1.msra.mxu0 0.0
        %1967 = vmatprep.subr.mxu0 0.0
        %1968 = vmatpush1.msra.mxu0 0.0
        %1969 = vmatprep.subr.mxu0 0.0
        %1970 = vmatpush1.msra.mxu0 0.0
        %1971 = vmatprep.subr.mxu0 0.0
        %1972 = vmatpush1.msra.mxu0 0.0
        %1973 = vmatprep.subr.mxu0 0.0
        %1974 = vmatpush1.msra.mxu0 0.0
        %1975 = vmatprep.subr.mxu0 0.0
        %1976 = vmatpush1.msra.mxu0 0.0
        %1977 = vmatprep.subr.mxu0 0.0
        %1978 = vmatpush1.msra.mxu0 0.0
        %1979 = vmatprep.subr.mxu0 0.0
        %1980 = vmatpush1.msra.mxu0 0.0
        %1981 = vmatprep.subr.mxu0 0.0
        %1982 = vmatpush1.msra.mxu0 0.0
        %1983 = vmatprep.subr.mxu0 0.0
        %1984 = vmatpush1.msra.mxu0 0.0
        %1985 = vmatprep.subr.mxu0 0.0
        %1986 = vmatpush1.msra.mxu0 0.0
        %1987 = vmatprep.subr.mxu0 0.0
        %1988 = vmatpush1.msra.mxu0 0.0
        %1989 = vmatprep.subr.mxu0 0.0
        %1990 = vmatpush1.msra.mxu0 0.0
        %1991 = vmatprep.subr.mxu0 0.0
        %1992 = vmatpush1.msra.mxu0 0.0
        %1993 = vmatprep.subr.mxu0 0.0
        %1994 = vmatpush1.msra.mxu0 0.0
        %1995 = vmatprep.subr.mxu0 0.0
        %1996 = vmatpush1.msra.mxu0 0.0
        %1997 = vmatprep.subr.mxu0 0.0
        %1998 = vmatpush1.msra.mxu0 0.0
        %1999 = vmatprep.subr.mxu0 0.0
        %2000 = vmatpush1.msra.mxu0 0.0
        %2001 = vmatprep.subr.mxu0 0.0
        %2002 = vmatpush1.msra.mxu0 0.0
        %2003 = vmatprep.subr.mxu0 0.0
        %2004 = vmatpush1.msra.mxu0 0.0
        %2005 = vmatprep.subr.mxu0 0.0
        %2006 = vmatpush1.msra.mxu0 0.0
        %2007 = vmatprep.subr.mxu0 0.0
        %2008 = vmatpush1.msra.mxu0 0.0
        %2009 = vmatprep.subr.mxu0 0.0
        %2010 = vmatpush1.msra.mxu0 0.0
        %2011 = vmatprep.mubr.f32.mxu0 0.0
        %2012 = vmatmul.mubr.f32.gmra.mrb[0].mxu0 %v1939
        %v2013 = vpop.f32.mrb[0].mxu0
        %v2014 = vadd.f32 0.0, %v2013
        %v2015 = vpop.f32.mrb[0].mxu0
        %v2016 = vadd.f32 0.0, %v2015
        %2017 = vdwg.mxu0
        %v2018 = vadd.f32 %v1798, %v2014
        %v2019 = vadd.f32 %v1799, %v2016
        %s2020 = scalar_lea.vmem %s8, 20
        %v2021 = vld [vmem:[%s2020] sm:$0xf]
        %s2022 = scalar_lea.vmem [#allocation7], 2560
        %v2023 = vld [vmem:[%s2022] sm:$0xff]
        %v2024 = vld [vmem:[%s2022 + $0x8] sm:$0xff]
        %v2025 = vld [vmem:[%s2022 + $0x10] sm:$0xff]
        %v2026 = vld [vmem:[%s2022 + $0x18] sm:$0xff]
        %v2027 = vld [vmem:[%s2022 + $0x20] sm:$0xff]
        %v2028 = vld [vmem:[%s2022 + $0x28] sm:$0xff]
        %v2029 = vld [vmem:[%s2022 + $0x30] sm:$0xff]
        %v2030 = vld [vmem:[%s2022 + $0x38] sm:$0xff]
        %v2031 = vld [vmem:[%s2022 + $0x40] sm:$0xff]
        %v2032 = vld [vmem:[%s2022 + $0x48] sm:$0xff]
        %v2033 = vld [vmem:[%s2022 + $0x50] sm:$0xff]
        %v2034 = vld [vmem:[%s2022 + $0x58] sm:$0xff]
        %v2035 = vld [vmem:[%s2022 + $0x60] sm:$0xff]
        %v2036 = vld [vmem:[%s2022 + $0x68] sm:$0xff]
        %v2037 = vld [vmem:[%s2022 + $0x70] sm:$0xff]
        %v2038 = vld [vmem:[%s2022 + $0x78] sm:$0xff]
        %v2039 = vld [vmem:[%s2022 + $0x80] sm:$0xff]
        %v2040 = vld [vmem:[%s2022 + $0x88] sm:$0xff]
        %v2041 = vld [vmem:[%s2022 + $0x90] sm:$0xff]
        %v2042 = vld [vmem:[%s2022 + $0x98] sm:$0xff]
        %v2043 = vld [vmem:[%s2022 + $0xa0] sm:$0xff]
        %v2044 = vld [vmem:[%s2022 + $0xa8] sm:$0xff]
        %v2045 = vld [vmem:[%s2022 + $0xb0] sm:$0xff]
        %v2046 = vld [vmem:[%s2022 + $0xb8] sm:$0xff]
        %v2047 = vld [vmem:[%s2022 + $0xc0] sm:$0xff]
        %v2048 = vld [vmem:[%s2022 + $0xc8] sm:$0xff]
        %v2049 = vld [vmem:[%s2022 + $0xd0] sm:$0xff]
        %v2050 = vld [vmem:[%s2022 + $0xd8] sm:$0xff]
        %v2051 = vld [vmem:[%s2022 + $0xe0] sm:$0xff]
        %v2052 = vld [vmem:[%s2022 + $0xe8] sm:$0xff]
        %v2053 = vld [vmem:[%s2022 + $0xf0] sm:$0xff]
        %v2054 = vld [vmem:[%s2022 + $0xf8] sm:$0xff]
        %v2055 = vld [vmem:[%s2022 + $0x100] sm:$0xff]
        %v2056 = vld [vmem:[%s2022 + $0x108] sm:$0xff]
        %v2057 = vld [vmem:[%s2022 + $0x110] sm:$0xff]
        %v2058 = vld [vmem:[%s2022 + $0x118] sm:$0xff]
        %v2059 = vld [vmem:[%s2022 + $0x120] sm:$0xff]
        %v2060 = vld [vmem:[%s2022 + $0x128] sm:$0xff]
        %v2061 = vld [vmem:[%s2022 + $0x130] sm:$0xff]
        %v2062 = vld [vmem:[%s2022 + $0x138] sm:$0xff]
        %v2063 = vld [vmem:[%s2022 + $0x140] sm:$0xff]
        %v2064 = vld [vmem:[%s2022 + $0x148] sm:$0xff]
        %v2065 = vld [vmem:[%s2022 + $0x150] sm:$0xff]
        %v2066 = vld [vmem:[%s2022 + $0x158] sm:$0xff]
        %v2067 = vld [vmem:[%s2022 + $0x160] sm:$0xff]
        %v2068 = vld [vmem:[%s2022 + $0x168] sm:$0xff]
        %v2069 = vld [vmem:[%s2022 + $0x170] sm:$0xff]
        %v2070 = vld [vmem:[%s2022 + $0x178] sm:$0xff]
        %v2071 = vld [vmem:[%s2022 + $0x180] sm:$0xff]
        %v2072 = vld [vmem:[%s2022 + $0x188] sm:$0xff]
        %v2073 = vld [vmem:[%s2022 + $0x190] sm:$0xff]
        %v2074 = vld [vmem:[%s2022 + $0x198] sm:$0xff]
        %v2075 = vld [vmem:[%s2022 + $0x1a0] sm:$0xff]
        %v2076 = vld [vmem:[%s2022 + $0x1a8] sm:$0xff]
        %v2077 = vld [vmem:[%s2022 + $0x1b0] sm:$0xff]
        %v2078 = vld [vmem:[%s2022 + $0x1b8] sm:$0xff]
        %v2079 = vld [vmem:[%s2022 + $0x1c0] sm:$0xff]
        %v2080 = vld [vmem:[%s2022 + $0x1c8] sm:$0xff]
        %v2081 = vld [vmem:[%s2022 + $0x1d0] sm:$0xff]
        %v2082 = vld [vmem:[%s2022 + $0x1d8] sm:$0xff]
        %v2083 = vld [vmem:[%s2022 + $0x1e0] sm:$0xff]
        %v2084 = vld [vmem:[%s2022 + $0x1e8] sm:$0xff]
        %v2085 = vld [vmem:[%s2022 + $0x1f0] sm:$0xff]
        %v2086 = vld [vmem:[%s2022 + $0x1f8] sm:$0xff]
        %2087 = vmatprep.subr.mxu0 %v2024
        %2088 = vmatpush1.msra.mxu0 %v2023
        %2089 = vmatprep.subr.mxu0 %v2026
        %2090 = vmatpush1.msra.mxu0 %v2025
        %2091 = vmatprep.subr.mxu0 %v2028
        %2092 = vmatpush1.msra.mxu0 %v2027
        %2093 = vmatprep.subr.mxu0 %v2030
        %2094 = vmatpush1.msra.mxu0 %v2029
        %2095 = vmatprep.subr.mxu0 %v2032
        %2096 = vmatpush1.msra.mxu0 %v2031
        %2097 = vmatprep.subr.mxu0 %v2034
        %2098 = vmatpush1.msra.mxu0 %v2033
        %2099 = vmatprep.subr.mxu0 %v2036
        %2100 = vmatpush1.msra.mxu0 %v2035
        %2101 = vmatprep.subr.mxu0 %v2038
        %2102 = vmatpush1.msra.mxu0 %v2037
        %2103 = vmatprep.subr.mxu0 %v2040
        %2104 = vmatpush1.msra.mxu0 %v2039
        %2105 = vmatprep.subr.mxu0 %v2042
        %2106 = vmatpush1.msra.mxu0 %v2041
        %2107 = vmatprep.subr.mxu0 %v2044
        %2108 = vmatpush1.msra.mxu0 %v2043
        %2109 = vmatprep.subr.mxu0 %v2046
        %2110 = vmatpush1.msra.mxu0 %v2045
        %2111 = vmatprep.subr.mxu0 %v2048
        %2112 = vmatpush1.msra.mxu0 %v2047
        %2113 = vmatprep.subr.mxu0 %v2050
        %2114 = vmatpush1.msra.mxu0 %v2049
        %2115 = vmatprep.subr.mxu0 %v2052
        %2116 = vmatpush1.msra.mxu0 %v2051
        %2117 = vmatprep.subr.mxu0 %v2054
        %2118 = vmatpush1.msra.mxu0 %v2053
        %2119 = vmatprep.subr.mxu0 %v2056
        %2120 = vmatpush1.msra.mxu0 %v2055
        %2121 = vmatprep.subr.mxu0 %v2058
        %2122 = vmatpush1.msra.mxu0 %v2057
        %2123 = vmatprep.subr.mxu0 %v2060
        %2124 = vmatpush1.msra.mxu0 %v2059
        %2125 = vmatprep.subr.mxu0 %v2062
        %2126 = vmatpush1.msra.mxu0 %v2061
        %2127 = vmatprep.subr.mxu0 %v2064
        %2128 = vmatpush1.msra.mxu0 %v2063
        %2129 = vmatprep.subr.mxu0 %v2066
        %2130 = vmatpush1.msra.mxu0 %v2065
        %2131 = vmatprep.subr.mxu0 %v2068
        %2132 = vmatpush1.msra.mxu0 %v2067
        %2133 = vmatprep.subr.mxu0 %v2070
        %2134 = vmatpush1.msra.mxu0 %v2069
        %2135 = vmatprep.subr.mxu0 %v2072
        %2136 = vmatpush1.msra.mxu0 %v2071
        %2137 = vmatprep.subr.mxu0 %v2074
        %2138 = vmatpush1.msra.mxu0 %v2073
        %2139 = vmatprep.subr.mxu0 %v2076
        %2140 = vmatpush1.msra.mxu0 %v2075
        %2141 = vmatprep.subr.mxu0 %v2078
        %2142 = vmatpush1.msra.mxu0 %v2077
        %2143 = vmatprep.subr.mxu0 %v2080
        %2144 = vmatpush1.msra.mxu0 %v2079
        %2145 = vmatprep.subr.mxu0 %v2082
        %2146 = vmatpush1.msra.mxu0 %v2081
        %2147 = vmatprep.subr.mxu0 %v2084
        %2148 = vmatpush1.msra.mxu0 %v2083
        %2149 = vmatprep.subr.mxu0 %v2086
        %2150 = vmatpush1.msra.mxu0 %v2085
        %2151 = vmatprep.mubr.f32.mxu0 %v477
        %2152 = vmatmul.mubr.f32.gmra.mrb[0].mxu0 %v443
        %v2153 = vpop.f32.mrb[0].mxu0
        %v2154 = vadd.f32 0.0, %v2153
        %v2155 = vpop.f32.mrb[0].mxu0
        %v2156 = vadd.f32 0.0, %v2155
        %2157 = vdwg.mxu0
        %v2159 = vsel %vm550, %v2021, 0
        %v2162 = vsel %vm554, %v2154, 0
        %v2165 = vsel %vm554, %v2156, 0
        %2167 = vmatprep.subr.mxu0 %v2165
        %2168 = vmatpush1.msra.mxu0 %v2162
        %2169 = vmatprep.subr.mxu0 0.0
        %2170 = vmatpush1.msra.mxu0 0.0
        %2171 = vmatprep.subr.mxu0 0.0
        %2172 = vmatpush1.msra.mxu0 0.0
        %2173 = vmatprep.subr.mxu0 0.0
        %2174 = vmatpush1.msra.mxu0 0.0
        %2175 = vmatprep.subr.mxu0 0.0
        %2176 = vmatpush1.msra.mxu0 0.0
        %2177 = vmatprep.subr.mxu0 0.0
        %2178 = vmatpush1.msra.mxu0 0.0
        %2179 = vmatprep.subr.mxu0 0.0
        %2180 = vmatpush1.msra.mxu0 0.0
        %2181 = vmatprep.subr.mxu0 0.0
        %2182 = vmatpush1.msra.mxu0 0.0
        %2183 = vmatprep.subr.mxu0 0.0
        %2184 = vmatpush1.msra.mxu0 0.0
        %2185 = vmatprep.subr.mxu0 0.0
        %2186 = vmatpush1.msra.mxu0 0.0
        %2187 = vmatprep.subr.mxu0 0.0
        %2188 = vmatpush1.msra.mxu0 0.0
        %2189 = vmatprep.subr.mxu0 0.0
        %2190 = vmatpush1.msra.mxu0 0.0
        %2191 = vmatprep.subr.mxu0 0.0
        %2192 = vmatpush1.msra.mxu0 0.0
        %2193 = vmatprep.subr.mxu0 0.0
        %2194 = vmatpush1.msra.mxu0 0.0
        %2195 = vmatprep.subr.mxu0 0.0
        %2196 = vmatpush1.msra.mxu0 0.0
        %2197 = vmatprep.subr.mxu0 0.0
        %2198 = vmatpush1.msra.mxu0 0.0
        %2199 = vmatprep.subr.mxu0 0.0
        %2200 = vmatpush1.msra.mxu0 0.0
        %2201 = vmatprep.subr.mxu0 0.0
        %2202 = vmatpush1.msra.mxu0 0.0
        %2203 = vmatprep.subr.mxu0 0.0
        %2204 = vmatpush1.msra.mxu0 0.0
        %2205 = vmatprep.subr.mxu0 0.0
        %2206 = vmatpush1.msra.mxu0 0.0
        %2207 = vmatprep.subr.mxu0 0.0
        %2208 = vmatpush1.msra.mxu0 0.0
        %2209 = vmatprep.subr.mxu0 0.0
        %2210 = vmatpush1.msra.mxu0 0.0
        %2211 = vmatprep.subr.mxu0 0.0
        %2212 = vmatpush1.msra.mxu0 0.0
        %2213 = vmatprep.subr.mxu0 0.0
        %2214 = vmatpush1.msra.mxu0 0.0
        %2215 = vmatprep.subr.mxu0 0.0
        %2216 = vmatpush1.msra.mxu0 0.0
        %2217 = vmatprep.subr.mxu0 0.0
        %2218 = vmatpush1.msra.mxu0 0.0
        %2219 = vmatprep.subr.mxu0 0.0
        %2220 = vmatpush1.msra.mxu0 0.0
        %2221 = vmatprep.subr.mxu0 0.0
        %2222 = vmatpush1.msra.mxu0 0.0
        %2223 = vmatprep.subr.mxu0 0.0
        %2224 = vmatpush1.msra.mxu0 0.0
        %2225 = vmatprep.subr.mxu0 0.0
        %2226 = vmatpush1.msra.mxu0 0.0
        %2227 = vmatprep.subr.mxu0 0.0
        %2228 = vmatpush1.msra.mxu0 0.0
        %2229 = vmatprep.subr.mxu0 0.0
        %2230 = vmatpush1.msra.mxu0 0.0
        %2231 = vmatprep.mubr.f32.mxu0 0.0
        %2232 = vmatmul.mubr.f32.gmra.mrb[0].mxu0 %v2159
        %v2233 = vpop.f32.mrb[0].mxu0
        %v2234 = vadd.f32 0.0, %v2233
        %v2235 = vpop.f32.mrb[0].mxu0
        %v2236 = vadd.f32 0.0, %v2235
        %2237 = vdwg.mxu0
        %v2238 = vadd.f32 %v2018, %v2234
        %v2239 = vadd.f32 %v2019, %v2236
        %s2240 = scalar_lea.vmem %s8, 24
        %v2241 = vld [vmem:[%s2240] sm:$0xf]
        %s2242 = scalar_lea.vmem [#allocation7], 3072
        %v2243 = vld [vmem:[%s2242] sm:$0xff]
        %v2244 = vld [vmem:[%s2242 + $0x8] sm:$0xff]
        %v2245 = vld [vmem:[%s2242 + $0x10] sm:$0xff]
        %v2246 = vld [vmem:[%s2242 + $0x18] sm:$0xff]
        %v2247 = vld [vmem:[%s2242 + $0x20] sm:$0xff]
        %v2248 = vld [vmem:[%s2242 + $0x28] sm:$0xff]
        %v2249 = vld [vmem:[%s2242 + $0x30] sm:$0xff]
        %v2250 = vld [vmem:[%s2242 + $0x38] sm:$0xff]
        %v2251 = vld [vmem:[%s2242 + $0x40] sm:$0xff]
        %v2252 = vld [vmem:[%s2242 + $0x48] sm:$0xff]
        %v2253 = vld [vmem:[%s2242 + $0x50] sm:$0xff]
        %v2254 = vld [vmem:[%s2242 + $0x58] sm:$0xff]
        %v2255 = vld [vmem:[%s2242 + $0x60] sm:$0xff]
        %v2256 = vld [vmem:[%s2242 + $0x68] sm:$0xff]
        %v2257 = vld [vmem:[%s2242 + $0x70] sm:$0xff]
        %v2258 = vld [vmem:[%s2242 + $0x78] sm:$0xff]
        %v2259 = vld [vmem:[%s2242 + $0x80] sm:$0xff]
        %v2260 = vld [vmem:[%s2242 + $0x88] sm:$0xff]
        %v2261 = vld [vmem:[%s2242 + $0x90] sm:$0xff]
        %v2262 = vld [vmem:[%s2242 + $0x98] sm:$0xff]
        %v2263 = vld [vmem:[%s2242 + $0xa0] sm:$0xff]
        %v2264 = vld [vmem:[%s2242 + $0xa8] sm:$0xff]
        %v2265 = vld [vmem:[%s2242 + $0xb0] sm:$0xff]
        %v2266 = vld [vmem:[%s2242 + $0xb8] sm:$0xff]
        %v2267 = vld [vmem:[%s2242 + $0xc0] sm:$0xff]
        %v2268 = vld [vmem:[%s2242 + $0xc8] sm:$0xff]
        %v2269 = vld [vmem:[%s2242 + $0xd0] sm:$0xff]
        %v2270 = vld [vmem:[%s2242 + $0xd8] sm:$0xff]
        %v2271 = vld [vmem:[%s2242 + $0xe0] sm:$0xff]
        %v2272 = vld [vmem:[%s2242 + $0xe8] sm:$0xff]
        %v2273 = vld [vmem:[%s2242 + $0xf0] sm:$0xff]
        %v2274 = vld [vmem:[%s2242 + $0xf8] sm:$0xff]
        %v2275 = vld [vmem:[%s2242 + $0x100] sm:$0xff]
        %v2276 = vld [vmem:[%s2242 + $0x108] sm:$0xff]
        %v2277 = vld [vmem:[%s2242 + $0x110] sm:$0xff]
        %v2278 = vld [vmem:[%s2242 + $0x118] sm:$0xff]
        %v2279 = vld [vmem:[%s2242 + $0x120] sm:$0xff]
        %v2280 = vld [vmem:[%s2242 + $0x128] sm:$0xff]
        %v2281 = vld [vmem:[%s2242 + $0x130] sm:$0xff]
        %v2282 = vld [vmem:[%s2242 + $0x138] sm:$0xff]
        %v2283 = vld [vmem:[%s2242 + $0x140] sm:$0xff]
        %v2284 = vld [vmem:[%s2242 + $0x148] sm:$0xff]
        %v2285 = vld [vmem:[%s2242 + $0x150] sm:$0xff]
        %v2286 = vld [vmem:[%s2242 + $0x158] sm:$0xff]
        %v2287 = vld [vmem:[%s2242 + $0x160] sm:$0xff]
        %v2288 = vld [vmem:[%s2242 + $0x168] sm:$0xff]
        %v2289 = vld [vmem:[%s2242 + $0x170] sm:$0xff]
        %v2290 = vld [vmem:[%s2242 + $0x178] sm:$0xff]
        %v2291 = vld [vmem:[%s2242 + $0x180] sm:$0xff]
        %v2292 = vld [vmem:[%s2242 + $0x188] sm:$0xff]
        %v2293 = vld [vmem:[%s2242 + $0x190] sm:$0xff]
        %v2294 = vld [vmem:[%s2242 + $0x198] sm:$0xff]
        %v2295 = vld [vmem:[%s2242 + $0x1a0] sm:$0xff]
        %v2296 = vld [vmem:[%s2242 + $0x1a8] sm:$0xff]
        %v2297 = vld [vmem:[%s2242 + $0x1b0] sm:$0xff]
        %v2298 = vld [vmem:[%s2242 + $0x1b8] sm:$0xff]
        %v2299 = vld [vmem:[%s2242 + $0x1c0] sm:$0xff]
        %v2300 = vld [vmem:[%s2242 + $0x1c8] sm:$0xff]
        %v2301 = vld [vmem:[%s2242 + $0x1d0] sm:$0xff]
        %v2302 = vld [vmem:[%s2242 + $0x1d8] sm:$0xff]
        %v2303 = vld [vmem:[%s2242 + $0x1e0] sm:$0xff]
        %v2304 = vld [vmem:[%s2242 + $0x1e8] sm:$0xff]
        %v2305 = vld [vmem:[%s2242 + $0x1f0] sm:$0xff]
        %v2306 = vld [vmem:[%s2242 + $0x1f8] sm:$0xff]
        %2307 = vmatprep.subr.mxu0 %v2244
        %2308 = vmatpush1.msra.mxu0 %v2243
        %2309 = vmatprep.subr.mxu0 %v2246
        %2310 = vmatpush1.msra.mxu0 %v2245
        %2311 = vmatprep.subr.mxu0 %v2248
        %2312 = vmatpush1.msra.mxu0 %v2247
        %2313 = vmatprep.subr.mxu0 %v2250
        %2314 = vmatpush1.msra.mxu0 %v2249
        %2315 = vmatprep.subr.mxu0 %v2252
        %2316 = vmatpush1.msra.mxu0 %v2251
        %2317 = vmatprep.subr.mxu0 %v2254
        %2318 = vmatpush1.msra.mxu0 %v2253
        %2319 = vmatprep.subr.mxu0 %v2256
        %2320 = vmatpush1.msra.mxu0 %v2255
        %2321 = vmatprep.subr.mxu0 %v2258
        %2322 = vmatpush1.msra.mxu0 %v2257
        %2323 = vmatprep.subr.mxu0 %v2260
        %2324 = vmatpush1.msra.mxu0 %v2259
        %2325 = vmatprep.subr.mxu0 %v2262
        %2326 = vmatpush1.msra.mxu0 %v2261
        %2327 = vmatprep.subr.mxu0 %v2264
        %2328 = vmatpush1.msra.mxu0 %v2263
        %2329 = vmatprep.subr.mxu0 %v2266
        %2330 = vmatpush1.msra.mxu0 %v2265
        %2331 = vmatprep.subr.mxu0 %v2268
        %2332 = vmatpush1.msra.mxu0 %v2267
        %2333 = vmatprep.subr.mxu0 %v2270
        %2334 = vmatpush1.msra.mxu0 %v2269
        %2335 = vmatprep.subr.mxu0 %v2272
        %2336 = vmatpush1.msra.mxu0 %v2271
        %2337 = vmatprep.subr.mxu0 %v2274
        %2338 = vmatpush1.msra.mxu0 %v2273
        %2339 = vmatprep.subr.mxu0 %v2276
        %2340 = vmatpush1.msra.mxu0 %v2275
        %2341 = vmatprep.subr.mxu0 %v2278
        %2342 = vmatpush1.msra.mxu0 %v2277
        %2343 = vmatprep.subr.mxu0 %v2280
        %2344 = vmatpush1.msra.mxu0 %v2279
        %2345 = vmatprep.subr.mxu0 %v2282
        %2346 = vmatpush1.msra.mxu0 %v2281
        %2347 = vmatprep.subr.mxu0 %v2284
        %2348 = vmatpush1.msra.mxu0 %v2283
        %2349 = vmatprep.subr.mxu0 %v2286
        %2350 = vmatpush1.msra.mxu0 %v2285
        %2351 = vmatprep.subr.mxu0 %v2288
        %2352 = vmatpush1.msra.mxu0 %v2287
        %2353 = vmatprep.subr.mxu0 %v2290
        %2354 = vmatpush1.msra.mxu0 %v2289
        %2355 = vmatprep.subr.mxu0 %v2292
        %2356 = vmatpush1.msra.mxu0 %v2291
        %2357 = vmatprep.subr.mxu0 %v2294
        %2358 = vmatpush1.msra.mxu0 %v2293
        %2359 = vmatprep.subr.mxu0 %v2296
        %2360 = vmatpush1.msra.mxu0 %v2295
        %2361 = vmatprep.subr.mxu0 %v2298
        %2362 = vmatpush1.msra.mxu0 %v2297
        %2363 = vmatprep.subr.mxu0 %v2300
        %2364 = vmatpush1.msra.mxu0 %v2299
        %2365 = vmatprep.subr.mxu0 %v2302
        %2366 = vmatpush1.msra.mxu0 %v2301
        %2367 = vmatprep.subr.mxu0 %v2304
        %2368 = vmatpush1.msra.mxu0 %v2303
        %2369 = vmatprep.subr.mxu0 %v2306
        %2370 = vmatpush1.msra.mxu0 %v2305
        %2371 = vmatprep.mubr.f32.mxu0 %v477
        %2372 = vmatmul.mubr.f32.gmra.mrb[0].mxu0 %v443
        %v2373 = vpop.f32.mrb[0].mxu0
        %v2374 = vadd.f32 0.0, %v2373
        %v2375 = vpop.f32.mrb[0].mxu0
        %v2376 = vadd.f32 0.0, %v2375
        %2377 = vdwg.mxu0
        %v2379 = vsel %vm550, %v2241, 0
        %v2382 = vsel %vm554, %v2374, 0
        %v2385 = vsel %vm554, %v2376, 0
        %2387 = vmatprep.subr.mxu0 %v2385
        %2388 = vmatpush1.msra.mxu0 %v2382
        %2389 = vmatprep.subr.mxu0 0.0
        %2390 = vmatpush1.msra.mxu0 0.0
        %2391 = vmatprep.subr.mxu0 0.0
        %2392 = vmatpush1.msra.mxu0 0.0
        %2393 = vmatprep.subr.mxu0 0.0
        %2394 = vmatpush1.msra.mxu0 0.0
        %2395 = vmatprep.subr.mxu0 0.0
        %2396 = vmatpush1.msra.mxu0 0.0
        %2397 = vmatprep.subr.mxu0 0.0
        %2398 = vmatpush1.msra.mxu0 0.0
        %2399 = vmatprep.subr.mxu0 0.0
        %2400 = vmatpush1.msra.mxu0 0.0
        %2401 = vmatprep.subr.mxu0 0.0
        %2402 = vmatpush1.msra.mxu0 0.0
        %2403 = vmatprep.subr.mxu0 0.0
        %2404 = vmatpush1.msra.mxu0 0.0
        %2405 = vmatprep.subr.mxu0 0.0
        %2406 = vmatpush1.msra.mxu0 0.0
        %2407 = vmatprep.subr.mxu0 0.0
        %2408 = vmatpush1.msra.mxu0 0.0
        %2409 = vmatprep.subr.mxu0 0.0
        %2410 = vmatpush1.msra.mxu0 0.0
        %2411 = vmatprep.subr.mxu0 0.0
        %2412 = vmatpush1.msra.mxu0 0.0
        %2413 = vmatprep.subr.mxu0 0.0
        %2414 = vmatpush1.msra.mxu0 0.0
        %2415 = vmatprep.subr.mxu0 0.0
        %2416 = vmatpush1.msra.mxu0 0.0
        %2417 = vmatprep.subr.mxu0 0.0
        %2418 = vmatpush1.msra.mxu0 0.0
        %2419 = vmatprep.subr.mxu0 0.0
        %2420 = vmatpush1.msra.mxu0 0.0
        %2421 = vmatprep.subr.mxu0 0.0
        %2422 = vmatpush1.msra.mxu0 0.0
        %2423 = vmatprep.subr.mxu0 0.0
        %2424 = vmatpush1.msra.mxu0 0.0
        %2425 = vmatprep.subr.mxu0 0.0
        %2426 = vmatpush1.msra.mxu0 0.0
        %2427 = vmatprep.subr.mxu0 0.0
        %2428 = vmatpush1.msra.mxu0 0.0
        %2429 = vmatprep.subr.mxu0 0.0
        %2430 = vmatpush1.msra.mxu0 0.0
        %2431 = vmatprep.subr.mxu0 0.0
        %2432 = vmatpush1.msra.mxu0 0.0
        %2433 = vmatprep.subr.mxu0 0.0
        %2434 = vmatpush1.msra.mxu0 0.0
        %2435 = vmatprep.subr.mxu0 0.0
        %2436 = vmatpush1.msra.mxu0 0.0
        %2437 = vmatprep.subr.mxu0 0.0
        %2438 = vmatpush1.msra.mxu0 0.0
        %2439 = vmatprep.subr.mxu0 0.0
        %2440 = vmatpush1.msra.mxu0 0.0
        %2441 = vmatprep.subr.mxu0 0.0
        %2442 = vmatpush1.msra.mxu0 0.0
        %2443 = vmatprep.subr.mxu0 0.0
        %2444 = vmatpush1.msra.mxu0 0.0
        %2445 = vmatprep.subr.mxu0 0.0
        %2446 = vmatpush1.msra.mxu0 0.0
        %2447 = vmatprep.subr.mxu0 0.0
        %2448 = vmatpush1.msra.mxu0 0.0
        %2449 = vmatprep.subr.mxu0 0.0
        %2450 = vmatpush1.msra.mxu0 0.0
        %2451 = vmatprep.mubr.f32.mxu0 0.0
        %2452 = vmatmul.mubr.f32.gmra.mrb[0].mxu0 %v2379
        %v2453 = vpop.f32.mrb[0].mxu0
        %v2454 = vadd.f32 0.0, %v2453
        %v2455 = vpop.f32.mrb[0].mxu0
        %v2456 = vadd.f32 0.0, %v2455
        %2457 = vdwg.mxu0
        %v2458 = vadd.f32 %v2238, %v2454
        %v2459 = vadd.f32 %v2239, %v2456
        %s2460 = scalar_lea.vmem %s8, 28
        %v2461 = vld [vmem:[%s2460] sm:$0xf]
        %s2462 = scalar_lea.vmem [#allocation7], 3584
        %v2463 = vld [vmem:[%s2462] sm:$0xff]
        %v2464 = vld [vmem:[%s2462 + $0x8] sm:$0xff]
        %v2465 = vld [vmem:[%s2462 + $0x10] sm:$0xff]
        %v2466 = vld [vmem:[%s2462 + $0x18] sm:$0xff]
        %v2467 = vld [vmem:[%s2462 + $0x20] sm:$0xff]
        %v2468 = vld [vmem:[%s2462 + $0x28] sm:$0xff]
        %v2469 = vld [vmem:[%s2462 + $0x30] sm:$0xff]
        %v2470 = vld [vmem:[%s2462 + $0x38] sm:$0xff]
        %v2471 = vld [vmem:[%s2462 + $0x40] sm:$0xff]
        %v2472 = vld [vmem:[%s2462 + $0x48] sm:$0xff]
        %v2473 = vld [vmem:[%s2462 + $0x50] sm:$0xff]
        %v2474 = vld [vmem:[%s2462 + $0x58] sm:$0xff]
        %v2475 = vld [vmem:[%s2462 + $0x60] sm:$0xff]
        %v2476 = vld [vmem:[%s2462 + $0x68] sm:$0xff]
        %v2477 = vld [vmem:[%s2462 + $0x70] sm:$0xff]
        %v2478 = vld [vmem:[%s2462 + $0x78] sm:$0xff]
        %v2479 = vld [vmem:[%s2462 + $0x80] sm:$0xff]
        %v2480 = vld [vmem:[%s2462 + $0x88] sm:$0xff]
        %v2481 = vld [vmem:[%s2462 + $0x90] sm:$0xff]
        %v2482 = vld [vmem:[%s2462 + $0x98] sm:$0xff]
        %v2483 = vld [vmem:[%s2462 + $0xa0] sm:$0xff]
        %v2484 = vld [vmem:[%s2462 + $0xa8] sm:$0xff]
        %v2485 = vld [vmem:[%s2462 + $0xb0] sm:$0xff]
        %v2486 = vld [vmem:[%s2462 + $0xb8] sm:$0xff]
        %v2487 = vld [vmem:[%s2462 + $0xc0] sm:$0xff]
        %v2488 = vld [vmem:[%s2462 + $0xc8] sm:$0xff]
        %v2489 = vld [vmem:[%s2462 + $0xd0] sm:$0xff]
        %v2490 = vld [vmem:[%s2462 + $0xd8] sm:$0xff]
        %v2491 = vld [vmem:[%s2462 + $0xe0] sm:$0xff]
        %v2492 = vld [vmem:[%s2462 + $0xe8] sm:$0xff]
        %v2493 = vld [vmem:[%s2462 + $0xf0] sm:$0xff]
        %v2494 = vld [vmem:[%s2462 + $0xf8] sm:$0xff]
        %v2495 = vld [vmem:[%s2462 + $0x100] sm:$0xff]
        %v2496 = vld [vmem:[%s2462 + $0x108] sm:$0xff]
        %v2497 = vld [vmem:[%s2462 + $0x110] sm:$0xff]
        %v2498 = vld [vmem:[%s2462 + $0x118] sm:$0xff]
        %v2499 = vld [vmem:[%s2462 + $0x120] sm:$0xff]
        %v2500 = vld [vmem:[%s2462 + $0x128] sm:$0xff]
        %v2501 = vld [vmem:[%s2462 + $0x130] sm:$0xff]
        %v2502 = vld [vmem:[%s2462 + $0x138] sm:$0xff]
        %v2503 = vld [vmem:[%s2462 + $0x140] sm:$0xff]
        %v2504 = vld [vmem:[%s2462 + $0x148] sm:$0xff]
        %v2505 = vld [vmem:[%s2462 + $0x150] sm:$0xff]
        %v2506 = vld [vmem:[%s2462 + $0x158] sm:$0xff]
        %v2507 = vld [vmem:[%s2462 + $0x160] sm:$0xff]
        %v2508 = vld [vmem:[%s2462 + $0x168] sm:$0xff]
        %v2509 = vld [vmem:[%s2462 + $0x170] sm:$0xff]
        %v2510 = vld [vmem:[%s2462 + $0x178] sm:$0xff]
        %v2511 = vld [vmem:[%s2462 + $0x180] sm:$0xff]
        %v2512 = vld [vmem:[%s2462 + $0x188] sm:$0xff]
        %v2513 = vld [vmem:[%s2462 + $0x190] sm:$0xff]
        %v2514 = vld [vmem:[%s2462 + $0x198] sm:$0xff]
        %v2515 = vld [vmem:[%s2462 + $0x1a0] sm:$0xff]
        %v2516 = vld [vmem:[%s2462 + $0x1a8] sm:$0xff]
        %v2517 = vld [vmem:[%s2462 + $0x1b0] sm:$0xff]
        %v2518 = vld [vmem:[%s2462 + $0x1b8] sm:$0xff]
        %v2519 = vld [vmem:[%s2462 + $0x1c0] sm:$0xff]
        %v2520 = vld [vmem:[%s2462 + $0x1c8] sm:$0xff]
        %v2521 = vld [vmem:[%s2462 + $0x1d0] sm:$0xff]
        %v2522 = vld [vmem:[%s2462 + $0x1d8] sm:$0xff]
        %v2523 = vld [vmem:[%s2462 + $0x1e0] sm:$0xff]
        %v2524 = vld [vmem:[%s2462 + $0x1e8] sm:$0xff]
        %v2525 = vld [vmem:[%s2462 + $0x1f0] sm:$0xff]
        %v2526 = vld [vmem:[%s2462 + $0x1f8] sm:$0xff]
        %2527 = vmatprep.subr.mxu0 %v2464
        %2528 = vmatpush1.msra.mxu0 %v2463
        %2529 = vmatprep.subr.mxu0 %v2466
        %2530 = vmatpush1.msra.mxu0 %v2465
        %2531 = vmatprep.subr.mxu0 %v2468
        %2532 = vmatpush1.msra.mxu0 %v2467
        %2533 = vmatprep.subr.mxu0 %v2470
        %2534 = vmatpush1.msra.mxu0 %v2469
        %2535 = vmatprep.subr.mxu0 %v2472
        %2536 = vmatpush1.msra.mxu0 %v2471
        %2537 = vmatprep.subr.mxu0 %v2474
        %2538 = vmatpush1.msra.mxu0 %v2473
        %2539 = vmatprep.subr.mxu0 %v2476
        %2540 = vmatpush1.msra.mxu0 %v2475
        %2541 = vmatprep.subr.mxu0 %v2478
        %2542 = vmatpush1.msra.mxu0 %v2477
        %2543 = vmatprep.subr.mxu0 %v2480
        %2544 = vmatpush1.msra.mxu0 %v2479
        %2545 = vmatprep.subr.mxu0 %v2482
        %2546 = vmatpush1.msra.mxu0 %v2481
        %2547 = vmatprep.subr.mxu0 %v2484
        %2548 = vmatpush1.msra.mxu0 %v2483
        %2549 = vmatprep.subr.mxu0 %v2486
        %2550 = vmatpush1.msra.mxu0 %v2485
        %2551 = vmatprep.subr.mxu0 %v2488
        %2552 = vmatpush1.msra.mxu0 %v2487
        %2553 = vmatprep.subr.mxu0 %v2490
        %2554 = vmatpush1.msra.mxu0 %v2489
        %2555 = vmatprep.subr.mxu0 %v2492
        %2556 = vmatpush1.msra.mxu0 %v2491
        %2557 = vmatprep.subr.mxu0 %v2494
        %2558 = vmatpush1.msra.mxu0 %v2493
        %2559 = vmatprep.subr.mxu0 %v2496
        %2560 = vmatpush1.msra.mxu0 %v2495
        %2561 = vmatprep.subr.mxu0 %v2498
        %2562 = vmatpush1.msra.mxu0 %v2497
        %2563 = vmatprep.subr.mxu0 %v2500
        %2564 = vmatpush1.msra.mxu0 %v2499
        %2565 = vmatprep.subr.mxu0 %v2502
        %2566 = vmatpush1.msra.mxu0 %v2501
        %2567 = vmatprep.subr.mxu0 %v2504
        %2568 = vmatpush1.msra.mxu0 %v2503
        %2569 = vmatprep.subr.mxu0 %v2506
        %2570 = vmatpush1.msra.mxu0 %v2505
        %2571 = vmatprep.subr.mxu0 %v2508
        %2572 = vmatpush1.msra.mxu0 %v2507
        %2573 = vmatprep.subr.mxu0 %v2510
        %2574 = vmatpush1.msra.mxu0 %v2509
        %2575 = vmatprep.subr.mxu0 %v2512
        %2576 = vmatpush1.msra.mxu0 %v2511
        %2577 = vmatprep.subr.mxu0 %v2514
        %2578 = vmatpush1.msra.mxu0 %v2513
        %2579 = vmatprep.subr.mxu0 %v2516
        %2580 = vmatpush1.msra.mxu0 %v2515
        %2581 = vmatprep.subr.mxu0 %v2518
        %2582 = vmatpush1.msra.mxu0 %v2517
        %2583 = vmatprep.subr.mxu0 %v2520
        %2584 = vmatpush1.msra.mxu0 %v2519
        %2585 = vmatprep.subr.mxu0 %v2522
        %2586 = vmatpush1.msra.mxu0 %v2521
        %2587 = vmatprep.subr.mxu0 %v2524
        %2588 = vmatpush1.msra.mxu0 %v2523
        %2589 = vmatprep.subr.mxu0 %v2526
        %2590 = vmatpush1.msra.mxu0 %v2525
        %2591 = vmatprep.mubr.f32.mxu0 %v477
        %2592 = vmatmul.mubr.f32.gmra.mrb[0].mxu0 %v443
        %v2593 = vpop.f32.mrb[0].mxu0
        %v2594 = vadd.f32 0.0, %v2593
        %v2595 = vpop.f32.mrb[0].mxu0
        %v2596 = vadd.f32 0.0, %v2595
        %2597 = vdwg.mxu0
        %v2599 = vsel %vm550, %v2461, 0
        %v2602 = vsel %vm554, %v2594, 0
        %v2605 = vsel %vm554, %v2596, 0
        %2607 = vmatprep.subr.mxu0 %v2605
        %2608 = vmatpush1.msra.mxu0 %v2602
        %2609 = vmatprep.subr.mxu0 0.0
        %2610 = vmatpush1.msra.mxu0 0.0
        %2611 = vmatprep.subr.mxu0 0.0
        %2612 = vmatpush1.msra.mxu0 0.0
        %2613 = vmatprep.subr.mxu0 0.0
        %2614 = vmatpush1.msra.mxu0 0.0
        %2615 = vmatprep.subr.mxu0 0.0
        %2616 = vmatpush1.msra.mxu0 0.0
        %2617 = vmatprep.subr.mxu0 0.0
        %2618 = vmatpush1.msra.mxu0 0.0
        %2619 = vmatprep.subr.mxu0 0.0
        %2620 = vmatpush1.msra.mxu0 0.0
        %2621 = vmatprep.subr.mxu0 0.0
        %2622 = vmatpush1.msra.mxu0 0.0
        %2623 = vmatprep.subr.mxu0 0.0
        %2624 = vmatpush1.msra.mxu0 0.0
        %2625 = vmatprep.subr.mxu0 0.0
        %2626 = vmatpush1.msra.mxu0 0.0
        %2627 = vmatprep.subr.mxu0 0.0
        %2628 = vmatpush1.msra.mxu0 0.0
        %2629 = vmatprep.subr.mxu0 0.0
        %2630 = vmatpush1.msra.mxu0 0.0
        %2631 = vmatprep.subr.mxu0 0.0
        %2632 = vmatpush1.msra.mxu0 0.0
        %2633 = vmatprep.subr.mxu0 0.0
        %2634 = vmatpush1.msra.mxu0 0.0
        %2635 = vmatprep.subr.mxu0 0.0
        %2636 = vmatpush1.msra.mxu0 0.0
        %2637 = vmatprep.subr.mxu0 0.0
        %2638 = vmatpush1.msra.mxu0 0.0
        %2639 = vmatprep.subr.mxu0 0.0
        %2640 = vmatpush1.msra.mxu0 0.0
        %2641 = vmatprep.subr.mxu0 0.0
        %2642 = vmatpush1.msra.mxu0 0.0
        %2643 = vmatprep.subr.mxu0 0.0
        %2644 = vmatpush1.msra.mxu0 0.0
        %2645 = vmatprep.subr.mxu0 0.0
        %2646 = vmatpush1.msra.mxu0 0.0
        %2647 = vmatprep.subr.mxu0 0.0
        %2648 = vmatpush1.msra.mxu0 0.0
        %2649 = vmatprep.subr.mxu0 0.0
        %2650 = vmatpush1.msra.mxu0 0.0
        %2651 = vmatprep.subr.mxu0 0.0
        %2652 = vmatpush1.msra.mxu0 0.0
        %2653 = vmatprep.subr.mxu0 0.0
        %2654 = vmatpush1.msra.mxu0 0.0
        %2655 = vmatprep.subr.mxu0 0.0
        %2656 = vmatpush1.msra.mxu0 0.0
        %2657 = vmatprep.subr.mxu0 0.0
        %2658 = vmatpush1.msra.mxu0 0.0
        %2659 = vmatprep.subr.mxu0 0.0
        %2660 = vmatpush1.msra.mxu0 0.0
        %2661 = vmatprep.subr.mxu0 0.0
        %2662 = vmatpush1.msra.mxu0 0.0
        %2663 = vmatprep.subr.mxu0 0.0
        %2664 = vmatpush1.msra.mxu0 0.0
        %2665 = vmatprep.subr.mxu0 0.0
        %2666 = vmatpush1.msra.mxu0 0.0
        %2667 = vmatprep.subr.mxu0 0.0
        %2668 = vmatpush1.msra.mxu0 0.0
        %2669 = vmatprep.subr.mxu0 0.0
        %2670 = vmatpush1.msra.mxu0 0.0
        %2671 = vmatprep.mubr.f32.mxu0 0.0
        %2672 = vmatmul.mubr.f32.gmra.mrb[0].mxu0 %v2599
        %v2673 = vpop.f32.mrb[0].mxu0
        %v2674 = vadd.f32 0.0, %v2673
        %v2675 = vpop.f32.mrb[0].mxu0
        %v2676 = vadd.f32 0.0, %v2675
        %2677 = vdwg.mxu0
        %v2678 = vadd.f32 %v2458, %v2674
        %v2679 = vadd.f32 %v2459, %v2676
        %s2680 = scalar_lea.vmem %s8, 32
        %v2681 = vld [vmem:[%s2680] sm:$0xf]
        %s2682 = scalar_lea.vmem [#allocation7], 4096
        %v2683 = vld [vmem:[%s2682] sm:$0xff]
        %v2684 = vld [vmem:[%s2682 + $0x8] sm:$0xff]
        %v2685 = vld [vmem:[%s2682 + $0x10] sm:$0xff]
        %v2686 = vld [vmem:[%s2682 + $0x18] sm:$0xff]
        %v2687 = vld [vmem:[%s2682 + $0x20] sm:$0xff]
        %v2688 = vld [vmem:[%s2682 + $0x28] sm:$0xff]
        %v2689 = vld [vmem:[%s2682 + $0x30] sm:$0xff]
        %v2690 = vld [vmem:[%s2682 + $0x38] sm:$0xff]
        %v2691 = vld [vmem:[%s2682 + $0x40] sm:$0xff]
        %v2692 = vld [vmem:[%s2682 + $0x48] sm:$0xff]
        %v2693 = vld [vmem:[%s2682 + $0x50] sm:$0xff]
        %v2694 = vld [vmem:[%s2682 + $0x58] sm:$0xff]
        %v2695 = vld [vmem:[%s2682 + $0x60] sm:$0xff]
        %v2696 = vld [vmem:[%s2682 + $0x68] sm:$0xff]
        %v2697 = vld [vmem:[%s2682 + $0x70] sm:$0xff]
        %v2698 = vld [vmem:[%s2682 + $0x78] sm:$0xff]
        %v2699 = vld [vmem:[%s2682 + $0x80] sm:$0xff]
        %v2700 = vld [vmem:[%s2682 + $0x88] sm:$0xff]
        %v2701 = vld [vmem:[%s2682 + $0x90] sm:$0xff]
        %v2702 = vld [vmem:[%s2682 + $0x98] sm:$0xff]
        %v2703 = vld [vmem:[%s2682 + $0xa0] sm:$0xff]
        %v2704 = vld [vmem:[%s2682 + $0xa8] sm:$0xff]
        %v2705 = vld [vmem:[%s2682 + $0xb0] sm:$0xff]
        %v2706 = vld [vmem:[%s2682 + $0xb8] sm:$0xff]
        %v2707 = vld [vmem:[%s2682 + $0xc0] sm:$0xff]
        %v2708 = vld [vmem:[%s2682 + $0xc8] sm:$0xff]
        %v2709 = vld [vmem:[%s2682 + $0xd0] sm:$0xff]
        %v2710 = vld [vmem:[%s2682 + $0xd8] sm:$0xff]
        %v2711 = vld [vmem:[%s2682 + $0xe0] sm:$0xff]
        %v2712 = vld [vmem:[%s2682 + $0xe8] sm:$0xff]
        %v2713 = vld [vmem:[%s2682 + $0xf0] sm:$0xff]
        %v2714 = vld [vmem:[%s2682 + $0xf8] sm:$0xff]
        %v2715 = vld [vmem:[%s2682 + $0x100] sm:$0xff]
        %v2716 = vld [vmem:[%s2682 + $0x108] sm:$0xff]
        %v2717 = vld [vmem:[%s2682 + $0x110] sm:$0xff]
        %v2718 = vld [vmem:[%s2682 + $0x118] sm:$0xff]
        %v2719 = vld [vmem:[%s2682 + $0x120] sm:$0xff]
        %v2720 = vld [vmem:[%s2682 + $0x128] sm:$0xff]
        %v2721 = vld [vmem:[%s2682 + $0x130] sm:$0xff]
        %v2722 = vld [vmem:[%s2682 + $0x138] sm:$0xff]
        %v2723 = vld [vmem:[%s2682 + $0x140] sm:$0xff]
        %v2724 = vld [vmem:[%s2682 + $0x148] sm:$0xff]
        %v2725 = vld [vmem:[%s2682 + $0x150] sm:$0xff]
        %v2726 = vld [vmem:[%s2682 + $0x158] sm:$0xff]
        %v2727 = vld [vmem:[%s2682 + $0x160] sm:$0xff]
        %v2728 = vld [vmem:[%s2682 + $0x168] sm:$0xff]
        %v2729 = vld [vmem:[%s2682 + $0x170] sm:$0xff]
        %v2730 = vld [vmem:[%s2682 + $0x178] sm:$0xff]
        %v2731 = vld [vmem:[%s2682 + $0x180] sm:$0xff]
        %v2732 = vld [vmem:[%s2682 + $0x188] sm:$0xff]
        %v2733 = vld [vmem:[%s2682 + $0x190] sm:$0xff]
        %v2734 = vld [vmem:[%s2682 + $0x198] sm:$0xff]
        %v2735 = vld [vmem:[%s2682 + $0x1a0] sm:$0xff]
        %v2736 = vld [vmem:[%s2682 + $0x1a8] sm:$0xff]
        %v2737 = vld [vmem:[%s2682 + $0x1b0] sm:$0xff]
        %v2738 = vld [vmem:[%s2682 + $0x1b8] sm:$0xff]
        %v2739 = vld [vmem:[%s2682 + $0x1c0] sm:$0xff]
        %v2740 = vld [vmem:[%s2682 + $0x1c8] sm:$0xff]
        %v2741 = vld [vmem:[%s2682 + $0x1d0] sm:$0xff]
        %v2742 = vld [vmem:[%s2682 + $0x1d8] sm:$0xff]
        %v2743 = vld [vmem:[%s2682 + $0x1e0] sm:$0xff]
        %v2744 = vld [vmem:[%s2682 + $0x1e8] sm:$0xff]
        %v2745 = vld [vmem:[%s2682 + $0x1f0] sm:$0xff]
        %v2746 = vld [vmem:[%s2682 + $0x1f8] sm:$0xff]
        %2747 = vmatprep.subr.mxu0 %v2684
        %2748 = vmatpush1.msra.mxu0 %v2683
        %2749 = vmatprep.subr.mxu0 %v2686
        %2750 = vmatpush1.msra.mxu0 %v2685
        %2751 = vmatprep.subr.mxu0 %v2688
        %2752 = vmatpush1.msra.mxu0 %v2687
        %2753 = vmatprep.subr.mxu0 %v2690
        %2754 = vmatpush1.msra.mxu0 %v2689
        %2755 = vmatprep.subr.mxu0 %v2692
        %2756 = vmatpush1.msra.mxu0 %v2691
        %2757 = vmatprep.subr.mxu0 %v2694
        %2758 = vmatpush1.msra.mxu0 %v2693
        %2759 = vmatprep.subr.mxu0 %v2696
        %2760 = vmatpush1.msra.mxu0 %v2695
        %2761 = vmatprep.subr.mxu0 %v2698
        %2762 = vmatpush1.msra.mxu0 %v2697
        %2763 = vmatprep.subr.mxu0 %v2700
        %2764 = vmatpush1.msra.mxu0 %v2699
        %2765 = vmatprep.subr.mxu0 %v2702
        %2766 = vmatpush1.msra.mxu0 %v2701
        %2767 = vmatprep.subr.mxu0 %v2704
        %2768 = vmatpush1.msra.mxu0 %v2703
        %2769 = vmatprep.subr.mxu0 %v2706
        %2770 = vmatpush1.msra.mxu0 %v2705
        %2771 = vmatprep.subr.mxu0 %v2708
        %2772 = vmatpush1.msra.mxu0 %v2707
        %2773 = vmatprep.subr.mxu0 %v2710
        %2774 = vmatpush1.msra.mxu0 %v2709
        %2775 = vmatprep.subr.mxu0 %v2712
        %2776 = vmatpush1.msra.mxu0 %v2711
        %2777 = vmatprep.subr.mxu0 %v2714
        %2778 = vmatpush1.msra.mxu0 %v2713
        %2779 = vmatprep.subr.mxu0 %v2716
        %2780 = vmatpush1.msra.mxu0 %v2715
        %2781 = vmatprep.subr.mxu0 %v2718
        %2782 = vmatpush1.msra.mxu0 %v2717
        %2783 = vmatprep.subr.mxu0 %v2720
        %2784 = vmatpush1.msra.mxu0 %v2719
        %2785 = vmatprep.subr.mxu0 %v2722
        %2786 = vmatpush1.msra.mxu0 %v2721
        %2787 = vmatprep.subr.mxu0 %v2724
        %2788 = vmatpush1.msra.mxu0 %v2723
        %2789 = vmatprep.subr.mxu0 %v2726
        %2790 = vmatpush1.msra.mxu0 %v2725
        %2791 = vmatprep.subr.mxu0 %v2728
        %2792 = vmatpush1.msra.mxu0 %v2727
        %2793 = vmatprep.subr.mxu0 %v2730
        %2794 = vmatpush1.msra.mxu0 %v2729
        %2795 = vmatprep.subr.mxu0 %v2732
        %2796 = vmatpush1.msra.mxu0 %v2731
        %2797 = vmatprep.subr.mxu0 %v2734
        %2798 = vmatpush1.msra.mxu0 %v2733
        %2799 = vmatprep.subr.mxu0 %v2736
        %2800 = vmatpush1.msra.mxu0 %v2735
        %2801 = vmatprep.subr.mxu0 %v2738
        %2802 = vmatpush1.msra.mxu0 %v2737
        %2803 = vmatprep.subr.mxu0 %v2740
        %2804 = vmatpush1.msra.mxu0 %v2739
        %2805 = vmatprep.subr.mxu0 %v2742
        %2806 = vmatpush1.msra.mxu0 %v2741
        %2807 = vmatprep.subr.mxu0 %v2744
        %2808 = vmatpush1.msra.mxu0 %v2743
        %2809 = vmatprep.subr.mxu0 %v2746
        %2810 = vmatpush1.msra.mxu0 %v2745
        %2811 = vmatprep.mubr.f32.mxu0 %v477
        %2812 = vmatmul.mubr.f32.gmra.mrb[0].mxu0 %v443
        %v2813 = vpop.f32.mrb[0].mxu0
        %v2814 = vadd.f32 0.0, %v2813
        %v2815 = vpop.f32.mrb[0].mxu0
        %v2816 = vadd.f32 0.0, %v2815
        %2817 = vdwg.mxu0
        %v2819 = vsel %vm550, %v2681, 0
        %v2822 = vsel %vm554, %v2814, 0
        %v2825 = vsel %vm554, %v2816, 0
        %2827 = vmatprep.subr.mxu0 %v2825
        %2828 = vmatpush1.msra.mxu0 %v2822
        %2829 = vmatprep.subr.mxu0 0.0
        %2830 = vmatpush1.msra.mxu0 0.0
        %2831 = vmatprep.subr.mxu0 0.0
        %2832 = vmatpush1.msra.mxu0 0.0
        %2833 = vmatprep.subr.mxu0 0.0
        %2834 = vmatpush1.msra.mxu0 0.0
        %2835 = vmatprep.subr.mxu0 0.0
        %2836 = vmatpush1.msra.mxu0 0.0
        %2837 = vmatprep.subr.mxu0 0.0
        %2838 = vmatpush1.msra.mxu0 0.0
        %2839 = vmatprep.subr.mxu0 0.0
        %2840 = vmatpush1.msra.mxu0 0.0
        %2841 = vmatprep.subr.mxu0 0.0
        %2842 = vmatpush1.msra.mxu0 0.0
        %2843 = vmatprep.subr.mxu0 0.0
        %2844 = vmatpush1.msra.mxu0 0.0
        %2845 = vmatprep.subr.mxu0 0.0
        %2846 = vmatpush1.msra.mxu0 0.0
        %2847 = vmatprep.subr.mxu0 0.0
        %2848 = vmatpush1.msra.mxu0 0.0
        %2849 = vmatprep.subr.mxu0 0.0
        %2850 = vmatpush1.msra.mxu0 0.0
        %2851 = vmatprep.subr.mxu0 0.0
        %2852 = vmatpush1.msra.mxu0 0.0
        %2853 = vmatprep.subr.mxu0 0.0
        %2854 = vmatpush1.msra.mxu0 0.0
        %2855 = vmatprep.subr.mxu0 0.0
        %2856 = vmatpush1.msra.mxu0 0.0
        %2857 = vmatprep.subr.mxu0 0.0
        %2858 = vmatpush1.msra.mxu0 0.0
        %2859 = vmatprep.subr.mxu0 0.0
        %2860 = vmatpush1.msra.mxu0 0.0
        %2861 = vmatprep.subr.mxu0 0.0
        %2862 = vmatpush1.msra.mxu0 0.0
        %2863 = vmatprep.subr.mxu0 0.0
        %2864 = vmatpush1.msra.mxu0 0.0
        %2865 = vmatprep.subr.mxu0 0.0
        %2866 = vmatpush1.msra.mxu0 0.0
        %2867 = vmatprep.subr.mxu0 0.0
        %2868 = vmatpush1.msra.mxu0 0.0
        %2869 = vmatprep.subr.mxu0 0.0
        %2870 = vmatpush1.msra.mxu0 0.0
        %2871 = vmatprep.subr.mxu0 0.0
        %2872 = vmatpush1.msra.mxu0 0.0
        %2873 = vmatprep.subr.mxu0 0.0
        %2874 = vmatpush1.msra.mxu0 0.0
        %2875 = vmatprep.subr.mxu0 0.0
        %2876 = vmatpush1.msra.mxu0 0.0
        %2877 = vmatprep.subr.mxu0 0.0
        %2878 = vmatpush1.msra.mxu0 0.0
        %2879 = vmatprep.subr.mxu0 0.0
        %2880 = vmatpush1.msra.mxu0 0.0
        %2881 = vmatprep.subr.mxu0 0.0
        %2882 = vmatpush1.msra.mxu0 0.0
        %2883 = vmatprep.subr.mxu0 0.0
        %2884 = vmatpush1.msra.mxu0 0.0
        %2885 = vmatprep.subr.mxu0 0.0
        %2886 = vmatpush1.msra.mxu0 0.0
        %2887 = vmatprep.subr.mxu0 0.0
        %2888 = vmatpush1.msra.mxu0 0.0
        %2889 = vmatprep.subr.mxu0 0.0
        %2890 = vmatpush1.msra.mxu0 0.0
        %2891 = vmatprep.mubr.f32.mxu0 0.0
        %2892 = vmatmul.mubr.f32.gmra.mrb[0].mxu0 %v2819
        %v2893 = vpop.f32.mrb[0].mxu0
        %v2894 = vadd.f32 0.0, %v2893
        %v2895 = vpop.f32.mrb[0].mxu0
        %v2896 = vadd.f32 0.0, %v2895
        %2897 = vdwg.mxu0
        %v2898 = vadd.f32 %v2678, %v2894
        %v2899 = vadd.f32 %v2679, %v2896
        %v2900 = vmul.f32 %v2898, %v923
        %v2901 = vmul.f32 %v2899, %v925
        %v2902 = vld [vmem:[%s9] sm:$0xf]
        %2903 = vmatprep.subr.mxu0 %v928
        %2904 = vmatpush1.msra.mxu0 %v927
        %2905 = vmatprep.subr.mxu0 %v930
        %2906 = vmatpush1.msra.mxu0 %v929
        %2907 = vmatprep.subr.mxu0 %v932
        %2908 = vmatpush1.msra.mxu0 %v931
        %2909 = vmatprep.subr.mxu0 %v934
        %2910 = vmatpush1.msra.mxu0 %v933
        %2911 = vmatprep.subr.mxu0 %v936
        %2912 = vmatpush1.msra.mxu0 %v935
        %2913 = vmatprep.subr.mxu0 %v938
        %2914 = vmatpush1.msra.mxu0 %v937
        %2915 = vmatprep.subr.mxu0 %v940
        %2916 = vmatpush1.msra.mxu0 %v939
        %2917 = vmatprep.subr.mxu0 %v942
        %2918 = vmatpush1.msra.mxu0 %v941
        %2919 = vmatprep.subr.mxu0 %v944
        %2920 = vmatpush1.msra.mxu0 %v943
        %2921 = vmatprep.subr.mxu0 %v946
        %2922 = vmatpush1.msra.mxu0 %v945
        %2923 = vmatprep.subr.mxu0 %v948
        %2924 = vmatpush1.msra.mxu0 %v947
        %2925 = vmatprep.subr.mxu0 %v950
        %2926 = vmatpush1.msra.mxu0 %v949
        %2927 = vmatprep.subr.mxu0 %v952
        %2928 = vmatpush1.msra.mxu0 %v951
        %2929 = vmatprep.subr.mxu0 %v954
        %2930 = vmatpush1.msra.mxu0 %v953
        %2931 = vmatprep.subr.mxu0 %v956
        %2932 = vmatpush1.msra.mxu0 %v955
        %2933 = vmatprep.subr.mxu0 %v958
        %2934 = vmatpush1.msra.mxu0 %v957
        %2935 = vmatprep.subr.mxu0 %v960
        %2936 = vmatpush1.msra.mxu0 %v959
        %2937 = vmatprep.subr.mxu0 %v962
        %2938 = vmatpush1.msra.mxu0 %v961
        %2939 = vmatprep.subr.mxu0 %v964
        %2940 = vmatpush1.msra.mxu0 %v963
        %2941 = vmatprep.subr.mxu0 %v966
        %2942 = vmatpush1.msra.mxu0 %v965
        %2943 = vmatprep.subr.mxu0 %v968
        %2944 = vmatpush1.msra.mxu0 %v967
        %2945 = vmatprep.subr.mxu0 %v970
        %2946 = vmatpush1.msra.mxu0 %v969
        %2947 = vmatprep.subr.mxu0 %v972
        %2948 = vmatpush1.msra.mxu0 %v971
        %2949 = vmatprep.subr.mxu0 %v974
        %2950 = vmatpush1.msra.mxu0 %v973
        %2951 = vmatprep.subr.mxu0 %v976
        %2952 = vmatpush1.msra.mxu0 %v975
        %2953 = vmatprep.subr.mxu0 %v978
        %2954 = vmatpush1.msra.mxu0 %v977
        %2955 = vmatprep.subr.mxu0 %v980
        %2956 = vmatpush1.msra.mxu0 %v979
        %2957 = vmatprep.subr.mxu0 %v982
        %2958 = vmatpush1.msra.mxu0 %v981
        %2959 = vmatprep.subr.mxu0 %v984
        %2960 = vmatpush1.msra.mxu0 %v983
        %2961 = vmatprep.subr.mxu0 %v986
        %2962 = vmatpush1.msra.mxu0 %v985
        %2963 = vmatprep.subr.mxu0 %v988
        %2964 = vmatpush1.msra.mxu0 %v987
        %2965 = vmatprep.subr.mxu0 %v990
        %2966 = vmatpush1.msra.mxu0 %v989
        %2967 = vmatprep.mubr.f32.mxu0 %v2901
        %2968 = vmatmul.mubr.f32.gmra.mrb[0].mxu0 %v2900
        %v2969 = vpop.f32.mrb[0].mxu0
        %v2970 = vadd.f32 0.0, %v2969
        %v2971 = vpop.f32.mrb[0].mxu0
        %v2972 = vadd.f32 0.0, %v2971
        %2973 = vdwg.mxu0
        %s2974 = scalar_lea.vmem %s9, 4
        %v2975 = vld [vmem:[%s2974] sm:$0xf]
        %2976 = vmatprep.subr.mxu0 %v1066
        %2977 = vmatpush1.msra.mxu0 %v1065
        %2978 = vmatprep.subr.mxu0 %v1068
        %2979 = vmatpush1.msra.mxu0 %v1067
        %2980 = vmatprep.subr.mxu0 %v1070
        %2981 = vmatpush1.msra.mxu0 %v1069
        %2982 = vmatprep.subr.mxu0 %v1072
        %2983 = vmatpush1.msra.mxu0 %v1071
        %2984 = vmatprep.subr.mxu0 %v1074
        %2985 = vmatpush1.msra.mxu0 %v1073
        %2986 = vmatprep.subr.mxu0 %v1076
        %2987 = vmatpush1.msra.mxu0 %v1075
        %2988 = vmatprep.subr.mxu0 %v1078
        %2989 = vmatpush1.msra.mxu0 %v1077
        %2990 = vmatprep.subr.mxu0 %v1080
        %2991 = vmatpush1.msra.mxu0 %v1079
        %2992 = vmatprep.subr.mxu0 %v1082
        %2993 = vmatpush1.msra.mxu0 %v1081
        %2994 = vmatprep.subr.mxu0 %v1084
        %2995 = vmatpush1.msra.mxu0 %v1083
        %2996 = vmatprep.subr.mxu0 %v1086
        %2997 = vmatpush1.msra.mxu0 %v1085
        %2998 = vmatprep.subr.mxu0 %v1088
        %2999 = vmatpush1.msra.mxu0 %v1087
        %3000 = vmatprep.subr.mxu0 %v1090
        %3001 = vmatpush1.msra.mxu0 %v1089
        %3002 = vmatprep.subr.mxu0 %v1092
        %3003 = vmatpush1.msra.mxu0 %v1091
        %3004 = vmatprep.subr.mxu0 %v1094
        %3005 = vmatpush1.msra.mxu0 %v1093
        %3006 = vmatprep.subr.mxu0 %v1096
        %3007 = vmatpush1.msra.mxu0 %v1095
        %3008 = vmatprep.subr.mxu0 %v1098
        %3009 = vmatpush1.msra.mxu0 %v1097
        %3010 = vmatprep.subr.mxu0 %v1100
        %3011 = vmatpush1.msra.mxu0 %v1099
        %3012 = vmatprep.subr.mxu0 %v1102
        %3013 = vmatpush1.msra.mxu0 %v1101
        %3014 = vmatprep.subr.mxu0 %v1104
        %3015 = vmatpush1.msra.mxu0 %v1103
        %3016 = vmatprep.subr.mxu0 %v1106
        %3017 = vmatpush1.msra.mxu0 %v1105
        %3018 = vmatprep.subr.mxu0 %v1108
        %3019 = vmatpush1.msra.mxu0 %v1107
        %3020 = vmatprep.subr.mxu0 %v1110
        %3021 = vmatpush1.msra.mxu0 %v1109
        %3022 = vmatprep.subr.mxu0 %v1112
        %3023 = vmatpush1.msra.mxu0 %v1111
        %3024 = vmatprep.subr.mxu0 %v1114
        %3025 = vmatpush1.msra.mxu0 %v1113
        %3026 = vmatprep.subr.mxu0 %v1116
        %3027 = vmatpush1.msra.mxu0 %v1115
        %3028 = vmatprep.subr.mxu0 %v1118
        %3029 = vmatpush1.msra.mxu0 %v1117
        %3030 = vmatprep.subr.mxu0 %v1120
        %3031 = vmatpush1.msra.mxu0 %v1119
        %3032 = vmatprep.subr.mxu0 %v1122
        %3033 = vmatpush1.msra.mxu0 %v1121
        %3034 = vmatprep.subr.mxu0 %v1124
        %3035 = vmatpush1.msra.mxu0 %v1123
        %3036 = vmatprep.subr.mxu0 %v1126
        %3037 = vmatpush1.msra.mxu0 %v1125
        %3038 = vmatprep.subr.mxu0 %v1128
        %3039 = vmatpush1.msra.mxu0 %v1127
        %3040 = vmatprep.mubr.f32.mxu0 %v2901
        %3041 = vmatmul.mubr.f32.gmra.mrb[0].mxu0 %v2900
        %v3042 = vpop.f32.mrb[0].mxu0
        %v3043 = vadd.f32 0.0, %v3042
        %v3044 = vpop.f32.mrb[0].mxu0
        %v3045 = vadd.f32 0.0, %v3044
        %3046 = vdwg.mxu0
        %v3048 = vsel %vm550, %v2975, 0
        %v3051 = vsel %vm554, %v3043, 0
        %v3054 = vsel %vm554, %v3045, 0
        %3056 = vmatprep.subr.mxu0 %v3054
        %3057 = vmatpush1.msra.mxu0 %v3051
        %3058 = vmatprep.subr.mxu0 0.0
        %3059 = vmatpush1.msra.mxu0 0.0
        %3060 = vmatprep.subr.mxu0 0.0
        %3061 = vmatpush1.msra.mxu0 0.0
        %3062 = vmatprep.subr.mxu0 0.0
        %3063 = vmatpush1.msra.mxu0 0.0
        %3064 = vmatprep.subr.mxu0 0.0
        %3065 = vmatpush1.msra.mxu0 0.0
        %3066 = vmatprep.subr.mxu0 0.0
        %3067 = vmatpush1.msra.mxu0 0.0
        %3068 = vmatprep.subr.mxu0 0.0
        %3069 = vmatpush1.msra.mxu0 0.0
        %3070 = vmatprep.subr.mxu0 0.0
        %3071 = vmatpush1.msra.mxu0 0.0
        %3072 = vmatprep.subr.mxu0 0.0
        %3073 = vmatpush1.msra.mxu0 0.0
        %3074 = vmatprep.subr.mxu0 0.0
        %3075 = vmatpush1.msra.mxu0 0.0
        %3076 = vmatprep.subr.mxu0 0.0
        %3077 = vmatpush1.msra.mxu0 0.0
        %3078 = vmatprep.subr.mxu0 0.0
        %3079 = vmatpush1.msra.mxu0 0.0
        %3080 = vmatprep.subr.mxu0 0.0
        %3081 = vmatpush1.msra.mxu0 0.0
        %3082 = vmatprep.subr.mxu0 0.0
        %3083 = vmatpush1.msra.mxu0 0.0
        %3084 = vmatprep.subr.mxu0 0.0
        %3085 = vmatpush1.msra.mxu0 0.0
        %3086 = vmatprep.subr.mxu0 0.0
        %3087 = vmatpush1.msra.mxu0 0.0
        %3088 = vmatprep.subr.mxu0 0.0
        %3089 = vmatpush1.msra.mxu0 0.0
        %3090 = vmatprep.subr.mxu0 0.0
        %3091 = vmatpush1.msra.mxu0 0.0
        %3092 = vmatprep.subr.mxu0 0.0
        %3093 = vmatpush1.msra.mxu0 0.0
        %3094 = vmatprep.subr.mxu0 0.0
        %3095 = vmatpush1.msra.mxu0 0.0
        %3096 = vmatprep.subr.mxu0 0.0
        %3097 = vmatpush1.msra.mxu0 0.0
        %3098 = vmatprep.subr.mxu0 0.0
        %3099 = vmatpush1.msra.mxu0 0.0
        %3100 = vmatprep.subr.mxu0 0.0
        %3101 = vmatpush1.msra.mxu0 0.0
        %3102 = vmatprep.subr.mxu0 0.0
        %3103 = vmatpush1.msra.mxu0 0.0
        %3104 = vmatprep.subr.mxu0 0.0
        %3105 = vmatpush1.msra.mxu0 0.0
        %3106 = vmatprep.subr.mxu0 0.0
        %3107 = vmatpush1.msra.mxu0 0.0
        %3108 = vmatprep.subr.mxu0 0.0
        %3109 = vmatpush1.msra.mxu0 0.0
        %3110 = vmatprep.subr.mxu0 0.0
        %3111 = vmatpush1.msra.mxu0 0.0
        %3112 = vmatprep.subr.mxu0 0.0
        %3113 = vmatpush1.msra.mxu0 0.0
        %3114 = vmatprep.subr.mxu0 0.0
        %3115 = vmatpush1.msra.mxu0 0.0
        %3116 = vmatprep.subr.mxu0 0.0
        %3117 = vmatpush1.msra.mxu0 0.0
        %3118 = vmatprep.subr.mxu0 0.0
        %3119 = vmatpush1.msra.mxu0 0.0
        %3120 = vmatprep.mubr.f32.mxu0 0.0
        %3121 = vmatmul.mubr.f32.gmra.mrb[0].mxu0 %v3048
        %v3122 = vpop.f32.mrb[0].mxu0
        %v3123 = vadd.f32 0.0, %v3122
        %v3124 = vpop.f32.mrb[0].mxu0
        %v3125 = vadd.f32 0.0, %v3124
        %3126 = vdwg.mxu0
        %v3128 = vsel %vm550, %v2902, 0
        %v3131 = vsel %vm554, %v2970, 0
        %v3134 = vsel %vm554, %v2972, 0
        %3136 = vmatprep.subr.mxu0 %v3134
        %3137 = vmatpush1.msra.mxu0 %v3131
        %3138 = vmatprep.subr.mxu0 0.0
        %3139 = vmatpush1.msra.mxu0 0.0
        %3140 = vmatprep.subr.mxu0 0.0
        %3141 = vmatpush1.msra.mxu0 0.0
        %3142 = vmatprep.subr.mxu0 0.0
        %3143 = vmatpush1.msra.mxu0 0.0
        %3144 = vmatprep.subr.mxu0 0.0
        %3145 = vmatpush1.msra.mxu0 0.0
        %3146 = vmatprep.subr.mxu0 0.0
        %3147 = vmatpush1.msra.mxu0 0.0
        %3148 = vmatprep.subr.mxu0 0.0
        %3149 = vmatpush1.msra.mxu0 0.0
        %3150 = vmatprep.subr.mxu0 0.0
        %3151 = vmatpush1.msra.mxu0 0.0
        %3152 = vmatprep.subr.mxu0 0.0
        %3153 = vmatpush1.msra.mxu0 0.0
        %3154 = vmatprep.subr.mxu0 0.0
        %3155 = vmatpush1.msra.mxu0 0.0
        %3156 = vmatprep.subr.mxu0 0.0
        %3157 = vmatpush1.msra.mxu0 0.0
        %3158 = vmatprep.subr.mxu0 0.0
        %3159 = vmatpush1.msra.mxu0 0.0
        %3160 = vmatprep.subr.mxu0 0.0
        %3161 = vmatpush1.msra.mxu0 0.0
        %3162 = vmatprep.subr.mxu0 0.0
        %3163 = vmatpush1.msra.mxu0 0.0
        %3164 = vmatprep.subr.mxu0 0.0
        %3165 = vmatpush1.msra.mxu0 0.0
        %3166 = vmatprep.subr.mxu0 0.0
        %3167 = vmatpush1.msra.mxu0 0.0
        %3168 = vmatprep.subr.mxu0 0.0
        %3169 = vmatpush1.msra.mxu0 0.0
        %3170 = vmatprep.subr.mxu0 0.0
        %3171 = vmatpush1.msra.mxu0 0.0
        %3172 = vmatprep.subr.mxu0 0.0
        %3173 = vmatpush1.msra.mxu0 0.0
        %3174 = vmatprep.subr.mxu0 0.0
        %3175 = vmatpush1.msra.mxu0 0.0
        %3176 = vmatprep.subr.mxu0 0.0
        %3177 = vmatpush1.msra.mxu0 0.0
        %3178 = vmatprep.subr.mxu0 0.0
        %3179 = vmatpush1.msra.mxu0 0.0
        %3180 = vmatprep.subr.mxu0 0.0
        %3181 = vmatpush1.msra.mxu0 0.0
        %3182 = vmatprep.subr.mxu0 0.0
        %3183 = vmatpush1.msra.mxu0 0.0
        %3184 = vmatprep.subr.mxu0 0.0
        %3185 = vmatpush1.msra.mxu0 0.0
        %3186 = vmatprep.subr.mxu0 0.0
        %3187 = vmatpush1.msra.mxu0 0.0
        %3188 = vmatprep.subr.mxu0 0.0
        %3189 = vmatpush1.msra.mxu0 0.0
        %3190 = vmatprep.subr.mxu0 0.0
        %3191 = vmatpush1.msra.mxu0 0.0
        %3192 = vmatprep.subr.mxu0 0.0
        %3193 = vmatpush1.msra.mxu0 0.0
        %3194 = vmatprep.subr.mxu0 0.0
        %3195 = vmatpush1.msra.mxu0 0.0
        %3196 = vmatprep.subr.mxu0 0.0
        %3197 = vmatpush1.msra.mxu0 0.0
        %3198 = vmatprep.subr.mxu0 0.0
        %3199 = vmatpush1.msra.mxu0 0.0
        %3200 = vmatprep.mubr.f32.mxu0 0.0
        %3201 = vmatmul.mubr.f32.gmra.mrb[0].mxu0 %v3128
        %v3202 = vpop.f32.mrb[0].mxu0
        %v3203 = vadd.f32 %v3123, %v3202
        %v3204 = vpop.f32.mrb[0].mxu0
        %v3205 = vadd.f32 %v3125, %v3204
        %3206 = vdwg.mxu0
        %s3207 = scalar_lea.vmem %s9, 8
        %v3208 = vld [vmem:[%s3207] sm:$0xf]
        %3209 = vmatprep.subr.mxu0 %v1364
        %3210 = vmatpush1.msra.mxu0 %v1363
        %3211 = vmatprep.subr.mxu0 %v1366
        %3212 = vmatpush1.msra.mxu0 %v1365
        %3213 = vmatprep.subr.mxu0 %v1368
        %3214 = vmatpush1.msra.mxu0 %v1367
        %3215 = vmatprep.subr.mxu0 %v1370
        %3216 = vmatpush1.msra.mxu0 %v1369
        %3217 = vmatprep.subr.mxu0 %v1372
        %3218 = vmatpush1.msra.mxu0 %v1371
        %3219 = vmatprep.subr.mxu0 %v1374
        %3220 = vmatpush1.msra.mxu0 %v1373
        %3221 = vmatprep.subr.mxu0 %v1376
        %3222 = vmatpush1.msra.mxu0 %v1375
        %3223 = vmatprep.subr.mxu0 %v1378
        %3224 = vmatpush1.msra.mxu0 %v1377
        %3225 = vmatprep.subr.mxu0 %v1380
        %3226 = vmatpush1.msra.mxu0 %v1379
        %3227 = vmatprep.subr.mxu0 %v1382
        %3228 = vmatpush1.msra.mxu0 %v1381
        %3229 = vmatprep.subr.mxu0 %v1384
        %3230 = vmatpush1.msra.mxu0 %v1383
        %3231 = vmatprep.subr.mxu0 %v1386
        %3232 = vmatpush1.msra.mxu0 %v1385
        %3233 = vmatprep.subr.mxu0 %v1388
        %3234 = vmatpush1.msra.mxu0 %v1387
        %3235 = vmatprep.subr.mxu0 %v1390
        %3236 = vmatpush1.msra.mxu0 %v1389
        %3237 = vmatprep.subr.mxu0 %v1392
        %3238 = vmatpush1.msra.mxu0 %v1391
        %3239 = vmatprep.subr.mxu0 %v1394
        %3240 = vmatpush1.msra.mxu0 %v1393
        %3241 = vmatprep.subr.mxu0 %v1396
        %3242 = vmatpush1.msra.mxu0 %v1395
        %3243 = vmatprep.subr.mxu0 %v1398
        %3244 = vmatpush1.msra.mxu0 %v1397
        %3245 = vmatprep.subr.mxu0 %v1400
        %3246 = vmatpush1.msra.mxu0 %v1399
        %3247 = vmatprep.subr.mxu0 %v1402
        %3248 = vmatpush1.msra.mxu0 %v1401
        %3249 = vmatprep.subr.mxu0 %v1404
        %3250 = vmatpush1.msra.mxu0 %v1403
        %3251 = vmatprep.subr.mxu0 %v1406
        %3252 = vmatpush1.msra.mxu0 %v1405
        %3253 = vmatprep.subr.mxu0 %v1408
        %3254 = vmatpush1.msra.mxu0 %v1407
        %3255 = vmatprep.subr.mxu0 %v1410
        %3256 = vmatpush1.msra.mxu0 %v1409
        %3257 = vmatprep.subr.mxu0 %v1412
        %3258 = vmatpush1.msra.mxu0 %v1411
        %3259 = vmatprep.subr.mxu0 %v1414
        %3260 = vmatpush1.msra.mxu0 %v1413
        %3261 = vmatprep.subr.mxu0 %v1416
        %3262 = vmatpush1.msra.mxu0 %v1415
        %3263 = vmatprep.subr.mxu0 %v1418
        %3264 = vmatpush1.msra.mxu0 %v1417
        %3265 = vmatprep.subr.mxu0 %v1420
        %3266 = vmatpush1.msra.mxu0 %v1419
        %3267 = vmatprep.subr.mxu0 %v1422
        %3268 = vmatpush1.msra.mxu0 %v1421
        %3269 = vmatprep.subr.mxu0 %v1424
        %3270 = vmatpush1.msra.mxu0 %v1423
        %3271 = vmatprep.subr.mxu0 %v1426
        %3272 = vmatpush1.msra.mxu0 %v1425
        %3273 = vmatprep.mubr.f32.mxu0 %v2901
        %3274 = vmatmul.mubr.f32.gmra.mrb[0].mxu0 %v2900
        %v3275 = vpop.f32.mrb[0].mxu0
        %v3276 = vadd.f32 0.0, %v3275
        %v3277 = vpop.f32.mrb[0].mxu0
        %v3278 = vadd.f32 0.0, %v3277
        %3279 = vdwg.mxu0
        %v3281 = vsel %vm550, %v3208, 0
        %v3284 = vsel %vm554, %v3276, 0
        %v3287 = vsel %vm554, %v3278, 0
        %3289 = vmatprep.subr.mxu0 %v3287
        %3290 = vmatpush1.msra.mxu0 %v3284
        %3291 = vmatprep.subr.mxu0 0.0
        %3292 = vmatpush1.msra.mxu0 0.0
        %3293 = vmatprep.subr.mxu0 0.0
        %3294 = vmatpush1.msra.mxu0 0.0
        %3295 = vmatprep.subr.mxu0 0.0
        %3296 = vmatpush1.msra.mxu0 0.0
        %3297 = vmatprep.subr.mxu0 0.0
        %3298 = vmatpush1.msra.mxu0 0.0
        %3299 = vmatprep.subr.mxu0 0.0
        %3300 = vmatpush1.msra.mxu0 0.0
        %3301 = vmatprep.subr.mxu0 0.0
        %3302 = vmatpush1.msra.mxu0 0.0
        %3303 = vmatprep.subr.mxu0 0.0
        %3304 = vmatpush1.msra.mxu0 0.0
        %3305 = vmatprep.subr.mxu0 0.0
        %3306 = vmatpush1.msra.mxu0 0.0
        %3307 = vmatprep.subr.mxu0 0.0
        %3308 = vmatpush1.msra.mxu0 0.0
        %3309 = vmatprep.subr.mxu0 0.0
        %3310 = vmatpush1.msra.mxu0 0.0
        %3311 = vmatprep.subr.mxu0 0.0
        %3312 = vmatpush1.msra.mxu0 0.0
        %3313 = vmatprep.subr.mxu0 0.0
        %3314 = vmatpush1.msra.mxu0 0.0
        %3315 = vmatprep.subr.mxu0 0.0
        %3316 = vmatpush1.msra.mxu0 0.0
        %3317 = vmatprep.subr.mxu0 0.0
        %3318 = vmatpush1.msra.mxu0 0.0
        %3319 = vmatprep.subr.mxu0 0.0
        %3320 = vmatpush1.msra.mxu0 0.0
        %3321 = vmatprep.subr.mxu0 0.0
        %3322 = vmatpush1.msra.mxu0 0.0
        %3323 = vmatprep.subr.mxu0 0.0
        %3324 = vmatpush1.msra.mxu0 0.0
        %3325 = vmatprep.subr.mxu0 0.0
        %3326 = vmatpush1.msra.mxu0 0.0
        %3327 = vmatprep.subr.mxu0 0.0
        %3328 = vmatpush1.msra.mxu0 0.0
        %3329 = vmatprep.subr.mxu0 0.0
        %3330 = vmatpush1.msra.mxu0 0.0
        %3331 = vmatprep.subr.mxu0 0.0
        %3332 = vmatpush1.msra.mxu0 0.0
        %3333 = vmatprep.subr.mxu0 0.0
        %3334 = vmatpush1.msra.mxu0 0.0
        %3335 = vmatprep.subr.mxu0 0.0
        %3336 = vmatpush1.msra.mxu0 0.0
        %3337 = vmatprep.subr.mxu0 0.0
        %3338 = vmatpush1.msra.mxu0 0.0
        %3339 = vmatprep.subr.mxu0 0.0
        %3340 = vmatpush1.msra.mxu0 0.0
        %3341 = vmatprep.subr.mxu0 0.0
        %3342 = vmatpush1.msra.mxu0 0.0
        %3343 = vmatprep.subr.mxu0 0.0
        %3344 = vmatpush1.msra.mxu0 0.0
        %3345 = vmatprep.subr.mxu0 0.0
        %3346 = vmatpush1.msra.mxu0 0.0
        %3347 = vmatprep.subr.mxu0 0.0
        %3348 = vmatpush1.msra.mxu0 0.0
        %3349 = vmatprep.subr.mxu0 0.0
        %3350 = vmatpush1.msra.mxu0 0.0
        %3351 = vmatprep.subr.mxu0 0.0
        %3352 = vmatpush1.msra.mxu0 0.0
        %3353 = vmatprep.mubr.f32.mxu0 0.0
        %3354 = vmatmul.mubr.f32.gmra.mrb[0].mxu0 %v3281
        %v3355 = vpop.f32.mrb[0].mxu0
        %v3356 = vadd.f32 0.0, %v3355
        %v3357 = vpop.f32.mrb[0].mxu0
        %v3358 = vadd.f32 0.0, %v3357
        %3359 = vdwg.mxu0
        %v3360 = vadd.f32 %v3203, %v3356
        %v3361 = vadd.f32 %v3205, %v3358
        %s3362 = scalar_lea.vmem %s9, 12
        %v3363 = vld [vmem:[%s3362] sm:$0xf]
        %3364 = vmatprep.subr.mxu0 %v1584
        %3365 = vmatpush1.msra.mxu0 %v1583
        %3366 = vmatprep.subr.mxu0 %v1586
        %3367 = vmatpush1.msra.mxu0 %v1585
        %3368 = vmatprep.subr.mxu0 %v1588
        %3369 = vmatpush1.msra.mxu0 %v1587
        %3370 = vmatprep.subr.mxu0 %v1590
        %3371 = vmatpush1.msra.mxu0 %v1589
        %3372 = vmatprep.subr.mxu0 %v1592
        %3373 = vmatpush1.msra.mxu0 %v1591
        %3374 = vmatprep.subr.mxu0 %v1594
        %3375 = vmatpush1.msra.mxu0 %v1593
        %3376 = vmatprep.subr.mxu0 %v1596
        %3377 = vmatpush1.msra.mxu0 %v1595
        %3378 = vmatprep.subr.mxu0 %v1598
        %3379 = vmatpush1.msra.mxu0 %v1597
        %3380 = vmatprep.subr.mxu0 %v1600
        %3381 = vmatpush1.msra.mxu0 %v1599
        %3382 = vmatprep.subr.mxu0 %v1602
        %3383 = vmatpush1.msra.mxu0 %v1601
        %3384 = vmatprep.subr.mxu0 %v1604
        %3385 = vmatpush1.msra.mxu0 %v1603
        %3386 = vmatprep.subr.mxu0 %v1606
        %3387 = vmatpush1.msra.mxu0 %v1605
        %3388 = vmatprep.subr.mxu0 %v1608
        %3389 = vmatpush1.msra.mxu0 %v1607
        %3390 = vmatprep.subr.mxu0 %v1610
        %3391 = vmatpush1.msra.mxu0 %v1609
        %3392 = vmatprep.subr.mxu0 %v1612
        %3393 = vmatpush1.msra.mxu0 %v1611
        %3394 = vmatprep.subr.mxu0 %v1614
        %3395 = vmatpush1.msra.mxu0 %v1613
        %3396 = vmatprep.subr.mxu0 %v1616
        %3397 = vmatpush1.msra.mxu0 %v1615
        %3398 = vmatprep.subr.mxu0 %v1618
        %3399 = vmatpush1.msra.mxu0 %v1617
        %3400 = vmatprep.subr.mxu0 %v1620
        %3401 = vmatpush1.msra.mxu0 %v1619
        %3402 = vmatprep.subr.mxu0 %v1622
        %3403 = vmatpush1.msra.mxu0 %v1621
        %3404 = vmatprep.subr.mxu0 %v1624
        %3405 = vmatpush1.msra.mxu0 %v1623
        %3406 = vmatprep.subr.mxu0 %v1626
        %3407 = vmatpush1.msra.mxu0 %v1625
        %3408 = vmatprep.subr.mxu0 %v1628
        %3409 = vmatpush1.msra.mxu0 %v1627
        %3410 = vmatprep.subr.mxu0 %v1630
        %3411 = vmatpush1.msra.mxu0 %v1629
        %3412 = vmatprep.subr.mxu0 %v1632
        %3413 = vmatpush1.msra.mxu0 %v1631
        %3414 = vmatprep.subr.mxu0 %v1634
        %3415 = vmatpush1.msra.mxu0 %v1633
        %3416 = vmatprep.subr.mxu0 %v1636
        %3417 = vmatpush1.msra.mxu0 %v1635
        %3418 = vmatprep.subr.mxu0 %v1638
        %3419 = vmatpush1.msra.mxu0 %v1637
        %3420 = vmatprep.subr.mxu0 %v1640
        %3421 = vmatpush1.msra.mxu0 %v1639
        %3422 = vmatprep.subr.mxu0 %v1642
        %3423 = vmatpush1.msra.mxu0 %v1641
        %3424 = vmatprep.subr.mxu0 %v1644
        %3425 = vmatpush1.msra.mxu0 %v1643
        %3426 = vmatprep.subr.mxu0 %v1646
        %3427 = vmatpush1.msra.mxu0 %v1645
        %3428 = vmatprep.mubr.f32.mxu0 %v2901
        %3429 = vmatmul.mubr.f32.gmra.mrb[0].mxu0 %v2900
        %v3430 = vpop.f32.mrb[0].mxu0
        %v3431 = vadd.f32 0.0, %v3430
        %v3432 = vpop.f32.mrb[0].mxu0
        %v3433 = vadd.f32 0.0, %v3432
        %3434 = vdwg.mxu0
        %v3436 = vsel %vm550, %v3363, 0
        %v3439 = vsel %vm554, %v3431, 0
        %v3442 = vsel %vm554, %v3433, 0
        %3444 = vmatprep.subr.mxu0 %v3442
        %3445 = vmatpush1.msra.mxu0 %v3439
        %3446 = vmatprep.subr.mxu0 0.0
        %3447 = vmatpush1.msra.mxu0 0.0
        %3448 = vmatprep.subr.mxu0 0.0
        %3449 = vmatpush1.msra.mxu0 0.0
        %3450 = vmatprep.subr.mxu0 0.0
        %3451 = vmatpush1.msra.mxu0 0.0
        %3452 = vmatprep.subr.mxu0 0.0
        %3453 = vmatpush1.msra.mxu0 0.0
        %3454 = vmatprep.subr.mxu0 0.0
        %3455 = vmatpush1.msra.mxu0 0.0
        %3456 = vmatprep.subr.mxu0 0.0
        %3457 = vmatpush1.msra.mxu0 0.0
        %3458 = vmatprep.subr.mxu0 0.0
        %3459 = vmatpush1.msra.mxu0 0.0
        %3460 = vmatprep.subr.mxu0 0.0
        %3461 = vmatpush1.msra.mxu0 0.0
        %3462 = vmatprep.subr.mxu0 0.0
        %3463 = vmatpush1.msra.mxu0 0.0
        %3464 = vmatprep.subr.mxu0 0.0
        %3465 = vmatpush1.msra.mxu0 0.0
        %3466 = vmatprep.subr.mxu0 0.0
        %3467 = vmatpush1.msra.mxu0 0.0
        %3468 = vmatprep.subr.mxu0 0.0
        %3469 = vmatpush1.msra.mxu0 0.0
        %3470 = vmatprep.subr.mxu0 0.0
        %3471 = vmatpush1.msra.mxu0 0.0
        %3472 = vmatprep.subr.mxu0 0.0
        %3473 = vmatpush1.msra.mxu0 0.0
        %3474 = vmatprep.subr.mxu0 0.0
        %3475 = vmatpush1.msra.mxu0 0.0
        %3476 = vmatprep.subr.mxu0 0.0
        %3477 = vmatpush1.msra.mxu0 0.0
        %3478 = vmatprep.subr.mxu0 0.0
        %3479 = vmatpush1.msra.mxu0 0.0
        %3480 = vmatprep.subr.mxu0 0.0
        %3481 = vmatpush1.msra.mxu0 0.0
        %3482 = vmatprep.subr.mxu0 0.0
        %3483 = vmatpush1.msra.mxu0 0.0
        %3484 = vmatprep.subr.mxu0 0.0
        %3485 = vmatpush1.msra.mxu0 0.0
        %3486 = vmatprep.subr.mxu0 0.0
        %3487 = vmatpush1.msra.mxu0 0.0
        %3488 = vmatprep.subr.mxu0 0.0
        %3489 = vmatpush1.msra.mxu0 0.0
        %3490 = vmatprep.subr.mxu0 0.0
        %3491 = vmatpush1.msra.mxu0 0.0
        %3492 = vmatprep.subr.mxu0 0.0
        %3493 = vmatpush1.msra.mxu0 0.0
        %3494 = vmatprep.subr.mxu0 0.0
        %3495 = vmatpush1.msra.mxu0 0.0
        %3496 = vmatprep.subr.mxu0 0.0
        %3497 = vmatpush1.msra.mxu0 0.0
        %3498 = vmatprep.subr.mxu0 0.0
        %3499 = vmatpush1.msra.mxu0 0.0
        %3500 = vmatprep.subr.mxu0 0.0
        %3501 = vmatpush1.msra.mxu0 0.0
        %3502 = vmatprep.subr.mxu0 0.0
        %3503 = vmatpush1.msra.mxu0 0.0
        %3504 = vmatprep.subr.mxu0 0.0
        %3505 = vmatpush1.msra.mxu0 0.0
        %3506 = vmatprep.subr.mxu0 0.0
        %3507 = vmatpush1.msra.mxu0 0.0
        %3508 = vmatprep.mubr.f32.mxu0 0.0
        %3509 = vmatmul.mubr.f32.gmra.mrb[0].mxu0 %v3436
        %v3510 = vpop.f32.mrb[0].mxu0
        %v3511 = vadd.f32 0.0, %v3510
        %v3512 = vpop.f32.mrb[0].mxu0
        %v3513 = vadd.f32 0.0, %v3512
        %3514 = vdwg.mxu0
        %v3515 = vadd.f32 %v3360, %v3511
        %v3516 = vadd.f32 %v3361, %v3513
        %s3517 = scalar_lea.vmem %s9, 16
        %v3518 = vld [vmem:[%s3517] sm:$0xf]
        %3519 = vmatprep.subr.mxu0 %v1804
        %3520 = vmatpush1.msra.mxu0 %v1803
        %3521 = vmatprep.subr.mxu0 %v1806
        %3522 = vmatpush1.msra.mxu0 %v1805
        %3523 = vmatprep.subr.mxu0 %v1808
        %3524 = vmatpush1.msra.mxu0 %v1807
        %3525 = vmatprep.subr.mxu0 %v1810
        %3526 = vmatpush1.msra.mxu0 %v1809
        %3527 = vmatprep.subr.mxu0 %v1812
        %3528 = vmatpush1.msra.mxu0 %v1811
        %3529 = vmatprep.subr.mxu0 %v1814
        %3530 = vmatpush1.msra.mxu0 %v1813
        %3531 = vmatprep.subr.mxu0 %v1816
        %3532 = vmatpush1.msra.mxu0 %v1815
        %3533 = vmatprep.subr.mxu0 %v1818
        %3534 = vmatpush1.msra.mxu0 %v1817
        %3535 = vmatprep.subr.mxu0 %v1820
        %3536 = vmatpush1.msra.mxu0 %v1819
        %3537 = vmatprep.subr.mxu0 %v1822
        %3538 = vmatpush1.msra.mxu0 %v1821
        %3539 = vmatprep.subr.mxu0 %v1824
        %3540 = vmatpush1.msra.mxu0 %v1823
        %3541 = vmatprep.subr.mxu0 %v1826
        %3542 = vmatpush1.msra.mxu0 %v1825
        %3543 = vmatprep.subr.mxu0 %v1828
        %3544 = vmatpush1.msra.mxu0 %v1827
        %3545 = vmatprep.subr.mxu0 %v1830
        %3546 = vmatpush1.msra.mxu0 %v1829
        %3547 = vmatprep.subr.mxu0 %v1832
        %3548 = vmatpush1.msra.mxu0 %v1831
        %3549 = vmatprep.subr.mxu0 %v1834
        %3550 = vmatpush1.msra.mxu0 %v1833
        %3551 = vmatprep.subr.mxu0 %v1836
        %3552 = vmatpush1.msra.mxu0 %v1835
        %3553 = vmatprep.subr.mxu0 %v1838
        %3554 = vmatpush1.msra.mxu0 %v1837
        %3555 = vmatprep.subr.mxu0 %v1840
        %3556 = vmatpush1.msra.mxu0 %v1839
        %3557 = vmatprep.subr.mxu0 %v1842
        %3558 = vmatpush1.msra.mxu0 %v1841
        %3559 = vmatprep.subr.mxu0 %v1844
        %3560 = vmatpush1.msra.mxu0 %v1843
        %3561 = vmatprep.subr.mxu0 %v1846
        %3562 = vmatpush1.msra.mxu0 %v1845
        %3563 = vmatprep.subr.mxu0 %v1848
        %3564 = vmatpush1.msra.mxu0 %v1847
        %3565 = vmatprep.subr.mxu0 %v1850
        %3566 = vmatpush1.msra.mxu0 %v1849
        %3567 = vmatprep.subr.mxu0 %v1852
        %3568 = vmatpush1.msra.mxu0 %v1851
        %3569 = vmatprep.subr.mxu0 %v1854
        %3570 = vmatpush1.msra.mxu0 %v1853
        %3571 = vmatprep.subr.mxu0 %v1856
        %3572 = vmatpush1.msra.mxu0 %v1855
        %3573 = vmatprep.subr.mxu0 %v1858
        %3574 = vmatpush1.msra.mxu0 %v1857
        %3575 = vmatprep.subr.mxu0 %v1860
        %3576 = vmatpush1.msra.mxu0 %v1859
        %3577 = vmatprep.subr.mxu0 %v1862
        %3578 = vmatpush1.msra.mxu0 %v1861
        %3579 = vmatprep.subr.mxu0 %v1864
        %3580 = vmatpush1.msra.mxu0 %v1863
        %3581 = vmatprep.subr.mxu0 %v1866
        %3582 = vmatpush1.msra.mxu0 %v1865
        %3583 = vmatprep.mubr.f32.mxu0 %v2901
        %3584 = vmatmul.mubr.f32.gmra.mrb[0].mxu0 %v2900
        %v3585 = vpop.f32.mrb[0].mxu0
        %v3586 = vadd.f32 0.0, %v3585
        %v3587 = vpop.f32.mrb[0].mxu0
        %v3588 = vadd.f32 0.0, %v3587
        %3589 = vdwg.mxu0
        %v3591 = vsel %vm550, %v3518, 0
        %v3594 = vsel %vm554, %v3586, 0
        %v3597 = vsel %vm554, %v3588, 0
        %3599 = vmatprep.subr.mxu0 %v3597
        %3600 = vmatpush1.msra.mxu0 %v3594
        %3601 = vmatprep.subr.mxu0 0.0
        %3602 = vmatpush1.msra.mxu0 0.0
        %3603 = vmatprep.subr.mxu0 0.0
        %3604 = vmatpush1.msra.mxu0 0.0
        %3605 = vmatprep.subr.mxu0 0.0
        %3606 = vmatpush1.msra.mxu0 0.0
        %3607 = vmatprep.subr.mxu0 0.0
        %3608 = vmatpush1.msra.mxu0 0.0
        %3609 = vmatprep.subr.mxu0 0.0
        %3610 = vmatpush1.msra.mxu0 0.0
        %3611 = vmatprep.subr.mxu0 0.0
        %3612 = vmatpush1.msra.mxu0 0.0
        %3613 = vmatprep.subr.mxu0 0.0
        %3614 = vmatpush1.msra.mxu0 0.0
        %3615 = vmatprep.subr.mxu0 0.0
        %3616 = vmatpush1.msra.mxu0 0.0
        %3617 = vmatprep.subr.mxu0 0.0
        %3618 = vmatpush1.msra.mxu0 0.0
        %3619 = vmatprep.subr.mxu0 0.0
        %3620 = vmatpush1.msra.mxu0 0.0
        %3621 = vmatprep.subr.mxu0 0.0
        %3622 = vmatpush1.msra.mxu0 0.0
        %3623 = vmatprep.subr.mxu0 0.0
        %3624 = vmatpush1.msra.mxu0 0.0
        %3625 = vmatprep.subr.mxu0 0.0
        %3626 = vmatpush1.msra.mxu0 0.0
        %3627 = vmatprep.subr.mxu0 0.0
        %3628 = vmatpush1.msra.mxu0 0.0
        %3629 = vmatprep.subr.mxu0 0.0
        %3630 = vmatpush1.msra.mxu0 0.0
        %3631 = vmatprep.subr.mxu0 0.0
        %3632 = vmatpush1.msra.mxu0 0.0
        %3633 = vmatprep.subr.mxu0 0.0
        %3634 = vmatpush1.msra.mxu0 0.0
        %3635 = vmatprep.subr.mxu0 0.0
        %3636 = vmatpush1.msra.mxu0 0.0
        %3637 = vmatprep.subr.mxu0 0.0
        %3638 = vmatpush1.msra.mxu0 0.0
        %3639 = vmatprep.subr.mxu0 0.0
        %3640 = vmatpush1.msra.mxu0 0.0
        %3641 = vmatprep.subr.mxu0 0.0
        %3642 = vmatpush1.msra.mxu0 0.0
        %3643 = vmatprep.subr.mxu0 0.0
        %3644 = vmatpush1.msra.mxu0 0.0
        %3645 = vmatprep.subr.mxu0 0.0
        %3646 = vmatpush1.msra.mxu0 0.0
        %3647 = vmatprep.subr.mxu0 0.0
        %3648 = vmatpush1.msra.mxu0 0.0
        %3649 = vmatprep.subr.mxu0 0.0
        %3650 = vmatpush1.msra.mxu0 0.0
        %3651 = vmatprep.subr.mxu0 0.0
        %3652 = vmatpush1.msra.mxu0 0.0
        %3653 = vmatprep.subr.mxu0 0.0
        %3654 = vmatpush1.msra.mxu0 0.0
        %3655 = vmatprep.subr.mxu0 0.0
        %3656 = vmatpush1.msra.mxu0 0.0
        %3657 = vmatprep.subr.mxu0 0.0
        %3658 = vmatpush1.msra.mxu0 0.0
        %3659 = vmatprep.subr.mxu0 0.0
        %3660 = vmatpush1.msra.mxu0 0.0
        %3661 = vmatprep.subr.mxu0 0.0
        %3662 = vmatpush1.msra.mxu0 0.0
        %3663 = vmatprep.mubr.f32.mxu0 0.0
        %3664 = vmatmul.mubr.f32.gmra.mrb[0].mxu0 %v3591
        %v3665 = vpop.f32.mrb[0].mxu0
        %v3666 = vadd.f32 0.0, %v3665
        %v3667 = vpop.f32.mrb[0].mxu0
        %v3668 = vadd.f32 0.0, %v3667
        %3669 = vdwg.mxu0
        %v3670 = vadd.f32 %v3515, %v3666
        %v3671 = vadd.f32 %v3516, %v3668
        %s3672 = scalar_lea.vmem %s9, 20
        %v3673 = vld [vmem:[%s3672] sm:$0xf]
        %3674 = vmatprep.subr.mxu0 %v2024
        %3675 = vmatpush1.msra.mxu0 %v2023
        %3676 = vmatprep.subr.mxu0 %v2026
        %3677 = vmatpush1.msra.mxu0 %v2025
        %3678 = vmatprep.subr.mxu0 %v2028
        %3679 = vmatpush1.msra.mxu0 %v2027
        %3680 = vmatprep.subr.mxu0 %v2030
        %3681 = vmatpush1.msra.mxu0 %v2029
        %3682 = vmatprep.subr.mxu0 %v2032
        %3683 = vmatpush1.msra.mxu0 %v2031
        %3684 = vmatprep.subr.mxu0 %v2034
        %3685 = vmatpush1.msra.mxu0 %v2033
        %3686 = vmatprep.subr.mxu0 %v2036
        %3687 = vmatpush1.msra.mxu0 %v2035
        %3688 = vmatprep.subr.mxu0 %v2038
        %3689 = vmatpush1.msra.mxu0 %v2037
        %3690 = vmatprep.subr.mxu0 %v2040
        %3691 = vmatpush1.msra.mxu0 %v2039
        %3692 = vmatprep.subr.mxu0 %v2042
        %3693 = vmatpush1.msra.mxu0 %v2041
        %3694 = vmatprep.subr.mxu0 %v2044
        %3695 = vmatpush1.msra.mxu0 %v2043
        %3696 = vmatprep.subr.mxu0 %v2046
        %3697 = vmatpush1.msra.mxu0 %v2045
        %3698 = vmatprep.subr.mxu0 %v2048
        %3699 = vmatpush1.msra.mxu0 %v2047
        %3700 = vmatprep.subr.mxu0 %v2050
        %3701 = vmatpush1.msra.mxu0 %v2049
        %3702 = vmatprep.subr.mxu0 %v2052
        %3703 = vmatpush1.msra.mxu0 %v2051
        %3704 = vmatprep.subr.mxu0 %v2054
        %3705 = vmatpush1.msra.mxu0 %v2053
        %3706 = vmatprep.subr.mxu0 %v2056
        %3707 = vmatpush1.msra.mxu0 %v2055
        %3708 = vmatprep.subr.mxu0 %v2058
        %3709 = vmatpush1.msra.mxu0 %v2057
        %3710 = vmatprep.subr.mxu0 %v2060
        %3711 = vmatpush1.msra.mxu0 %v2059
        %3712 = vmatprep.subr.mxu0 %v2062
        %3713 = vmatpush1.msra.mxu0 %v2061
        %3714 = vmatprep.subr.mxu0 %v2064
        %3715 = vmatpush1.msra.mxu0 %v2063
        %3716 = vmatprep.subr.mxu0 %v2066
        %3717 = vmatpush1.msra.mxu0 %v2065
        %3718 = vmatprep.subr.mxu0 %v2068
        %3719 = vmatpush1.msra.mxu0 %v2067
        %3720 = vmatprep.subr.mxu0 %v2070
        %3721 = vmatpush1.msra.mxu0 %v2069
        %3722 = vmatprep.subr.mxu0 %v2072
        %3723 = vmatpush1.msra.mxu0 %v2071
        %3724 = vmatprep.subr.mxu0 %v2074
        %3725 = vmatpush1.msra.mxu0 %v2073
        %3726 = vmatprep.subr.mxu0 %v2076
        %3727 = vmatpush1.msra.mxu0 %v2075
        %3728 = vmatprep.subr.mxu0 %v2078
        %3729 = vmatpush1.msra.mxu0 %v2077
        %3730 = vmatprep.subr.mxu0 %v2080
        %3731 = vmatpush1.msra.mxu0 %v2079
        %3732 = vmatprep.subr.mxu0 %v2082
        %3733 = vmatpush1.msra.mxu0 %v2081
        %3734 = vmatprep.subr.mxu0 %v2084
        %3735 = vmatpush1.msra.mxu0 %v2083
        %3736 = vmatprep.subr.mxu0 %v2086
        %3737 = vmatpush1.msra.mxu0 %v2085
        %3738 = vmatprep.mubr.f32.mxu0 %v2901
        %3739 = vmatmul.mubr.f32.gmra.mrb[0].mxu0 %v2900
        %v3740 = vpop.f32.mrb[0].mxu0
        %v3741 = vadd.f32 0.0, %v3740
        %v3742 = vpop.f32.mrb[0].mxu0
        %v3743 = vadd.f32 0.0, %v3742
        %3744 = vdwg.mxu0
        %v3746 = vsel %vm550, %v3673, 0
        %v3749 = vsel %vm554, %v3741, 0
        %v3752 = vsel %vm554, %v3743, 0
        %3754 = vmatprep.subr.mxu0 %v3752
        %3755 = vmatpush1.msra.mxu0 %v3749
        %3756 = vmatprep.subr.mxu0 0.0
        %3757 = vmatpush1.msra.mxu0 0.0
        %3758 = vmatprep.subr.mxu0 0.0
        %3759 = vmatpush1.msra.mxu0 0.0
        %3760 = vmatprep.subr.mxu0 0.0
        %3761 = vmatpush1.msra.mxu0 0.0
        %3762 = vmatprep.subr.mxu0 0.0
        %3763 = vmatpush1.msra.mxu0 0.0
        %3764 = vmatprep.subr.mxu0 0.0
        %3765 = vmatpush1.msra.mxu0 0.0
        %3766 = vmatprep.subr.mxu0 0.0
        %3767 = vmatpush1.msra.mxu0 0.0
        %3768 = vmatprep.subr.mxu0 0.0
        %3769 = vmatpush1.msra.mxu0 0.0
        %3770 = vmatprep.subr.mxu0 0.0
        %3771 = vmatpush1.msra.mxu0 0.0
        %3772 = vmatprep.subr.mxu0 0.0
        %3773 = vmatpush1.msra.mxu0 0.0
        %3774 = vmatprep.subr.mxu0 0.0
        %3775 = vmatpush1.msra.mxu0 0.0
        %3776 = vmatprep.subr.mxu0 0.0
        %3777 = vmatpush1.msra.mxu0 0.0
        %3778 = vmatprep.subr.mxu0 0.0
        %3779 = vmatpush1.msra.mxu0 0.0
        %3780 = vmatprep.subr.mxu0 0.0
        %3781 = vmatpush1.msra.mxu0 0.0
        %3782 = vmatprep.subr.mxu0 0.0
        %3783 = vmatpush1.msra.mxu0 0.0
        %3784 = vmatprep.subr.mxu0 0.0
        %3785 = vmatpush1.msra.mxu0 0.0
        %3786 = vmatprep.subr.mxu0 0.0
        %3787 = vmatpush1.msra.mxu0 0.0
        %3788 = vmatprep.subr.mxu0 0.0
        %3789 = vmatpush1.msra.mxu0 0.0
        %3790 = vmatprep.subr.mxu0 0.0
        %3791 = vmatpush1.msra.mxu0 0.0
        %3792 = vmatprep.subr.mxu0 0.0
        %3793 = vmatpush1.msra.mxu0 0.0
        %3794 = vmatprep.subr.mxu0 0.0
        %3795 = vmatpush1.msra.mxu0 0.0
        %3796 = vmatprep.subr.mxu0 0.0
        %3797 = vmatpush1.msra.mxu0 0.0
        %3798 = vmatprep.subr.mxu0 0.0
        %3799 = vmatpush1.msra.mxu0 0.0
        %3800 = vmatprep.subr.mxu0 0.0
        %3801 = vmatpush1.msra.mxu0 0.0
        %3802 = vmatprep.subr.mxu0 0.0
        %3803 = vmatpush1.msra.mxu0 0.0
        %3804 = vmatprep.subr.mxu0 0.0
        %3805 = vmatpush1.msra.mxu0 0.0
        %3806 = vmatprep.subr.mxu0 0.0
        %3807 = vmatpush1.msra.mxu0 0.0
        %3808 = vmatprep.subr.mxu0 0.0
        %3809 = vmatpush1.msra.mxu0 0.0
        %3810 = vmatprep.subr.mxu0 0.0
        %3811 = vmatpush1.msra.mxu0 0.0
        %3812 = vmatprep.subr.mxu0 0.0
        %3813 = vmatpush1.msra.mxu0 0.0
        %3814 = vmatprep.subr.mxu0 0.0
        %3815 = vmatpush1.msra.mxu0 0.0
        %3816 = vmatprep.subr.mxu0 0.0
        %3817 = vmatpush1.msra.mxu0 0.0
        %3818 = vmatprep.mubr.f32.mxu0 0.0
        %3819 = vmatmul.mubr.f32.gmra.mrb[0].mxu0 %v3746
        %v3820 = vpop.f32.mrb[0].mxu0
        %v3821 = vadd.f32 0.0, %v3820
        %v3822 = vpop.f32.mrb[0].mxu0
        %v3823 = vadd.f32 0.0, %v3822
        %3824 = vdwg.mxu0
        %v3825 = vadd.f32 %v3670, %v3821
        %v3826 = vadd.f32 %v3671, %v3823
        %s3827 = scalar_lea.vmem %s9, 24
        %v3828 = vld [vmem:[%s3827] sm:$0xf]
        %3829 = vmatprep.subr.mxu0 %v2244
        %3830 = vmatpush1.msra.mxu0 %v2243
        %3831 = vmatprep.subr.mxu0 %v2246
        %3832 = vmatpush1.msra.mxu0 %v2245
        %3833 = vmatprep.subr.mxu0 %v2248
        %3834 = vmatpush1.msra.mxu0 %v2247
        %3835 = vmatprep.subr.mxu0 %v2250
        %3836 = vmatpush1.msra.mxu0 %v2249
        %3837 = vmatprep.subr.mxu0 %v2252
        %3838 = vmatpush1.msra.mxu0 %v2251
        %3839 = vmatprep.subr.mxu0 %v2254
        %3840 = vmatpush1.msra.mxu0 %v2253
        %3841 = vmatprep.subr.mxu0 %v2256
        %3842 = vmatpush1.msra.mxu0 %v2255
        %3843 = vmatprep.subr.mxu0 %v2258
        %3844 = vmatpush1.msra.mxu0 %v2257
        %3845 = vmatprep.subr.mxu0 %v2260
        %3846 = vmatpush1.msra.mxu0 %v2259
        %3847 = vmatprep.subr.mxu0 %v2262
        %3848 = vmatpush1.msra.mxu0 %v2261
        %3849 = vmatprep.subr.mxu0 %v2264
        %3850 = vmatpush1.msra.mxu0 %v2263
        %3851 = vmatprep.subr.mxu0 %v2266
        %3852 = vmatpush1.msra.mxu0 %v2265
        %3853 = vmatprep.subr.mxu0 %v2268
        %3854 = vmatpush1.msra.mxu0 %v2267
        %3855 = vmatprep.subr.mxu0 %v2270
        %3856 = vmatpush1.msra.mxu0 %v2269
        %3857 = vmatprep.subr.mxu0 %v2272
        %3858 = vmatpush1.msra.mxu0 %v2271
        %3859 = vmatprep.subr.mxu0 %v2274
        %3860 = vmatpush1.msra.mxu0 %v2273
        %3861 = vmatprep.subr.mxu0 %v2276
        %3862 = vmatpush1.msra.mxu0 %v2275
        %3863 = vmatprep.subr.mxu0 %v2278
        %3864 = vmatpush1.msra.mxu0 %v2277
        %3865 = vmatprep.subr.mxu0 %v2280
        %3866 = vmatpush1.msra.mxu0 %v2279
        %3867 = vmatprep.subr.mxu0 %v2282
        %3868 = vmatpush1.msra.mxu0 %v2281
        %3869 = vmatprep.subr.mxu0 %v2284
        %3870 = vmatpush1.msra.mxu0 %v2283
        %3871 = vmatprep.subr.mxu0 %v2286
        %3872 = vmatpush1.msra.mxu0 %v2285
        %3873 = vmatprep.subr.mxu0 %v2288
        %3874 = vmatpush1.msra.mxu0 %v2287
        %3875 = vmatprep.subr.mxu0 %v2290
        %3876 = vmatpush1.msra.mxu0 %v2289
        %3877 = vmatprep.subr.mxu0 %v2292
        %3878 = vmatpush1.msra.mxu0 %v2291
        %3879 = vmatprep.subr.mxu0 %v2294
        %3880 = vmatpush1.msra.mxu0 %v2293
        %3881 = vmatprep.subr.mxu0 %v2296
        %3882 = vmatpush1.msra.mxu0 %v2295
        %3883 = vmatprep.subr.mxu0 %v2298
        %3884 = vmatpush1.msra.mxu0 %v2297
        %3885 = vmatprep.subr.mxu0 %v2300
        %3886 = vmatpush1.msra.mxu0 %v2299
        %3887 = vmatprep.subr.mxu0 %v2302
        %3888 = vmatpush1.msra.mxu0 %v2301
        %3889 = vmatprep.subr.mxu0 %v2304
        %3890 = vmatpush1.msra.mxu0 %v2303
        %3891 = vmatprep.subr.mxu0 %v2306
        %3892 = vmatpush1.msra.mxu0 %v2305
        %3893 = vmatprep.mubr.f32.mxu0 %v2901
        %3894 = vmatmul.mubr.f32.gmra.mrb[0].mxu0 %v2900
        %v3895 = vpop.f32.mrb[0].mxu0
        %v3896 = vadd.f32 0.0, %v3895
        %v3897 = vpop.f32.mrb[0].mxu0
        %v3898 = vadd.f32 0.0, %v3897
        %3899 = vdwg.mxu0
        %v3901 = vsel %vm550, %v3828, 0
        %v3904 = vsel %vm554, %v3896, 0
        %v3907 = vsel %vm554, %v3898, 0
        %3909 = vmatprep.subr.mxu0 %v3907
        %3910 = vmatpush1.msra.mxu0 %v3904
        %3911 = vmatprep.subr.mxu0 0.0
        %3912 = vmatpush1.msra.mxu0 0.0
        %3913 = vmatprep.subr.mxu0 0.0
        %3914 = vmatpush1.msra.mxu0 0.0
        %3915 = vmatprep.subr.mxu0 0.0
        %3916 = vmatpush1.msra.mxu0 0.0
        %3917 = vmatprep.subr.mxu0 0.0
        %3918 = vmatpush1.msra.mxu0 0.0
        %3919 = vmatprep.subr.mxu0 0.0
        %3920 = vmatpush1.msra.mxu0 0.0
        %3921 = vmatprep.subr.mxu0 0.0
        %3922 = vmatpush1.msra.mxu0 0.0
        %3923 = vmatprep.subr.mxu0 0.0
        %3924 = vmatpush1.msra.mxu0 0.0
        %3925 = vmatprep.subr.mxu0 0.0
        %3926 = vmatpush1.msra.mxu0 0.0
        %3927 = vmatprep.subr.mxu0 0.0
        %3928 = vmatpush1.msra.mxu0 0.0
        %3929 = vmatprep.subr.mxu0 0.0
        %3930 = vmatpush1.msra.mxu0 0.0
        %3931 = vmatprep.subr.mxu0 0.0
        %3932 = vmatpush1.msra.mxu0 0.0
        %3933 = vmatprep.subr.mxu0 0.0
        %3934 = vmatpush1.msra.mxu0 0.0
        %3935 = vmatprep.subr.mxu0 0.0
        %3936 = vmatpush1.msra.mxu0 0.0
        %3937 = vmatprep.subr.mxu0 0.0
        %3938 = vmatpush1.msra.mxu0 0.0
        %3939 = vmatprep.subr.mxu0 0.0
        %3940 = vmatpush1.msra.mxu0 0.0
        %3941 = vmatprep.subr.mxu0 0.0
        %3942 = vmatpush1.msra.mxu0 0.0
        %3943 = vmatprep.subr.mxu0 0.0
        %3944 = vmatpush1.msra.mxu0 0.0
        %3945 = vmatprep.subr.mxu0 0.0
        %3946 = vmatpush1.msra.mxu0 0.0
        %3947 = vmatprep.subr.mxu0 0.0
        %3948 = vmatpush1.msra.mxu0 0.0
        %3949 = vmatprep.subr.mxu0 0.0
        %3950 = vmatpush1.msra.mxu0 0.0
        %3951 = vmatprep.subr.mxu0 0.0
        %3952 = vmatpush1.msra.mxu0 0.0
        %3953 = vmatprep.subr.mxu0 0.0
        %3954 = vmatpush1.msra.mxu0 0.0
        %3955 = vmatprep.subr.mxu0 0.0
        %3956 = vmatpush1.msra.mxu0 0.0
        %3957 = vmatprep.subr.mxu0 0.0
        %3958 = vmatpush1.msra.mxu0 0.0
        %3959 = vmatprep.subr.mxu0 0.0
        %3960 = vmatpush1.msra.mxu0 0.0
        %3961 = vmatprep.subr.mxu0 0.0
        %3962 = vmatpush1.msra.mxu0 0.0
        %3963 = vmatprep.subr.mxu0 0.0
        %3964 = vmatpush1.msra.mxu0 0.0
        %3965 = vmatprep.subr.mxu0 0.0
        %3966 = vmatpush1.msra.mxu0 0.0
        %3967 = vmatprep.subr.mxu0 0.0
        %3968 = vmatpush1.msra.mxu0 0.0
        %3969 = vmatprep.subr.mxu0 0.0
        %3970 = vmatpush1.msra.mxu0 0.0
        %3971 = vmatprep.subr.mxu0 0.0
        %3972 = vmatpush1.msra.mxu0 0.0
        %3973 = vmatprep.mubr.f32.mxu0 0.0
        %3974 = vmatmul.mubr.f32.gmra.mrb[0].mxu0 %v3901
        %v3975 = vpop.f32.mrb[0].mxu0
        %v3976 = vadd.f32 0.0, %v3975
        %v3977 = vpop.f32.mrb[0].mxu0
        %v3978 = vadd.f32 0.0, %v3977
        %3979 = vdwg.mxu0
        %v3980 = vadd.f32 %v3825, %v3976
        %v3981 = vadd.f32 %v3826, %v3978
        %s3982 = scalar_lea.vmem %s9, 28
        %v3983 = vld [vmem:[%s3982] sm:$0xf]
        %3984 = vmatprep.subr.mxu0 %v2464
        %3985 = vmatpush1.msra.mxu0 %v2463
        %3986 = vmatprep.subr.mxu0 %v2466
        %3987 = vmatpush1.msra.mxu0 %v2465
        %3988 = vmatprep.subr.mxu0 %v2468
        %3989 = vmatpush1.msra.mxu0 %v2467
        %3990 = vmatprep.subr.mxu0 %v2470
        %3991 = vmatpush1.msra.mxu0 %v2469
        %3992 = vmatprep.subr.mxu0 %v2472
        %3993 = vmatpush1.msra.mxu0 %v2471
        %3994 = vmatprep.subr.mxu0 %v2474
        %3995 = vmatpush1.msra.mxu0 %v2473
        %3996 = vmatprep.subr.mxu0 %v2476
        %3997 = vmatpush1.msra.mxu0 %v2475
        %3998 = vmatprep.subr.mxu0 %v2478
        %3999 = vmatpush1.msra.mxu0 %v2477
        %4000 = vmatprep.subr.mxu0 %v2480
        %4001 = vmatpush1.msra.mxu0 %v2479
        %4002 = vmatprep.subr.mxu0 %v2482
        %4003 = vmatpush1.msra.mxu0 %v2481
        %4004 = vmatprep.subr.mxu0 %v2484
        %4005 = vmatpush1.msra.mxu0 %v2483
        %4006 = vmatprep.subr.mxu0 %v2486
        %4007 = vmatpush1.msra.mxu0 %v2485
        %4008 = vmatprep.subr.mxu0 %v2488
        %4009 = vmatpush1.msra.mxu0 %v2487
        %4010 = vmatprep.subr.mxu0 %v2490
        %4011 = vmatpush1.msra.mxu0 %v2489
        %4012 = vmatprep.subr.mxu0 %v2492
        %4013 = vmatpush1.msra.mxu0 %v2491
        %4014 = vmatprep.subr.mxu0 %v2494
        %4015 = vmatpush1.msra.mxu0 %v2493
        %4016 = vmatprep.subr.mxu0 %v2496
        %4017 = vmatpush1.msra.mxu0 %v2495
        %4018 = vmatprep.subr.mxu0 %v2498
        %4019 = vmatpush1.msra.mxu0 %v2497
        %4020 = vmatprep.subr.mxu0 %v2500
        %4021 = vmatpush1.msra.mxu0 %v2499
        %4022 = vmatprep.subr.mxu0 %v2502
        %4023 = vmatpush1.msra.mxu0 %v2501
        %4024 = vmatprep.subr.mxu0 %v2504
        %4025 = vmatpush1.msra.mxu0 %v2503
        %4026 = vmatprep.subr.mxu0 %v2506
        %4027 = vmatpush1.msra.mxu0 %v2505
        %4028 = vmatprep.subr.mxu0 %v2508
        %4029 = vmatpush1.msra.mxu0 %v2507
        %4030 = vmatprep.subr.mxu0 %v2510
        %4031 = vmatpush1.msra.mxu0 %v2509
        %4032 = vmatprep.subr.mxu0 %v2512
        %4033 = vmatpush1.msra.mxu0 %v2511
        %4034 = vmatprep.subr.mxu0 %v2514
        %4035 = vmatpush1.msra.mxu0 %v2513
        %4036 = vmatprep.subr.mxu0 %v2516
        %4037 = vmatpush1.msra.mxu0 %v2515
        %4038 = vmatprep.subr.mxu0 %v2518
        %4039 = vmatpush1.msra.mxu0 %v2517
        %4040 = vmatprep.subr.mxu0 %v2520
        %4041 = vmatpush1.msra.mxu0 %v2519
        %4042 = vmatprep.subr.mxu0 %v2522
        %4043 = vmatpush1.msra.mxu0 %v2521
        %4044 = vmatprep.subr.mxu0 %v2524
        %4045 = vmatpush1.msra.mxu0 %v2523
        %4046 = vmatprep.subr.mxu0 %v2526
        %4047 = vmatpush1.msra.mxu0 %v2525
        %4048 = vmatprep.mubr.f32.mxu0 %v2901
        %4049 = vmatmul.mubr.f32.gmra.mrb[0].mxu0 %v2900
        %v4050 = vpop.f32.mrb[0].mxu0
        %v4051 = vadd.f32 0.0, %v4050
        %v4052 = vpop.f32.mrb[0].mxu0
        %v4053 = vadd.f32 0.0, %v4052
        %4054 = vdwg.mxu0
        %v4056 = vsel %vm550, %v3983, 0
        %v4059 = vsel %vm554, %v4051, 0
        %v4062 = vsel %vm554, %v4053, 0
        %4064 = vmatprep.subr.mxu0 %v4062
        %4065 = vmatpush1.msra.mxu0 %v4059
        %4066 = vmatprep.subr.mxu0 0.0
        %4067 = vmatpush1.msra.mxu0 0.0
        %4068 = vmatprep.subr.mxu0 0.0
        %4069 = vmatpush1.msra.mxu0 0.0
        %4070 = vmatprep.subr.mxu0 0.0
        %4071 = vmatpush1.msra.mxu0 0.0
        %4072 = vmatprep.subr.mxu0 0.0
        %4073 = vmatpush1.msra.mxu0 0.0
        %4074 = vmatprep.subr.mxu0 0.0
        %4075 = vmatpush1.msra.mxu0 0.0
        %4076 = vmatprep.subr.mxu0 0.0
        %4077 = vmatpush1.msra.mxu0 0.0
        %4078 = vmatprep.subr.mxu0 0.0
        %4079 = vmatpush1.msra.mxu0 0.0
        %4080 = vmatprep.subr.mxu0 0.0
        %4081 = vmatpush1.msra.mxu0 0.0
        %4082 = vmatprep.subr.mxu0 0.0
        %4083 = vmatpush1.msra.mxu0 0.0
        %4084 = vmatprep.subr.mxu0 0.0
        %4085 = vmatpush1.msra.mxu0 0.0
        %4086 = vmatprep.subr.mxu0 0.0
        %4087 = vmatpush1.msra.mxu0 0.0
        %4088 = vmatprep.subr.mxu0 0.0
        %4089 = vmatpush1.msra.mxu0 0.0
        %4090 = vmatprep.subr.mxu0 0.0
        %4091 = vmatpush1.msra.mxu0 0.0
        %4092 = vmatprep.subr.mxu0 0.0
        %4093 = vmatpush1.msra.mxu0 0.0
        %4094 = vmatprep.subr.mxu0 0.0
        %4095 = vmatpush1.msra.mxu0 0.0
        %4096 = vmatprep.subr.mxu0 0.0
        %4097 = vmatpush1.msra.mxu0 0.0
        %4098 = vmatprep.subr.mxu0 0.0
        %4099 = vmatpush1.msra.mxu0 0.0
        %4100 = vmatprep.subr.mxu0 0.0
        %4101 = vmatpush1.msra.mxu0 0.0
        %4102 = vmatprep.subr.mxu0 0.0
        %4103 = vmatpush1.msra.mxu0 0.0
        %4104 = vmatprep.subr.mxu0 0.0
        %4105 = vmatpush1.msra.mxu0 0.0
        %4106 = vmatprep.subr.mxu0 0.0
        %4107 = vmatpush1.msra.mxu0 0.0
        %4108 = vmatprep.subr.mxu0 0.0
        %4109 = vmatpush1.msra.mxu0 0.0
        %4110 = vmatprep.subr.mxu0 0.0
        %4111 = vmatpush1.msra.mxu0 0.0
        %4112 = vmatprep.subr.mxu0 0.0
        %4113 = vmatpush1.msra.mxu0 0.0
        %4114 = vmatprep.subr.mxu0 0.0
        %4115 = vmatpush1.msra.mxu0 0.0
        %4116 = vmatprep.subr.mxu0 0.0
        %4117 = vmatpush1.msra.mxu0 0.0
        %4118 = vmatprep.subr.mxu0 0.0
        %4119 = vmatpush1.msra.mxu0 0.0
        %4120 = vmatprep.subr.mxu0 0.0
        %4121 = vmatpush1.msra.mxu0 0.0
        %4122 = vmatprep.subr.mxu0 0.0
        %4123 = vmatpush1.msra.mxu0 0.0
        %4124 = vmatprep.subr.mxu0 0.0
        %4125 = vmatpush1.msra.mxu0 0.0
        %4126 = vmatprep.subr.mxu0 0.0
        %4127 = vmatpush1.msra.mxu0 0.0
        %4128 = vmatprep.mubr.f32.mxu0 0.0
        %4129 = vmatmul.mubr.f32.gmra.mrb[0].mxu0 %v4056
        %v4130 = vpop.f32.mrb[0].mxu0
        %v4131 = vadd.f32 0.0, %v4130
        %v4132 = vpop.f32.mrb[0].mxu0
        %v4133 = vadd.f32 0.0, %v4132
        %4134 = vdwg.mxu0
        %v4135 = vadd.f32 %v3980, %v4131
        %v4136 = vadd.f32 %v3981, %v4133
        %s4137 = scalar_lea.vmem %s9, 32
        %v4138 = vld [vmem:[%s4137] sm:$0xf]
        %4139 = vmatprep.subr.mxu0 %v2684
        %4140 = vmatpush1.msra.mxu0 %v2683
        %4141 = vmatprep.subr.mxu0 %v2686
        %4142 = vmatpush1.msra.mxu0 %v2685
        %4143 = vmatprep.subr.mxu0 %v2688
        %4144 = vmatpush1.msra.mxu0 %v2687
        %4145 = vmatprep.subr.mxu0 %v2690
        %4146 = vmatpush1.msra.mxu0 %v2689
        %4147 = vmatprep.subr.mxu0 %v2692
        %4148 = vmatpush1.msra.mxu0 %v2691
        %4149 = vmatprep.subr.mxu0 %v2694
        %4150 = vmatpush1.msra.mxu0 %v2693
        %4151 = vmatprep.subr.mxu0 %v2696
        %4152 = vmatpush1.msra.mxu0 %v2695
        %4153 = vmatprep.subr.mxu0 %v2698
        %4154 = vmatpush1.msra.mxu0 %v2697
        %4155 = vmatprep.subr.mxu0 %v2700
        %4156 = vmatpush1.msra.mxu0 %v2699
        %4157 = vmatprep.subr.mxu0 %v2702
        %4158 = vmatpush1.msra.mxu0 %v2701
        %4159 = vmatprep.subr.mxu0 %v2704
        %4160 = vmatpush1.msra.mxu0 %v2703
        %4161 = vmatprep.subr.mxu0 %v2706
        %4162 = vmatpush1.msra.mxu0 %v2705
        %4163 = vmatprep.subr.mxu0 %v2708
        %4164 = vmatpush1.msra.mxu0 %v2707
        %4165 = vmatprep.subr.mxu0 %v2710
        %4166 = vmatpush1.msra.mxu0 %v2709
        %4167 = vmatprep.subr.mxu0 %v2712
        %4168 = vmatpush1.msra.mxu0 %v2711
        %4169 = vmatprep.subr.mxu0 %v2714
        %4170 = vmatpush1.msra.mxu0 %v2713
        %4171 = vmatprep.subr.mxu0 %v2716
        %4172 = vmatpush1.msra.mxu0 %v2715
        %4173 = vmatprep.subr.mxu0 %v2718
        %4174 = vmatpush1.msra.mxu0 %v2717
        %4175 = vmatprep.subr.mxu0 %v2720
        %4176 = vmatpush1.msra.mxu0 %v2719
        %4177 = vmatprep.subr.mxu0 %v2722
        %4178 = vmatpush1.msra.mxu0 %v2721
        %4179 = vmatprep.subr.mxu0 %v2724
        %4180 = vmatpush1.msra.mxu0 %v2723
        %4181 = vmatprep.subr.mxu0 %v2726
        %4182 = vmatpush1.msra.mxu0 %v2725
        %4183 = vmatprep.subr.mxu0 %v2728
        %4184 = vmatpush1.msra.mxu0 %v2727
        %4185 = vmatprep.subr.mxu0 %v2730
        %4186 = vmatpush1.msra.mxu0 %v2729
        %4187 = vmatprep.subr.mxu0 %v2732
        %4188 = vmatpush1.msra.mxu0 %v2731
        %4189 = vmatprep.subr.mxu0 %v2734
        %4190 = vmatpush1.msra.mxu0 %v2733
        %4191 = vmatprep.subr.mxu0 %v2736
        %4192 = vmatpush1.msra.mxu0 %v2735
        %4193 = vmatprep.subr.mxu0 %v2738
        %4194 = vmatpush1.msra.mxu0 %v2737
        %4195 = vmatprep.subr.mxu0 %v2740
        %4196 = vmatpush1.msra.mxu0 %v2739
        %4197 = vmatprep.subr.mxu0 %v2742
        %4198 = vmatpush1.msra.mxu0 %v2741
        %4199 = vmatprep.subr.mxu0 %v2744
        %4200 = vmatpush1.msra.mxu0 %v2743
        %4201 = vmatprep.subr.mxu0 %v2746
        %4202 = vmatpush1.msra.mxu0 %v2745
        %4203 = vmatprep.mubr.f32.mxu0 %v2901
        %4204 = vmatmul.mubr.f32.gmra.mrb[0].mxu0 %v2900
        %v4205 = vpop.f32.mrb[0].mxu0
        %v4206 = vadd.f32 0.0, %v4205
        %v4207 = vpop.f32.mrb[0].mxu0
        %v4208 = vadd.f32 0.0, %v4207
        %4209 = vdwg.mxu0
        %v4211 = vsel %vm550, %v4138, 0
        %v4214 = vsel %vm554, %v4206, 0
        %v4217 = vsel %vm554, %v4208, 0
        %4219 = vmatprep.subr.mxu0 %v4217
        %4220 = vmatpush1.msra.mxu0 %v4214
        %4221 = vmatprep.subr.mxu0 0.0
        %4222 = vmatpush1.msra.mxu0 0.0
        %4223 = vmatprep.subr.mxu0 0.0
        %4224 = vmatpush1.msra.mxu0 0.0
        %4225 = vmatprep.subr.mxu0 0.0
        %4226 = vmatpush1.msra.mxu0 0.0
        %4227 = vmatprep.subr.mxu0 0.0
        %4228 = vmatpush1.msra.mxu0 0.0
        %4229 = vmatprep.subr.mxu0 0.0
        %4230 = vmatpush1.msra.mxu0 0.0
        %4231 = vmatprep.subr.mxu0 0.0
        %4232 = vmatpush1.msra.mxu0 0.0
        %4233 = vmatprep.subr.mxu0 0.0
        %4234 = vmatpush1.msra.mxu0 0.0
        %4235 = vmatprep.subr.mxu0 0.0
        %4236 = vmatpush1.msra.mxu0 0.0
        %4237 = vmatprep.subr.mxu0 0.0
        %4238 = vmatpush1.msra.mxu0 0.0
        %4239 = vmatprep.subr.mxu0 0.0
        %4240 = vmatpush1.msra.mxu0 0.0
        %4241 = vmatprep.subr.mxu0 0.0
        %4242 = vmatpush1.msra.mxu0 0.0
        %4243 = vmatprep.subr.mxu0 0.0
        %4244 = vmatpush1.msra.mxu0 0.0
        %4245 = vmatprep.subr.mxu0 0.0
        %4246 = vmatpush1.msra.mxu0 0.0
        %4247 = vmatprep.subr.mxu0 0.0
        %4248 = vmatpush1.msra.mxu0 0.0
        %4249 = vmatprep.subr.mxu0 0.0
        %4250 = vmatpush1.msra.mxu0 0.0
        %4251 = vmatprep.subr.mxu0 0.0
        %4252 = vmatpush1.msra.mxu0 0.0
        %4253 = vmatprep.subr.mxu0 0.0
        %4254 = vmatpush1.msra.mxu0 0.0
        %4255 = vmatprep.subr.mxu0 0.0
        %4256 = vmatpush1.msra.mxu0 0.0
        %4257 = vmatprep.subr.mxu0 0.0
        %4258 = vmatpush1.msra.mxu0 0.0
        %4259 = vmatprep.subr.mxu0 0.0
        %4260 = vmatpush1.msra.mxu0 0.0
        %4261 = vmatprep.subr.mxu0 0.0
        %4262 = vmatpush1.msra.mxu0 0.0
        %4263 = vmatprep.subr.mxu0 0.0
        %4264 = vmatpush1.msra.mxu0 0.0
        %4265 = vmatprep.subr.mxu0 0.0
        %4266 = vmatpush1.msra.mxu0 0.0
        %4267 = vmatprep.subr.mxu0 0.0
        %4268 = vmatpush1.msra.mxu0 0.0
        %4269 = vmatprep.subr.mxu0 0.0
        %4270 = vmatpush1.msra.mxu0 0.0
        %4271 = vmatprep.subr.mxu0 0.0
        %4272 = vmatpush1.msra.mxu0 0.0
        %4273 = vmatprep.subr.mxu0 0.0
        %4274 = vmatpush1.msra.mxu0 0.0
        %4275 = vmatprep.subr.mxu0 0.0
        %4276 = vmatpush1.msra.mxu0 0.0
        %4277 = vmatprep.subr.mxu0 0.0
        %4278 = vmatpush1.msra.mxu0 0.0
        %4279 = vmatprep.subr.mxu0 0.0
        %4280 = vmatpush1.msra.mxu0 0.0
        %4281 = vmatprep.subr.mxu0 0.0
        %4282 = vmatpush1.msra.mxu0 0.0
        %4283 = vmatprep.mubr.f32.mxu0 0.0
        %4284 = vmatmul.mubr.f32.gmra.mrb[0].mxu0 %v4211
        %v4285 = vpop.f32.mrb[0].mxu0
        %v4286 = vadd.f32 0.0, %v4285
        %v4287 = vpop.f32.mrb[0].mxu0
        %v4288 = vadd.f32 0.0, %v4287
        %4289 = vdwg.mxu0
        %v4290 = vadd.f32 %v4135, %v4286
        %v4291 = vadd.f32 %v4136, %v4288
        %v4294 = vcombine.low %v4290, %v4291
        %4296 = vst [vmem:[%s442] sm:$0xff] %v4294
        %s4297 = sand.u32 %s253, 1
        %s4298 = scalar_lea.sflag [#allocation4], %s4297
        %s4299 = sand.u32 %s253, 1
        %s4300 = smul.addr %s4299, 8
        %s4301 = scalar_lea.vmem [#allocation13], %s4300
        // Predicated region
        $region85: #{tpu_custom_call.1} parent=59 // pred_check
          %p4302 = pneg %p263
        $region86: #{tpu_custom_call.1} parent=59 // pred_check_branch
          %4304 = sbr.rel (%p4302) target = $region88
        $region87: #{tpu_custom_call.1} parent=59 // pred_region
          %s4306 = ssub.s32 128, 128
          %4307 = vsyncadd %s4298, %s4306
          %s4308 = smul.addr %s30, 2
          %s4309 = smul.addr %s4308, 64
          %s4310 = scalar_lea.hbm %s10, %s4309
          %s4312 = sshll.u32 %s4301, 4
          %s4313 = int_to_ptr.vmem [resolvable:$true] %s4312
          %4315 = dma.vmem_to_hbm [thread:$0]  %s4313, 128, %s4310, %s4298
        $region88: #{tpu_custom_call.1} parent=59 // pred_fallthru
          _
      $region60: #{tpu_custom_call.1} parent=5 // pred_fallthru
        _
      %p4316 = scmp.le.s32.totalorder 2, %s25
      // Predicated region
      $region89: #{tpu_custom_call.1} parent=5 // pred_check
        %p4317 = pneg %p4316
      $region90: #{tpu_custom_call.1} parent=5 // pred_check_branch
        %4319 = sbr.rel (%p4317) target = $region92
      $region91: #{tpu_custom_call.1} parent=5 // pred_region
        %s4320 = ssub.s32 %s25, 2
        // Predicated region
        $region93: #{tpu_custom_call.1} parent=91 // pred_check
          %p4321 = pneg %p269
        $region94: #{tpu_custom_call.1} parent=91 // pred_check_branch
          %4323 = sbr.rel (%p4321) target = $region96
        $region95: #{tpu_custom_call.1} parent=91 // pred_region
          %s4324 = sand.u32 %s254, 1
          %s4325 = scalar_lea.sflag [#allocation4], %s4324
          %s4326 = sand.u32 %s254, 1
          %s4327 = smul.addr %s4326, 8
          %s4328 = scalar_lea.vmem [#allocation13], %s4327
          %4329 = dma.done %s4325, 128
        $region96: #{tpu_custom_call.1} parent=91 // pred_fallthru
          _
      $region92: #{tpu_custom_call.1} parent=5 // pred_fallthru
        _
    $region6: #{tpu_custom_call.1} parent=1 // loop_footer
      %s29 = sadd.s32 1, %s25
    $region7: #{tpu_custom_call.1} parent=1 // loop_footer_branch
      %24 = sbr.rel target = $region3
    $region8: #{tpu_custom_call.1} parent=1 // loop_exit
      _
    %4330 = vsyncpa [#allocation3], 1
    %s4331 = scalar_lea.sflag [#allocation3], 1
    %4332 = vsyncpa %s4331, 1
    %4333 = vsyncpa [#allocation6], 1
    %4334 = vsyncpa [#allocation9], 1
    %4335 = vsyncpa [#allocation12], 1
    %4336 = vsyncpa [#allocation4], 1
    %s4337 = scalar_lea.sflag [#allocation4], 1
    %4338 = vsyncpa %s4337, 1

</llo_original>
